<compile_context>
chip_gen: v7x
topology: tpu7x:2x2x1
jax: 0.10.0
libtpu: 0.0.40
codegen_flags: <defaults>
</compile_context>

<pallas_src>
import functools

import jax
import jax.numpy as jnp
from jax import lax
from jax.experimental import pallas as pl
from jax.experimental.pallas import tpu as pltpu


# ---------------------------------------------------------------------------
# In-kernel helpers
# ---------------------------------------------------------------------------
def _layernorm(x, gamma, beta, eps=1e-5):
    mu = jnp.mean(x, axis=-1, keepdims=True)
    var = jnp.mean(jnp.square(x - mu), axis=-1, keepdims=True)  # biased, like torch
    return (x - mu) * lax.rsqrt(var + eps) * gamma + beta


# ---------------------------------------------------------------------------
# Fused Encoder kernel — one grid step per batch block of bb elements
# ---------------------------------------------------------------------------
def _encoder_kernel(x_ref,
                    wq_ref, bq_ref, wk_ref, bk_ref, wv_ref, bv_ref,
                    w1_ref, b1_ref, w2_ref, b2_ref,
                    g1_ref, be1_ref, g2_ref, be2_ref,
                    o_ref, *, num_heads, seq_len):
    x = x_ref[...].astype(jnp.float32)                 # (bb*S, E) flattened rows
    M, E = x.shape
    S = seq_len
    bb = M // S
    D = E // num_heads
    scale = jnp.float32(float(D) ** 0.5)

    def mm(a, w_ref, b_ref):
        # Weights arrive pre-transposed: plain (M,K)@(K,N) contraction on MXU.
        return jnp.dot(a, w_ref[...], preferred_element_type=jnp.float32) + b_ref[...]

    # ---- Q/K/V projections over the whole (bb*S, E) slab ----
    q = mm(x, wq_ref, bq_ref)
    k = mm(x, wk_ref, bk_ref)
    v = mm(x, wv_ref, bv_ref)

    # ---- attention: per batch element in the block, heads as static slices ----
    # NOTE: heads are kept as static lane slices. At D = E/H < 128 a
    # (S,E)->(S,H,D) reshape + head-batched dot_general would force
    # lane-splitting relayouts Mosaic handles poorly; for production D >= 128
    # switch to a single head-batched dot_general here.
    # TODO(synk): optional `mask` argument of the PyTorch forward is not wired
    # through; this implements the mask=None path only.
    blocks = []
    for i in range(bb):
        qb = q[i * S:(i + 1) * S] if bb > 1 else q      # (S, E)
        kb = k[i * S:(i + 1) * S] if bb > 1 else k
        vb = v[i * S:(i + 1) * S] if bb > 1 else v
        heads = []
        for h in range(num_heads):
            qh = qb[:, h * D:(h + 1) * D]               # (S, D)
            kh = kb[:, h * D:(h + 1) * D]
            vh = vb[:, h * D:(h + 1) * D]
            s = lax.dot_general(qh, kh, (((1,), (1,)), ((), ())),
                                preferred_element_type=jnp.float32)   # q @ k.T
            s = jnp.floor(s / scale)                    # PyTorch `//` on floats
            m = jnp.max(s, axis=-1, keepdims=True)
            p = jnp.exp(s - m)
            denom = jnp.sum(p, axis=-1, keepdims=True)
            inv = pl.reciprocal(denom, approx=True)     # EUP slot
            inv = inv * (2.0 - denom * inv)             # one Newton step -> f32 exact
            heads.append(jnp.dot(p * inv, vh, preferred_element_type=jnp.float32))
        blocks.append(jnp.concatenate(heads, axis=-1))  # (S, E) head merge
    sa = jnp.concatenate(blocks, axis=0) if bb > 1 else blocks[0]     # (M, E)

    # ---- residual + LayerNorm 1 ----
    y1 = _layernorm(x + sa, g1_ref[...], be1_ref[...])

    # ---- FeedForward: relu(relu(y1 @ W1^T + b1) @ W2^T + b2) ----
    # TODO(synk): for production E (>= 768) tile the 4E hidden dim over an
    # 'arbitrary' grid axis with a VMEM accumulator instead of materializing
    # hdn = (M, 4E) at once (and to keep w1/w2 within v7x's 64 MiB VMEM).
    hdn = jnp.maximum(mm(y1, w1_ref, b1_ref), 0.0)
    ff = jnp.maximum(mm(hdn, w2_ref, b2_ref), 0.0)

    # ---- residual + LayerNorm 2 ----
    o_ref[...] = _layernorm(y1 + ff, g2_ref[...], be2_ref[...]).astype(o_ref.dtype)


# ---------------------------------------------------------------------------
# Wrapper
# ---------------------------------------------------------------------------
def encoder_forward(x, params, num_heads):
    B, S, E = x.shape
    H4 = 4 * E

    # Fewer, fatter grid steps; keep exactly 2 "parallel" steps (when possible)
    # so v7x's two TensorCores both get work (negligible cost on v5e/v6e).
    if B >= 2 and B % 2 == 0:
        n_steps = 2
    else:
        n_steps = max(B, 1)
    bb = B // n_steps
    rows = bb * S

    # Row-flattened input: (B*S, E).  Lane-dense I/O (last dim multiple of 128)
    # is only reachable for production E; at E=32 the compute layout fixes the
    # store width, so we keep (rows, E) blocks.
    x_flat = x.reshape(B * S, E)

    def row(a):                                        # 1-D param -> (1, N) row
        return a.reshape(1, -1)

    # Pre-transpose weights once at trace time (free relative to the kernel).
    operands = (
        x_flat,
        params["wq"].T, row(params["bq"]),
        params["wk"].T, row(params["bk"]),
        params["wv"].T, row(params["bv"]),
        params["w1"].T, row(params["b1"]),             # (E, 4E)
        params["w2"].T, row(params["b2"]),             # (4E, E)
        row(params["g1"]), row(params["beta1"]),
        row(params["g2"]), row(params["beta2"]),
    )

    kernel = functools.partial(_encoder_kernel, num_heads=num_heads, seq_len=S)

    def run(single_buffer_weights):
        def weight_spec(shape):
            idx = lambda i, _n=len(shape): (0,) * _n
            if single_buffer_weights and hasattr(pl, "Buffered"):
                # Grid-invariant operand: one VMEM buffer instead of the
                # default double-buffering.
                return pl.BlockSpec(shape, idx, pipeline_mode=pl.Buffered(1))
            return pl.BlockSpec(shape, idx)

        in_specs = [
            pl.BlockSpec((rows, E), lambda i: (i, 0)),      # x row-block
            weight_spec((E, E)), weight_spec((1, E)),       # wq^T, bq
            weight_spec((E, E)), weight_spec((1, E)),       # wk^T, bk
            weight_spec((E, E)), weight_spec((1, E)),       # wv^T, bv
            weight_spec((E, H4)), weight_spec((1, H4)),     # w1^T, b1
            weight_spec((H4, E)), weight_spec((1, E)),      # w2^T, b2
            weight_spec((1, E)), weight_spec((1, E)),       # ln1 gamma, beta
            weight_spec((1, E)), weight_spec((1, E)),       # ln2 gamma, beta
        ]
        return pl.pallas_call(
            kernel,
            out_shape=jax.ShapeDtypeStruct((B * S, E), x.dtype),
            grid=(n_steps,),
            in_specs=in_specs,
            out_specs=pl.BlockSpec((rows, E), lambda i: (i, 0)),
            compiler_params=pltpu.CompilerParams(
                dimension_semantics=("parallel",)),
        )(*operands)

    try:
        out_flat = run(True)
    except Exception:
        # Fallback: some JAX versions reject pipeline_mode / Buffered(1).
        out_flat = run(False)

    return out_flat.reshape(B, S, E)


# ---------------------------------------------------------------------------
# Pure-JAX reference (mirrors the PyTorch module exactly)
# ---------------------------------------------------------------------------
def reference(x, params, num_heads):
    B, S, E = x.shape
    D = E // num_heads

    def lin(t, w, b):
        return t @ w.T + b

    def ln(t, g, b, eps=1e-5):
        mu = t.mean(-1, keepdims=True)
        var = ((t - mu) ** 2).mean(-1, keepdims=True)
        return (t - mu) / jnp.sqrt(var + eps) * g + b

    def split(t):
        return t.reshape(B, S, num_heads, D).transpose(0, 2, 1, 3)

    q = split(lin(x, params["wq"], params["bq"]))
    k = split(lin(x, params["wk"], params["bk"]))
    v = split(lin(x, params["wv"], params["bv"]))

    s = jnp.floor(jnp.einsum("bhqd,bhkd->bhqk", q, k) / jnp.float32(D ** 0.5))
    attn = jax.nn.softmax(s, axis=-1)
    sa = jnp.einsum("bhqk,bhkd->bhqd", attn, v).transpose(0, 2, 1, 3).reshape(B, S, E)

    y1 = ln(x + sa, params["g1"], params["beta1"])
    hdn = jax.nn.relu(lin(y1, params["w1"], params["b1"]))
    ff = jax.nn.relu(lin(hdn, params["w2"], params["b2"]))
    return ln(y1 + ff, params["g2"], params["beta2"])


if __name__ == "__main__":
    B, S, E, H = 2, 8, 32, 4
    H4 = 4 * E

    root = jax.random.PRNGKey(0)
    keys = jax.random.split(root, 16)

    be = 1.0 / (E ** 0.5)          # nn.Linear(in=E) init bound
    bh = 1.0 / (H4 ** 0.5)         # nn.Linear(in=4E) init bound
    params = {
        "wq": jax.random.uniform(keys[0], (E, E), jnp.float32, -be, be),
        "bq": jax.random.uniform(keys[1], (E,), jnp.float32, -be, be),
        "wk": jax.random.uniform(keys[2], (E, E), jnp.float32, -be, be),
        "bk": jax.random.uniform(keys[3], (E,), jnp.float32, -be, be),
        "wv": jax.random.uniform(keys[4], (E, E), jnp.float32, -be, be),
        "bv": jax.random.uniform(keys[5], (E,), jnp.float32, -be, be),
        "w1": jax.random.uniform(keys[6], (H4, E), jnp.float32, -be, be),
        "b1": jax.random.uniform(keys[7], (H4,), jnp.float32, -be, be),
        "w2": jax.random.uniform(keys[8], (E, H4), jnp.float32, -bh, bh),
        "b2": jax.random.uniform(keys[9], (E,), jnp.float32, -bh, bh),
        "g1": 1.0 + 0.1 * jax.random.normal(keys[10], (E,), jnp.float32),
        "beta1": 0.1 * jax.random.normal(keys[11], (E,), jnp.float32),
        "g2": 1.0 + 0.1 * jax.random.normal(keys[12], (E,), jnp.float32),
        "beta2": 0.1 * jax.random.normal(keys[13], (E,), jnp.float32),
    }

    x = jax.random.normal(keys[14], (B, S, E), jnp.float32)

    out = encoder_forward(x, params, H)
    out = jax.block_until_ready(out)

    ref = reference(x, params, H)
    assert out.shape == (B, S, E)
    assert jnp.allclose(out, ref, atol=1e-4, rtol=1e-4), "mismatch vs reference"

    print("KERNEL_OK")
</pallas_src>

<mosaic_0001>
module attributes {stable_mosaic.version = 11 : i64} {
  func.func @_encoder_kernel(%arg0: i32, %arg1: memref<8x32xf32, #tpu.memory_space<vmem>>, %arg2: memref<32x32xf32, #tpu.memory_space<vmem>>, %arg3: memref<1x32xf32, #tpu.memory_space<vmem>>, %arg4: memref<32x32xf32, #tpu.memory_space<vmem>>, %arg5: memref<1x32xf32, #tpu.memory_space<vmem>>, %arg6: memref<32x32xf32, #tpu.memory_space<vmem>>, %arg7: memref<1x32xf32, #tpu.memory_space<vmem>>, %arg8: memref<32x128xf32, #tpu.memory_space<vmem>>, %arg9: memref<1x128xf32, #tpu.memory_space<vmem>>, %arg10: memref<128x32xf32, #tpu.memory_space<vmem>>, %arg11: memref<1x32xf32, #tpu.memory_space<vmem>>, %arg12: memref<1x32xf32, #tpu.memory_space<vmem>>, %arg13: memref<1x32xf32, #tpu.memory_space<vmem>>, %arg14: memref<1x32xf32, #tpu.memory_space<vmem>>, %arg15: memref<1x32xf32, #tpu.memory_space<vmem>>, %arg16: memref<8x32xf32, #tpu.memory_space<vmem>>) attributes {dimension_semantics = [#tpu.dimension_semantics<parallel>], iteration_bounds = array<i64: 2>, scalar_prefetch = 0 : i64, scratch_operands = 0 : i64, tpu.core_type = #tpu.core_type<tc>, window_params = [{transform_indices = @transform_0, window_bounds = array<i64: 8, 32>}, {pipeline_mode = #tpu.pipeline_mode<synchronous>, transform_indices = @transform_1, window_bounds = array<i64: 32, 32>}, {pipeline_mode = #tpu.pipeline_mode<synchronous>, transform_indices = @transform_2, window_bounds = array<i64: 1, 32>}, {pipeline_mode = #tpu.pipeline_mode<synchronous>, transform_indices = @transform_3, window_bounds = array<i64: 32, 32>}, {pipeline_mode = #tpu.pipeline_mode<synchronous>, transform_indices = @transform_4, window_bounds = array<i64: 1, 32>}, {pipeline_mode = #tpu.pipeline_mode<synchronous>, transform_indices = @transform_5, window_bounds = array<i64: 32, 32>}, {pipeline_mode = #tpu.pipeline_mode<synchronous>, transform_indices = @transform_6, window_bounds = array<i64: 1, 32>}, {pipeline_mode = #tpu.pipeline_mode<synchronous>, transform_indices = @transform_7, window_bounds = array<i64: 32, 128>}, {pipeline_mode = #tpu.pipeline_mode<synchronous>, transform_indices = @transform_8, window_bounds = array<i64: 1, 128>}, {pipeline_mode = #tpu.pipeline_mode<synchronous>, transform_indices = @transform_9, window_bounds = array<i64: 128, 32>}, {pipeline_mode = #tpu.pipeline_mode<synchronous>, transform_indices = @transform_10, window_bounds = array<i64: 1, 32>}, {pipeline_mode = #tpu.pipeline_mode<synchronous>, transform_indices = @transform_11, window_bounds = array<i64: 1, 32>}, {pipeline_mode = #tpu.pipeline_mode<synchronous>, transform_indices = @transform_12, window_bounds = array<i64: 1, 32>}, {pipeline_mode = #tpu.pipeline_mode<synchronous>, transform_indices = @transform_13, window_bounds = array<i64: 1, 32>}, {pipeline_mode = #tpu.pipeline_mode<synchronous>, transform_indices = @transform_14, window_bounds = array<i64: 1, 32>}, {transform_indices = @transform_15, window_bounds = array<i64: 8, 32>}]} {
    %c0 = arith.constant 0 : index
    %c0_0 = arith.constant 0 : index
    %0 = vector.load %arg1[%c0, %c0_0] : memref<8x32xf32, #tpu.memory_space<vmem>>, vector<8x32xf32>
    %c0_1 = arith.constant 0 : index
    %c0_2 = arith.constant 0 : index
    %1 = vector.load %arg2[%c0_1, %c0_2] : memref<32x32xf32, #tpu.memory_space<vmem>>, vector<32x32xf32>
    %cst = arith.constant dense<0.000000e+00> : vector<8x32xf32>
    %2 = tpu.matmul %0, %1, %cst {dimension_numbers = #tpu.dot_dimension_numbers<[1], [0], [0], [1], [0, 0, 1, 1], [], []>} : vector<8x32xf32>, vector<32x32xf32>, vector<8x32xf32> -> vector<8x32xf32>
    %c0_3 = arith.constant 0 : index
    %c0_4 = arith.constant 0 : index
    %3 = vector.load %arg3[%c0_3, %c0_4] : memref<1x32xf32, #tpu.memory_space<vmem>>, vector<1x32xf32>
    %4 = vector.broadcast %3 : vector<1x32xf32> to vector<8x32xf32>
    %5 = arith.addf %2, %4 : vector<8x32xf32>
    %c0_5 = arith.constant 0 : index
    %c0_6 = arith.constant 0 : index
    %6 = vector.load %arg4[%c0_5, %c0_6] : memref<32x32xf32, #tpu.memory_space<vmem>>, vector<32x32xf32>
    %cst_7 = arith.constant dense<0.000000e+00> : vector<8x32xf32>
    %7 = tpu.matmul %0, %6, %cst_7 {dimension_numbers = #tpu.dot_dimension_numbers<[1], [0], [0], [1], [0, 0, 1, 1], [], []>} : vector<8x32xf32>, vector<32x32xf32>, vector<8x32xf32> -> vector<8x32xf32>
    %c0_8 = arith.constant 0 : index
    %c0_9 = arith.constant 0 : index
    %8 = vector.load %arg5[%c0_8, %c0_9] : memref<1x32xf32, #tpu.memory_space<vmem>>, vector<1x32xf32>
    %9 = vector.broadcast %8 : vector<1x32xf32> to vector<8x32xf32>
    %10 = arith.addf %7, %9 : vector<8x32xf32>
    %c0_10 = arith.constant 0 : index
    %c0_11 = arith.constant 0 : index
    %11 = vector.load %arg6[%c0_10, %c0_11] : memref<32x32xf32, #tpu.memory_space<vmem>>, vector<32x32xf32>
    %cst_12 = arith.constant dense<0.000000e+00> : vector<8x32xf32>
    %12 = tpu.matmul %0, %11, %cst_12 {dimension_numbers = #tpu.dot_dimension_numbers<[1], [0], [0], [1], [0, 0, 1, 1], [], []>} : vector<8x32xf32>, vector<32x32xf32>, vector<8x32xf32> -> vector<8x32xf32>
    %c0_13 = arith.constant 0 : index
    %c0_14 = arith.constant 0 : index
    %13 = vector.load %arg7[%c0_13, %c0_14] : memref<1x32xf32, #tpu.memory_space<vmem>>, vector<1x32xf32>
    %14 = vector.broadcast %13 : vector<1x32xf32> to vector<8x32xf32>
    %15 = arith.addf %12, %14 : vector<8x32xf32>
    %16 = vector.extract_strided_slice %5 {offsets = [0, 0], sizes = [8, 8], strides = [1, 1]} : vector<8x32xf32> to vector<8x8xf32>
    %17 = vector.extract_strided_slice %10 {offsets = [0, 0], sizes = [8, 8], strides = [1, 1]} : vector<8x32xf32> to vector<8x8xf32>
    %18 = vector.extract_strided_slice %15 {offsets = [0, 0], sizes = [8, 8], strides = [1, 1]} : vector<8x32xf32> to vector<8x8xf32>
    %cst_15 = arith.constant dense<0.000000e+00> : vector<8x8xf32>
    %19 = tpu.matmul %16, %17, %cst_15 {dimension_numbers = #tpu.dot_dimension_numbers<[1], [1], [0], [0], [0, 0, 1, 0], [], []>} : vector<8x8xf32>, vector<8x8xf32>, vector<8x8xf32> -> vector<8x8xf32>
    %cst_16 = arith.constant 2.82842708 : f32
    %20 = vector.broadcast %cst_16 : f32 to vector<8x8xf32>
    %21 = arith.divf %19, %20 : vector<8x8xf32>
    %22 = math.floor %21 : vector<8x8xf32>
    %cst_17 = arith.constant dense<0xFF800000> : vector<8xf32>
    %23 = vector.multi_reduction <maximumf>, %22, %cst_17 [1] : vector<8x8xf32> to vector<8xf32>
    %24 = vector.shape_cast %23 : vector<8xf32> to vector<8x1xf32>
    %25 = vector.broadcast %24 : vector<8x1xf32> to vector<8x8xf32>
    %26 = arith.subf %22, %25 : vector<8x8xf32>
    %27 = math.exp %26 : vector<8x8xf32>
    %cst_18 = arith.constant dense<0.000000e+00> : vector<8xf32>
    %28 = vector.multi_reduction <add>, %27, %cst_18 [1] : vector<8x8xf32> to vector<8xf32>
    %29 = vector.shape_cast %28 : vector<8xf32> to vector<8x1xf32>
    %30 = tpu.reciprocal %29 {approx = true} : vector<8x1xf32> -> vector<8x1xf32>
    %31 = arith.mulf %29, %30 : vector<8x1xf32>
    %cst_19 = arith.constant 2.000000e+00 : f32
    %32 = vector.broadcast %cst_19 : f32 to vector<8x1xf32>
    %33 = arith.subf %32, %31 : vector<8x1xf32>
    %34 = arith.mulf %30, %33 : vector<8x1xf32>
    %35 = vector.broadcast %34 : vector<8x1xf32> to vector<8x8xf32>
    %36 = arith.mulf %27, %35 : vector<8x8xf32>
    %cst_20 = arith.constant dense<0.000000e+00> : vector<8x8xf32>
    %37 = tpu.matmul %36, %18, %cst_20 {dimension_numbers = #tpu.dot_dimension_numbers<[1], [0], [0], [1], [0, 0, 1, 1], [], []>} : vector<8x8xf32>, vector<8x8xf32>, vector<8x8xf32> -> vector<8x8xf32>
    %38 = vector.extract_strided_slice %5 {offsets = [0, 8], sizes = [8, 8], strides = [1, 1]} : vector<8x32xf32> to vector<8x8xf32>
    %39 = vector.extract_strided_slice %10 {offsets = [0, 8], sizes = [8, 8], strides = [1, 1]} : vector<8x32xf32> to vector<8x8xf32>
    %40 = vector.extract_strided_slice %15 {offsets = [0, 8], sizes = [8, 8], strides = [1, 1]} : vector<8x32xf32> to vector<8x8xf32>
    %cst_21 = arith.constant dense<0.000000e+00> : vector<8x8xf32>
    %41 = tpu.matmul %38, %39, %cst_21 {dimension_numbers = #tpu.dot_dimension_numbers<[1], [1], [0], [0], [0, 0, 1, 0], [], []>} : vector<8x8xf32>, vector<8x8xf32>, vector<8x8xf32> -> vector<8x8xf32>
    %cst_22 = arith.constant 2.82842708 : f32
    %42 = vector.broadcast %cst_22 : f32 to vector<8x8xf32>
    %43 = arith.divf %41, %42 : vector<8x8xf32>
    %44 = math.floor %43 : vector<8x8xf32>
    %cst_23 = arith.constant dense<0xFF800000> : vector<8xf32>
    %45 = vector.multi_reduction <maximumf>, %44, %cst_23 [1] : vector<8x8xf32> to vector<8xf32>
    %46 = vector.shape_cast %45 : vector<8xf32> to vector<8x1xf32>
    %47 = vector.broadcast %46 : vector<8x1xf32> to vector<8x8xf32>
    %48 = arith.subf %44, %47 : vector<8x8xf32>
    %49 = math.exp %48 : vector<8x8xf32>
    %cst_24 = arith.constant dense<0.000000e+00> : vector<8xf32>
    %50 = vector.multi_reduction <add>, %49, %cst_24 [1] : vector<8x8xf32> to vector<8xf32>
    %51 = vector.shape_cast %50 : vector<8xf32> to vector<8x1xf32>
    %52 = tpu.reciprocal %51 {approx = true} : vector<8x1xf32> -> vector<8x1xf32>
    %53 = arith.mulf %51, %52 : vector<8x1xf32>
    %cst_25 = arith.constant 2.000000e+00 : f32
    %54 = vector.broadcast %cst_25 : f32 to vector<8x1xf32>
    %55 = arith.subf %54, %53 : vector<8x1xf32>
    %56 = arith.mulf %52, %55 : vector<8x1xf32>
    %57 = vector.broadcast %56 : vector<8x1xf32> to vector<8x8xf32>
    %58 = arith.mulf %49, %57 : vector<8x8xf32>
    %cst_26 = arith.constant dense<0.000000e+00> : vector<8x8xf32>
    %59 = tpu.matmul %58, %40, %cst_26 {dimension_numbers = #tpu.dot_dimension_numbers<[1], [0], [0], [1], [0, 0, 1, 1], [], []>} : vector<8x8xf32>, vector<8x8xf32>, vector<8x8xf32> -> vector<8x8xf32>
    %60 = vector.extract_strided_slice %5 {offsets = [0, 16], sizes = [8, 8], strides = [1, 1]} : vector<8x32xf32> to vector<8x8xf32>
    %61 = vector.extract_strided_slice %10 {offsets = [0, 16], sizes = [8, 8], strides = [1, 1]} : vector<8x32xf32> to vector<8x8xf32>
    %62 = vector.extract_strided_slice %15 {offsets = [0, 16], sizes = [8, 8], strides = [1, 1]} : vector<8x32xf32> to vector<8x8xf32>
    %cst_27 = arith.constant dense<0.000000e+00> : vector<8x8xf32>
    %63 = tpu.matmul %60, %61, %cst_27 {dimension_numbers = #tpu.dot_dimension_numbers<[1], [1], [0], [0], [0, 0, 1, 0], [], []>} : vector<8x8xf32>, vector<8x8xf32>, vector<8x8xf32> -> vector<8x8xf32>
    %cst_28 = arith.constant 2.82842708 : f32
    %64 = vector.broadcast %cst_28 : f32 to vector<8x8xf32>
    %65 = arith.divf %63, %64 : vector<8x8xf32>
    %66 = math.floor %65 : vector<8x8xf32>
    %cst_29 = arith.constant dense<0xFF800000> : vector<8xf32>
    %67 = vector.multi_reduction <maximumf>, %66, %cst_29 [1] : vector<8x8xf32> to vector<8xf32>
    %68 = vector.shape_cast %67 : vector<8xf32> to vector<8x1xf32>
    %69 = vector.broadcast %68 : vector<8x1xf32> to vector<8x8xf32>
    %70 = arith.subf %66, %69 : vector<8x8xf32>
    %71 = math.exp %70 : vector<8x8xf32>
    %cst_30 = arith.constant dense<0.000000e+00> : vector<8xf32>
    %72 = vector.multi_reduction <add>, %71, %cst_30 [1] : vector<8x8xf32> to vector<8xf32>
    %73 = vector.shape_cast %72 : vector<8xf32> to vector<8x1xf32>
    %74 = tpu.reciprocal %73 {approx = true} : vector<8x1xf32> -> vector<8x1xf32>
    %75 = arith.mulf %73, %74 : vector<8x1xf32>
    %cst_31 = arith.constant 2.000000e+00 : f32
    %76 = vector.broadcast %cst_31 : f32 to vector<8x1xf32>
    %77 = arith.subf %76, %75 : vector<8x1xf32>
    %78 = arith.mulf %74, %77 : vector<8x1xf32>
    %79 = vector.broadcast %78 : vector<8x1xf32> to vector<8x8xf32>
    %80 = arith.mulf %71, %79 : vector<8x8xf32>
    %cst_32 = arith.constant dense<0.000000e+00> : vector<8x8xf32>
    %81 = tpu.matmul %80, %62, %cst_32 {dimension_numbers = #tpu.dot_dimension_numbers<[1], [0], [0], [1], [0, 0, 1, 1], [], []>} : vector<8x8xf32>, vector<8x8xf32>, vector<8x8xf32> -> vector<8x8xf32>
    %82 = vector.extract_strided_slice %5 {offsets = [0, 24], sizes = [8, 8], strides = [1, 1]} : vector<8x32xf32> to vector<8x8xf32>
    %83 = vector.extract_strided_slice %10 {offsets = [0, 24], sizes = [8, 8], strides = [1, 1]} : vector<8x32xf32> to vector<8x8xf32>
    %84 = vector.extract_strided_slice %15 {offsets = [0, 24], sizes = [8, 8], strides = [1, 1]} : vector<8x32xf32> to vector<8x8xf32>
    %cst_33 = arith.constant dense<0.000000e+00> : vector<8x8xf32>
    %85 = tpu.matmul %82, %83, %cst_33 {dimension_numbers = #tpu.dot_dimension_numbers<[1], [1], [0], [0], [0, 0, 1, 0], [], []>} : vector<8x8xf32>, vector<8x8xf32>, vector<8x8xf32> -> vector<8x8xf32>
    %cst_34 = arith.constant 2.82842708 : f32
    %86 = vector.broadcast %cst_34 : f32 to vector<8x8xf32>
    %87 = arith.divf %85, %86 : vector<8x8xf32>
    %88 = math.floor %87 : vector<8x8xf32>
    %cst_35 = arith.constant dense<0xFF800000> : vector<8xf32>
    %89 = vector.multi_reduction <maximumf>, %88, %cst_35 [1] : vector<8x8xf32> to vector<8xf32>
    %90 = vector.shape_cast %89 : vector<8xf32> to vector<8x1xf32>
    %91 = vector.broadcast %90 : vector<8x1xf32> to vector<8x8xf32>
    %92 = arith.subf %88, %91 : vector<8x8xf32>
    %93 = math.exp %92 : vector<8x8xf32>
    %cst_36 = arith.constant dense<0.000000e+00> : vector<8xf32>
    %94 = vector.multi_reduction <add>, %93, %cst_36 [1] : vector<8x8xf32> to vector<8xf32>
    %95 = vector.shape_cast %94 : vector<8xf32> to vector<8x1xf32>
    %96 = tpu.reciprocal %95 {approx = true} : vector<8x1xf32> -> vector<8x1xf32>
    %97 = arith.mulf %95, %96 : vector<8x1xf32>
    %cst_37 = arith.constant 2.000000e+00 : f32
    %98 = vector.broadcast %cst_37 : f32 to vector<8x1xf32>
    %99 = arith.subf %98, %97 : vector<8x1xf32>
    %100 = arith.mulf %96, %99 : vector<8x1xf32>
    %101 = vector.broadcast %100 : vector<8x1xf32> to vector<8x8xf32>
    %102 = arith.mulf %93, %101 : vector<8x8xf32>
    %cst_38 = arith.constant dense<0.000000e+00> : vector<8x8xf32>
    %103 = tpu.matmul %102, %84, %cst_38 {dimension_numbers = #tpu.dot_dimension_numbers<[1], [0], [0], [1], [0, 0, 1, 1], [], []>} : vector<8x8xf32>, vector<8x8xf32>, vector<8x8xf32> -> vector<8x8xf32>
    %104 = tpu.concatenate %37, %59, %81, %103 in 1 : vector<8x8xf32>, vector<8x8xf32>, vector<8x8xf32>, vector<8x8xf32> -> vector<8x32xf32>
    %105 = arith.addf %0, %104 : vector<8x32xf32>
    %c0_39 = arith.constant 0 : index
    %c0_40 = arith.constant 0 : index
    %106 = vector.load %arg12[%c0_39, %c0_40] : memref<1x32xf32, #tpu.memory_space<vmem>>, vector<1x32xf32>
    %c0_41 = arith.constant 0 : index
    %c0_42 = arith.constant 0 : index
    %107 = vector.load %arg13[%c0_41, %c0_42] : memref<1x32xf32, #tpu.memory_space<vmem>>, vector<1x32xf32>
    %cst_43 = arith.constant dense<0.000000e+00> : vector<8xf32>
    %108 = vector.multi_reduction <add>, %105, %cst_43 [1] : vector<8x32xf32> to vector<8xf32>
    %109 = vector.shape_cast %108 : vector<8xf32> to vector<8x1xf32>
    %cst_44 = arith.constant 3.200000e+01 : f32
    %110 = vector.broadcast %cst_44 : f32 to vector<8x1xf32>
    %111 = arith.divf %109, %110 : vector<8x1xf32>
    %112 = vector.broadcast %111 : vector<8x1xf32> to vector<8x32xf32>
    %113 = arith.subf %105, %112 : vector<8x32xf32>
    %114 = arith.mulf %113, %113 : vector<8x32xf32>
    %cst_45 = arith.constant dense<0.000000e+00> : vector<8xf32>
    %115 = vector.multi_reduction <add>, %114, %cst_45 [1] : vector<8x32xf32> to vector<8xf32>
    %116 = vector.shape_cast %115 : vector<8xf32> to vector<8x1xf32>
    %cst_46 = arith.constant 3.200000e+01 : f32
    %117 = vector.broadcast %cst_46 : f32 to vector<8x1xf32>
    %118 = arith.divf %116, %117 : vector<8x1xf32>
    %119 = vector.broadcast %111 : vector<8x1xf32> to vector<8x32xf32>
    %120 = arith.subf %105, %119 : vector<8x32xf32>
    %cst_47 = arith.constant 9.99999974E-6 : f32
    %121 = vector.broadcast %cst_47 : f32 to vector<8x1xf32>
    %122 = arith.addf %118, %121 : vector<8x1xf32>
    %123 = math.rsqrt %122 : vector<8x1xf32>
    %124 = vector.broadcast %123 : vector<8x1xf32> to vector<8x32xf32>
    %125 = arith.mulf %120, %124 : vector<8x32xf32>
    %126 = vector.broadcast %106 : vector<1x32xf32> to vector<8x32xf32>
    %127 = arith.mulf %125, %126 : vector<8x32xf32>
    %128 = vector.broadcast %107 : vector<1x32xf32> to vector<8x32xf32>
    %129 = arith.addf %127, %128 : vector<8x32xf32>
    %c0_48 = arith.constant 0 : index
    %c0_49 = arith.constant 0 : index
    %130 = vector.load %arg8[%c0_48, %c0_49] : memref<32x128xf32, #tpu.memory_space<vmem>>, vector<32x128xf32>
    %cst_50 = arith.constant dense<0.000000e+00> : vector<8x128xf32>
    %131 = tpu.matmul %129, %130, %cst_50 {dimension_numbers = #tpu.dot_dimension_numbers<[1], [0], [0], [1], [0, 0, 1, 1], [], []>} : vector<8x32xf32>, vector<32x128xf32>, vector<8x128xf32> -> vector<8x128xf32>
    %c0_51 = arith.constant 0 : index
    %c0_52 = arith.constant 0 : index
    %132 = vector.load %arg9[%c0_51, %c0_52] : memref<1x128xf32, #tpu.memory_space<vmem>>, vector<1x128xf32>
    %133 = vector.broadcast %132 : vector<1x128xf32> to vector<8x128xf32>
    %134 = arith.addf %131, %133 : vector<8x128xf32>
    %cst_53 = arith.constant 0.000000e+00 : f32
    %135 = vector.broadcast %cst_53 : f32 to vector<8x128xf32>
    %136 = arith.maximumf %134, %135 : vector<8x128xf32>
    %c0_54 = arith.constant 0 : index
    %c0_55 = arith.constant 0 : index
    %137 = vector.load %arg10[%c0_54, %c0_55] : memref<128x32xf32, #tpu.memory_space<vmem>>, vector<128x32xf32>
    %cst_56 = arith.constant dense<0.000000e+00> : vector<8x32xf32>
    %138 = tpu.matmul %136, %137, %cst_56 {dimension_numbers = #tpu.dot_dimension_numbers<[1], [0], [0], [1], [0, 0, 1, 1], [], []>} : vector<8x128xf32>, vector<128x32xf32>, vector<8x32xf32> -> vector<8x32xf32>
    %c0_57 = arith.constant 0 : index
    %c0_58 = arith.constant 0 : index
    %139 = vector.load %arg11[%c0_57, %c0_58] : memref<1x32xf32, #tpu.memory_space<vmem>>, vector<1x32xf32>
    %140 = vector.broadcast %139 : vector<1x32xf32> to vector<8x32xf32>
    %141 = arith.addf %138, %140 : vector<8x32xf32>
    %cst_59 = arith.constant 0.000000e+00 : f32
    %142 = vector.broadcast %cst_59 : f32 to vector<8x32xf32>
    %143 = arith.maximumf %141, %142 : vector<8x32xf32>
    %144 = arith.addf %129, %143 : vector<8x32xf32>
    %c0_60 = arith.constant 0 : index
    %c0_61 = arith.constant 0 : index
    %145 = vector.load %arg14[%c0_60, %c0_61] : memref<1x32xf32, #tpu.memory_space<vmem>>, vector<1x32xf32>
    %c0_62 = arith.constant 0 : index
    %c0_63 = arith.constant 0 : index
    %146 = vector.load %arg15[%c0_62, %c0_63] : memref<1x32xf32, #tpu.memory_space<vmem>>, vector<1x32xf32>
    %cst_64 = arith.constant dense<0.000000e+00> : vector<8xf32>
    %147 = vector.multi_reduction <add>, %144, %cst_64 [1] : vector<8x32xf32> to vector<8xf32>
    %148 = vector.shape_cast %147 : vector<8xf32> to vector<8x1xf32>
    %cst_65 = arith.constant 3.200000e+01 : f32
    %149 = vector.broadcast %cst_65 : f32 to vector<8x1xf32>
    %150 = arith.divf %148, %149 : vector<8x1xf32>
    %151 = vector.broadcast %150 : vector<8x1xf32> to vector<8x32xf32>
    %152 = arith.subf %144, %151 : vector<8x32xf32>
    %153 = arith.mulf %152, %152 : vector<8x32xf32>
    %cst_66 = arith.constant dense<0.000000e+00> : vector<8xf32>
    %154 = vector.multi_reduction <add>, %153, %cst_66 [1] : vector<8x32xf32> to vector<8xf32>
    %155 = vector.shape_cast %154 : vector<8xf32> to vector<8x1xf32>
    %cst_67 = arith.constant 3.200000e+01 : f32
    %156 = vector.broadcast %cst_67 : f32 to vector<8x1xf32>
    %157 = arith.divf %155, %156 : vector<8x1xf32>
    %158 = vector.broadcast %150 : vector<8x1xf32> to vector<8x32xf32>
    %159 = arith.subf %144, %158 : vector<8x32xf32>
    %cst_68 = arith.constant 9.99999974E-6 : f32
    %160 = vector.broadcast %cst_68 : f32 to vector<8x1xf32>
    %161 = arith.addf %157, %160 : vector<8x1xf32>
    %162 = math.rsqrt %161 : vector<8x1xf32>
    %163 = vector.broadcast %162 : vector<8x1xf32> to vector<8x32xf32>
    %164 = arith.mulf %159, %163 : vector<8x32xf32>
    %165 = vector.broadcast %145 : vector<1x32xf32> to vector<8x32xf32>
    %166 = arith.mulf %164, %165 : vector<8x32xf32>
    %167 = vector.broadcast %146 : vector<1x32xf32> to vector<8x32xf32>
    %168 = arith.addf %166, %167 : vector<8x32xf32>
    %c0_69 = arith.constant 0 : index
    %c0_70 = arith.constant 0 : index
    %169 = vector.load %arg16[%c0_69, %c0_70] : memref<8x32xf32, #tpu.memory_space<vmem>>, vector<8x32xf32>
    tpu.vector_store %arg16[%c0_69, %c0_70], %168 {strides = array<i32>} : memref<8x32xf32, #tpu.memory_space<vmem>>, vector<8x32xf32>,
    return
  }
  func.func @transform_0(%arg0: i32) -> (i32, i32) {
    %c0_i32 = arith.constant 0 : i32
    %c0_i32_0 = arith.constant 0 : i32
    return %arg0, %c0_i32 : i32, i32
  }
  func.func @transform_1(%arg0: i32) -> (i32, i32) {
    %c0_i32 = arith.constant 0 : i32
    %c0_i32_0 = arith.constant 0 : i32
    %c0_i32_1 = arith.constant 0 : i32
    return %c0_i32, %c0_i32_0 : i32, i32
  }
  func.func @transform_2(%arg0: i32) -> (i32, i32) {
    %c0_i32 = arith.constant 0 : i32
    %c0_i32_0 = arith.constant 0 : i32
    %c0_i32_1 = arith.constant 0 : i32
    return %c0_i32, %c0_i32_0 : i32, i32
  }
  func.func @transform_3(%arg0: i32) -> (i32, i32) {
    %c0_i32 = arith.constant 0 : i32
    %c0_i32_0 = arith.constant 0 : i32
    %c0_i32_1 = arith.constant 0 : i32
    return %c0_i32, %c0_i32_0 : i32, i32
  }
  func.func @transform_4(%arg0: i32) -> (i32, i32) {
    %c0_i32 = arith.constant 0 : i32
    %c0_i32_0 = arith.constant 0 : i32
    %c0_i32_1 = arith.constant 0 : i32
    return %c0_i32, %c0_i32_0 : i32, i32
  }
  func.func @transform_5(%arg0: i32) -> (i32, i32) {
    %c0_i32 = arith.constant 0 : i32
    %c0_i32_0 = arith.constant 0 : i32
    %c0_i32_1 = arith.constant 0 : i32
    return %c0_i32, %c0_i32_0 : i32, i32
  }
  func.func @transform_6(%arg0: i32) -> (i32, i32) {
    %c0_i32 = arith.constant 0 : i32
    %c0_i32_0 = arith.constant 0 : i32
    %c0_i32_1 = arith.constant 0 : i32
    return %c0_i32, %c0_i32_0 : i32, i32
  }
  func.func @transform_7(%arg0: i32) -> (i32, i32) {
    %c0_i32 = arith.constant 0 : i32
    %c0_i32_0 = arith.constant 0 : i32
    %c0_i32_1 = arith.constant 0 : i32
    return %c0_i32, %c0_i32_0 : i32, i32
  }
  func.func @transform_8(%arg0: i32) -> (i32, i32) {
    %c0_i32 = arith.constant 0 : i32
    %c0_i32_0 = arith.constant 0 : i32
    %c0_i32_1 = arith.constant 0 : i32
    return %c0_i32, %c0_i32_0 : i32, i32
  }
  func.func @transform_9(%arg0: i32) -> (i32, i32) {
    %c0_i32 = arith.constant 0 : i32
    %c0_i32_0 = arith.constant 0 : i32
    %c0_i32_1 = arith.constant 0 : i32
    return %c0_i32, %c0_i32_0 : i32, i32
  }
  func.func @transform_10(%arg0: i32) -> (i32, i32) {
    %c0_i32 = arith.constant 0 : i32
    %c0_i32_0 = arith.constant 0 : i32
    %c0_i32_1 = arith.constant 0 : i32
    return %c0_i32, %c0_i32_0 : i32, i32
  }
  func.func @transform_11(%arg0: i32) -> (i32, i32) {
    %c0_i32 = arith.constant 0 : i32
    %c0_i32_0 = arith.constant 0 : i32
    %c0_i32_1 = arith.constant 0 : i32
    return %c0_i32, %c0_i32_0 : i32, i32
  }
  func.func @transform_12(%arg0: i32) -> (i32, i32) {
    %c0_i32 = arith.constant 0 : i32
    %c0_i32_0 = arith.constant 0 : i32
    %c0_i32_1 = arith.constant 0 : i32
    return %c0_i32, %c0_i32_0 : i32, i32
  }
  func.func @transform_13(%arg0: i32) -> (i32, i32) {
    %c0_i32 = arith.constant 0 : i32
    %c0_i32_0 = arith.constant 0 : i32
    %c0_i32_1 = arith.constant 0 : i32
    return %c0_i32, %c0_i32_0 : i32, i32
  }
  func.func @transform_14(%arg0: i32) -> (i32, i32) {
    %c0_i32 = arith.constant 0 : i32
    %c0_i32_0 = arith.constant 0 : i32
    %c0_i32_1 = arith.constant 0 : i32
    return %c0_i32, %c0_i32_0 : i32, i32
  }
  func.func @transform_15(%arg0: i32) -> (i32, i32) {
    %c0_i32 = arith.constant 0 : i32
    %c0_i32_0 = arith.constant 0 : i32
    return %arg0, %c0_i32 : i32, i32
  }
}

module attributes {stable_mosaic.version = 11 : i64} {
  func.func @_encoder_kernel(%arg0: i32, %arg1: memref<8x32xf32, #tpu.memory_space<vmem>>, %arg2: memref<32x32xf32, #tpu.memory_space<vmem>>, %arg3: memref<1x32xf32, #tpu.memory_space<vmem>>, %arg4: memref<32x32xf32, #tpu.memory_space<vmem>>, %arg5: memref<1x32xf32, #tpu.memory_space<vmem>>, %arg6: memref<32x32xf32, #tpu.memory_space<vmem>>, %arg7: memref<1x32xf32, #tpu.memory_space<vmem>>, %arg8: memref<32x128xf32, #tpu.memory_space<vmem>>, %arg9: memref<1x128xf32, #tpu.memory_space<vmem>>, %arg10: memref<128x32xf32, #tpu.memory_space<vmem>>, %arg11: memref<1x32xf32, #tpu.memory_space<vmem>>, %arg12: memref<1x32xf32, #tpu.memory_space<vmem>>, %arg13: memref<1x32xf32, #tpu.memory_space<vmem>>, %arg14: memref<1x32xf32, #tpu.memory_space<vmem>>, %arg15: memref<1x32xf32, #tpu.memory_space<vmem>>, %arg16: memref<8x32xf32, #tpu.memory_space<vmem>>) attributes {dimension_semantics = [#tpu.dimension_semantics<parallel>], iteration_bounds = array<i64: 2>, scalar_prefetch = 0 : i64, scratch_operands = 0 : i64, tpu.core_type = #tpu.core_type<tc>, window_params = [{transform_indices = @transform_0, window_bounds = array<i64: 8, 32>}, {pipeline_mode = #tpu.pipeline_mode<synchronous>, transform_indices = @transform_1, window_bounds = array<i64: 32, 32>}, {pipeline_mode = #tpu.pipeline_mode<synchronous>, transform_indices = @transform_2, window_bounds = array<i64: 1, 32>}, {pipeline_mode = #tpu.pipeline_mode<synchronous>, transform_indices = @transform_3, window_bounds = array<i64: 32, 32>}, {pipeline_mode = #tpu.pipeline_mode<synchronous>, transform_indices = @transform_4, window_bounds = array<i64: 1, 32>}, {pipeline_mode = #tpu.pipeline_mode<synchronous>, transform_indices = @transform_5, window_bounds = array<i64: 32, 32>}, {pipeline_mode = #tpu.pipeline_mode<synchronous>, transform_indices = @transform_6, window_bounds = array<i64: 1, 32>}, {pipeline_mode = #tpu.pipeline_mode<synchronous>, transform_indices = @transform_7, window_bounds = array<i64: 32, 128>}, {pipeline_mode = #tpu.pipeline_mode<synchronous>, transform_indices = @transform_8, window_bounds = array<i64: 1, 128>}, {pipeline_mode = #tpu.pipeline_mode<synchronous>, transform_indices = @transform_9, window_bounds = array<i64: 128, 32>}, {pipeline_mode = #tpu.pipeline_mode<synchronous>, transform_indices = @transform_10, window_bounds = array<i64: 1, 32>}, {pipeline_mode = #tpu.pipeline_mode<synchronous>, transform_indices = @transform_11, window_bounds = array<i64: 1, 32>}, {pipeline_mode = #tpu.pipeline_mode<synchronous>, transform_indices = @transform_12, window_bounds = array<i64: 1, 32>}, {pipeline_mode = #tpu.pipeline_mode<synchronous>, transform_indices = @transform_13, window_bounds = array<i64: 1, 32>}, {pipeline_mode = #tpu.pipeline_mode<synchronous>, transform_indices = @transform_14, window_bounds = array<i64: 1, 32>}, {transform_indices = @transform_15, window_bounds = array<i64: 8, 32>}]} {
    %c0 = arith.constant 0 : index
    %c0_0 = arith.constant 0 : index
    %0 = vector.load %arg1[%c0, %c0_0] : memref<8x32xf32, #tpu.memory_space<vmem>>, vector<8x32xf32>
    %c0_1 = arith.constant 0 : index
    %c0_2 = arith.constant 0 : index
    %1 = vector.load %arg2[%c0_1, %c0_2] : memref<32x32xf32, #tpu.memory_space<vmem>>, vector<32x32xf32>
    %cst = arith.constant dense<0.000000e+00> : vector<8x32xf32>
    %2 = tpu.matmul %0, %1, %cst {dimension_numbers = #tpu.dot_dimension_numbers<[1], [0], [0], [1], [0, 0, 1, 1], [], []>} : vector<8x32xf32>, vector<32x32xf32>, vector<8x32xf32> -> vector<8x32xf32>
    %c0_3 = arith.constant 0 : index
    %c0_4 = arith.constant 0 : index
    %3 = vector.load %arg3[%c0_3, %c0_4] : memref<1x32xf32, #tpu.memory_space<vmem>>, vector<1x32xf32>
    %4 = vector.broadcast %3 : vector<1x32xf32> to vector<8x32xf32>
    %5 = arith.addf %2, %4 : vector<8x32xf32>
    %c0_5 = arith.constant 0 : index
    %c0_6 = arith.constant 0 : index
    %6 = vector.load %arg4[%c0_5, %c0_6] : memref<32x32xf32, #tpu.memory_space<vmem>>, vector<32x32xf32>
    %cst_7 = arith.constant dense<0.000000e+00> : vector<8x32xf32>
    %7 = tpu.matmul %0, %6, %cst_7 {dimension_numbers = #tpu.dot_dimension_numbers<[1], [0], [0], [1], [0, 0, 1, 1], [], []>} : vector<8x32xf32>, vector<32x32xf32>, vector<8x32xf32> -> vector<8x32xf32>
    %c0_8 = arith.constant 0 : index
    %c0_9 = arith.constant 0 : index
    %8 = vector.load %arg5[%c0_8, %c0_9] : memref<1x32xf32, #tpu.memory_space<vmem>>, vector<1x32xf32>
    %9 = vector.broadcast %8 : vector<1x32xf32> to vector<8x32xf32>
    %10 = arith.addf %7, %9 : vector<8x32xf32>
    %c0_10 = arith.constant 0 : index
    %c0_11 = arith.constant 0 : index
    %11 = vector.load %arg6[%c0_10, %c0_11] : memref<32x32xf32, #tpu.memory_space<vmem>>, vector<32x32xf32>
    %cst_12 = arith.constant dense<0.000000e+00> : vector<8x32xf32>
    %12 = tpu.matmul %0, %11, %cst_12 {dimension_numbers = #tpu.dot_dimension_numbers<[1], [0], [0], [1], [0, 0, 1, 1], [], []>} : vector<8x32xf32>, vector<32x32xf32>, vector<8x32xf32> -> vector<8x32xf32>
    %c0_13 = arith.constant 0 : index
    %c0_14 = arith.constant 0 : index
    %13 = vector.load %arg7[%c0_13, %c0_14] : memref<1x32xf32, #tpu.memory_space<vmem>>, vector<1x32xf32>
    %14 = vector.broadcast %13 : vector<1x32xf32> to vector<8x32xf32>
    %15 = arith.addf %12, %14 : vector<8x32xf32>
    %16 = vector.extract_strided_slice %5 {offsets = [0, 0], sizes = [8, 8], strides = [1, 1]} : vector<8x32xf32> to vector<8x8xf32>
    %17 = vector.extract_strided_slice %10 {offsets = [0, 0], sizes = [8, 8], strides = [1, 1]} : vector<8x32xf32> to vector<8x8xf32>
    %18 = vector.extract_strided_slice %15 {offsets = [0, 0], sizes = [8, 8], strides = [1, 1]} : vector<8x32xf32> to vector<8x8xf32>
    %cst_15 = arith.constant dense<0.000000e+00> : vector<8x8xf32>
    %19 = tpu.matmul %16, %17, %cst_15 {dimension_numbers = #tpu.dot_dimension_numbers<[1], [1], [0], [0], [0, 0, 1, 0], [], []>} : vector<8x8xf32>, vector<8x8xf32>, vector<8x8xf32> -> vector<8x8xf32>
    %cst_16 = arith.constant 2.82842708 : f32
    %20 = vector.broadcast %cst_16 : f32 to vector<8x8xf32>
    %21 = arith.divf %19, %20 : vector<8x8xf32>
    %22 = math.floor %21 : vector<8x8xf32>
    %cst_17 = arith.constant dense<0xFF800000> : vector<8xf32>
    %23 = vector.multi_reduction <maximumf>, %22, %cst_17 [1] : vector<8x8xf32> to vector<8xf32>
    %24 = vector.shape_cast %23 : vector<8xf32> to vector<8x1xf32>
    %25 = vector.broadcast %24 : vector<8x1xf32> to vector<8x8xf32>
    %26 = arith.subf %22, %25 : vector<8x8xf32>
    %27 = math.exp %26 : vector<8x8xf32>
    %cst_18 = arith.constant dense<0.000000e+00> : vector<8xf32>
    %28 = vector.multi_reduction <add>, %27, %cst_18 [1] : vector<8x8xf32> to vector<8xf32>
    %29 = vector.shape_cast %28 : vector<8xf32> to vector<8x1xf32>
    %30 = tpu.reciprocal %29 {approx = true} : vector<8x1xf32> -> vector<8x1xf32>
    %31 = arith.mulf %29, %30 : vector<8x1xf32>
    %cst_19 = arith.constant 2.000000e+00 : f32
    %32 = vector.broadcast %cst_19 : f32 to vector<8x1xf32>
    %33 = arith.subf %32, %31 : vector<8x1xf32>
    %34 = arith.mulf %30, %33 : vector<8x1xf32>
    %35 = vector.broadcast %34 : vector<8x1xf32> to vector<8x8xf32>
    %36 = arith.mulf %27, %35 : vector<8x8xf32>
    %cst_20 = arith.constant dense<0.000000e+00> : vector<8x8xf32>
    %37 = tpu.matmul %36, %18, %cst_20 {dimension_numbers = #tpu.dot_dimension_numbers<[1], [0], [0], [1], [0, 0, 1, 1], [], []>} : vector<8x8xf32>, vector<8x8xf32>, vector<8x8xf32> -> vector<8x8xf32>
    %38 = vector.extract_strided_slice %5 {offsets = [0, 8], sizes = [8, 8], strides = [1, 1]} : vector<8x32xf32> to vector<8x8xf32>
    %39 = vector.extract_strided_slice %10 {offsets = [0, 8], sizes = [8, 8], strides = [1, 1]} : vector<8x32xf32> to vector<8x8xf32>
    %40 = vector.extract_strided_slice %15 {offsets = [0, 8], sizes = [8, 8], strides = [1, 1]} : vector<8x32xf32> to vector<8x8xf32>
    %cst_21 = arith.constant dense<0.000000e+00> : vector<8x8xf32>
    %41 = tpu.matmul %38, %39, %cst_21 {dimension_numbers = #tpu.dot_dimension_numbers<[1], [1], [0], [0], [0, 0, 1, 0], [], []>} : vector<8x8xf32>, vector<8x8xf32>, vector<8x8xf32> -> vector<8x8xf32>
    %cst_22 = arith.constant 2.82842708 : f32
    %42 = vector.broadcast %cst_22 : f32 to vector<8x8xf32>
    %43 = arith.divf %41, %42 : vector<8x8xf32>
    %44 = math.floor %43 : vector<8x8xf32>
    %cst_23 = arith.constant dense<0xFF800000> : vector<8xf32>
    %45 = vector.multi_reduction <maximumf>, %44, %cst_23 [1] : vector<8x8xf32> to vector<8xf32>
    %46 = vector.shape_cast %45 : vector<8xf32> to vector<8x1xf32>
    %47 = vector.broadcast %46 : vector<8x1xf32> to vector<8x8xf32>
    %48 = arith.subf %44, %47 : vector<8x8xf32>
    %49 = math.exp %48 : vector<8x8xf32>
    %cst_24 = arith.constant dense<0.000000e+00> : vector<8xf32>
    %50 = vector.multi_reduction <add>, %49, %cst_24 [1] : vector<8x8xf32> to vector<8xf32>
    %51 = vector.shape_cast %50 : vector<8xf32> to vector<8x1xf32>
    %52 = tpu.reciprocal %51 {approx = true} : vector<8x1xf32> -> vector<8x1xf32>
    %53 = arith.mulf %51, %52 : vector<8x1xf32>
    %cst_25 = arith.constant 2.000000e+00 : f32
    %54 = vector.broadcast %cst_25 : f32 to vector<8x1xf32>
    %55 = arith.subf %54, %53 : vector<8x1xf32>
    %56 = arith.mulf %52, %55 : vector<8x1xf32>
    %57 = vector.broadcast %56 : vector<8x1xf32> to vector<8x8xf32>
    %58 = arith.mulf %49, %57 : vector<8x8xf32>
    %cst_26 = arith.constant dense<0.000000e+00> : vector<8x8xf32>
    %59 = tpu.matmul %58, %40, %cst_26 {dimension_numbers = #tpu.dot_dimension_numbers<[1], [0], [0], [1], [0, 0, 1, 1], [], []>} : vector<8x8xf32>, vector<8x8xf32>, vector<8x8xf32> -> vector<8x8xf32>
    %60 = vector.extract_strided_slice %5 {offsets = [0, 16], sizes = [8, 8], strides = [1, 1]} : vector<8x32xf32> to vector<8x8xf32>
    %61 = vector.extract_strided_slice %10 {offsets = [0, 16], sizes = [8, 8], strides = [1, 1]} : vector<8x32xf32> to vector<8x8xf32>
    %62 = vector.extract_strided_slice %15 {offsets = [0, 16], sizes = [8, 8], strides = [1, 1]} : vector<8x32xf32> to vector<8x8xf32>
    %cst_27 = arith.constant dense<0.000000e+00> : vector<8x8xf32>
    %63 = tpu.matmul %60, %61, %cst_27 {dimension_numbers = #tpu.dot_dimension_numbers<[1], [1], [0], [0], [0, 0, 1, 0], [], []>} : vector<8x8xf32>, vector<8x8xf32>, vector<8x8xf32> -> vector<8x8xf32>
    %cst_28 = arith.constant 2.82842708 : f32
    %64 = vector.broadcast %cst_28 : f32 to vector<8x8xf32>
    %65 = arith.divf %63, %64 : vector<8x8xf32>
    %66 = math.floor %65 : vector<8x8xf32>
    %cst_29 = arith.constant dense<0xFF800000> : vector<8xf32>
    %67 = vector.multi_reduction <maximumf>, %66, %cst_29 [1] : vector<8x8xf32> to vector<8xf32>
    %68 = vector.shape_cast %67 : vector<8xf32> to vector<8x1xf32>
    %69 = vector.broadcast %68 : vector<8x1xf32> to vector<8x8xf32>
    %70 = arith.subf %66, %69 : vector<8x8xf32>
    %71 = math.exp %70 : vector<8x8xf32>
    %cst_30 = arith.constant dense<0.000000e+00> : vector<8xf32>
    %72 = vector.multi_reduction <add>, %71, %cst_30 [1] : vector<8x8xf32> to vector<8xf32>
    %73 = vector.shape_cast %72 : vector<8xf32> to vector<8x1xf32>
    %74 = tpu.reciprocal %73 {approx = true} : vector<8x1xf32> -> vector<8x1xf32>
    %75 = arith.mulf %73, %74 : vector<8x1xf32>
    %cst_31 = arith.constant 2.000000e+00 : f32
    %76 = vector.broadcast %cst_31 : f32 to vector<8x1xf32>
    %77 = arith.subf %76, %75 : vector<8x1xf32>
    %78 = arith.mulf %74, %77 : vector<8x1xf32>
    %79 = vector.broadcast %78 : vector<8x1xf32> to vector<8x8xf32>
    %80 = arith.mulf %71, %79 : vector<8x8xf32>
    %cst_32 = arith.constant dense<0.000000e+00> : vector<8x8xf32>
    %81 = tpu.matmul %80, %62, %cst_32 {dimension_numbers = #tpu.dot_dimension_numbers<[1], [0], [0], [1], [0, 0, 1, 1], [], []>} : vector<8x8xf32>, vector<8x8xf32>, vector<8x8xf32> -> vector<8x8xf32>
    %82 = vector.extract_strided_slice %5 {offsets = [0, 24], sizes = [8, 8], strides = [1, 1]} : vector<8x32xf32> to vector<8x8xf32>
    %83 = vector.extract_strided_slice %10 {offsets = [0, 24], sizes = [8, 8], strides = [1, 1]} : vector<8x32xf32> to vector<8x8xf32>
    %84 = vector.extract_strided_slice %15 {offsets = [0, 24], sizes = [8, 8], strides = [1, 1]} : vector<8x32xf32> to vector<8x8xf32>
    %cst_33 = arith.constant dense<0.000000e+00> : vector<8x8xf32>
    %85 = tpu.matmul %82, %83, %cst_33 {dimension_numbers = #tpu.dot_dimension_numbers<[1], [1], [0], [0], [0, 0, 1, 0], [], []>} : vector<8x8xf32>, vector<8x8xf32>, vector<8x8xf32> -> vector<8x8xf32>
    %cst_34 = arith.constant 2.82842708 : f32
    %86 = vector.broadcast %cst_34 : f32 to vector<8x8xf32>
    %87 = arith.divf %85, %86 : vector<8x8xf32>
    %88 = math.floor %87 : vector<8x8xf32>
    %cst_35 = arith.constant dense<0xFF800000> : vector<8xf32>
    %89 = vector.multi_reduction <maximumf>, %88, %cst_35 [1] : vector<8x8xf32> to vector<8xf32>
    %90 = vector.shape_cast %89 : vector<8xf32> to vector<8x1xf32>
    %91 = vector.broadcast %90 : vector<8x1xf32> to vector<8x8xf32>
    %92 = arith.subf %88, %91 : vector<8x8xf32>
    %93 = math.exp %92 : vector<8x8xf32>
    %cst_36 = arith.constant dense<0.000000e+00> : vector<8xf32>
    %94 = vector.multi_reduction <add>, %93, %cst_36 [1] : vector<8x8xf32> to vector<8xf32>
    %95 = vector.shape_cast %94 : vector<8xf32> to vector<8x1xf32>
    %96 = tpu.reciprocal %95 {approx = true} : vector<8x1xf32> -> vector<8x1xf32>
    %97 = arith.mulf %95, %96 : vector<8x1xf32>
    %cst_37 = arith.constant 2.000000e+00 : f32
    %98 = vector.broadcast %cst_37 : f32 to vector<8x1xf32>
    %99 = arith.subf %98, %97 : vector<8x1xf32>
    %100 = arith.mulf %96, %99 : vector<8x1xf32>
    %101 = vector.broadcast %100 : vector<8x1xf32> to vector<8x8xf32>
    %102 = arith.mulf %93, %101 : vector<8x8xf32>
    %cst_38 = arith.constant dense<0.000000e+00> : vector<8x8xf32>
    %103 = tpu.matmul %102, %84, %cst_38 {dimension_numbers = #tpu.dot_dimension_numbers<[1], [0], [0], [1], [0, 0, 1, 1], [], []>} : vector<8x8xf32>, vector<8x8xf32>, vector<8x8xf32> -> vector<8x8xf32>
    %104 = tpu.concatenate %37, %59, %81, %103 in 1 : vector<8x8xf32>, vector<8x8xf32>, vector<8x8xf32>, vector<8x8xf32> -> vector<8x32xf32>
    %105 = arith.addf %0, %104 : vector<8x32xf32>
    %c0_39 = arith.constant 0 : index
    %c0_40 = arith.constant 0 : index
    %106 = vector.load %arg12[%c0_39, %c0_40] : memref<1x32xf32, #tpu.memory_space<vmem>>, vector<1x32xf32>
    %c0_41 = arith.constant 0 : index
    %c0_42 = arith.constant 0 : index
    %107 = vector.load %arg13[%c0_41, %c0_42] : memref<1x32xf32, #tpu.memory_space<vmem>>, vector<1x32xf32>
    %cst_43 = arith.constant dense<0.000000e+00> : vector<8xf32>
    %108 = vector.multi_reduction <add>, %105, %cst_43 [1] : vector<8x32xf32> to vector<8xf32>
    %109 = vector.shape_cast %108 : vector<8xf32> to vector<8x1xf32>
    %cst_44 = arith.constant 3.200000e+01 : f32
    %110 = vector.broadcast %cst_44 : f32 to vector<8x1xf32>
    %111 = arith.divf %109, %110 : vector<8x1xf32>
    %112 = vector.broadcast %111 : vector<8x1xf32> to vector<8x32xf32>
    %113 = arith.subf %105, %112 : vector<8x32xf32>
    %114 = arith.mulf %113, %113 : vector<8x32xf32>
    %cst_45 = arith.constant dense<0.000000e+00> : vector<8xf32>
    %115 = vector.multi_reduction <add>, %114, %cst_45 [1] : vector<8x32xf32> to vector<8xf32>
    %116 = vector.shape_cast %115 : vector<8xf32> to vector<8x1xf32>
    %cst_46 = arith.constant 3.200000e+01 : f32
    %117 = vector.broadcast %cst_46 : f32 to vector<8x1xf32>
    %118 = arith.divf %116, %117 : vector<8x1xf32>
    %119 = vector.broadcast %111 : vector<8x1xf32> to vector<8x32xf32>
    %120 = arith.subf %105, %119 : vector<8x32xf32>
    %cst_47 = arith.constant 9.99999974E-6 : f32
    %121 = vector.broadcast %cst_47 : f32 to vector<8x1xf32>
    %122 = arith.addf %118, %121 : vector<8x1xf32>
    %123 = math.rsqrt %122 : vector<8x1xf32>
    %124 = vector.broadcast %123 : vector<8x1xf32> to vector<8x32xf32>
    %125 = arith.mulf %120, %124 : vector<8x32xf32>
    %126 = vector.broadcast %106 : vector<1x32xf32> to vector<8x32xf32>
    %127 = arith.mulf %125, %126 : vector<8x32xf32>
    %128 = vector.broadcast %107 : vector<1x32xf32> to vector<8x32xf32>
    %129 = arith.addf %127, %128 : vector<8x32xf32>
    %c0_48 = arith.constant 0 : index
    %c0_49 = arith.constant 0 : index
    %130 = vector.load %arg8[%c0_48, %c0_49] : memref<32x128xf32, #tpu.memory_space<vmem>>, vector<32x128xf32>
    %cst_50 = arith.constant dense<0.000000e+00> : vector<8x128xf32>
    %131 = tpu.matmul %129, %130, %cst_50 {dimension_numbers = #tpu.dot_dimension_numbers<[1], [0], [0], [1], [0, 0, 1, 1], [], []>} : vector<8x32xf32>, vector<32x128xf32>, vector<8x128xf32> -> vector<8x128xf32>
    %c0_51 = arith.constant 0 : index
    %c0_52 = arith.constant 0 : index
    %132 = vector.load %arg9[%c0_51, %c0_52] : memref<1x128xf32, #tpu.memory_space<vmem>>, vector<1x128xf32>
    %133 = vector.broadcast %132 : vector<1x128xf32> to vector<8x128xf32>
    %134 = arith.addf %131, %133 : vector<8x128xf32>
    %cst_53 = arith.constant 0.000000e+00 : f32
    %135 = vector.broadcast %cst_53 : f32 to vector<8x128xf32>
    %136 = arith.maximumf %134, %135 : vector<8x128xf32>
    %c0_54 = arith.constant 0 : index
    %c0_55 = arith.constant 0 : index
    %137 = vector.load %arg10[%c0_54, %c0_55] : memref<128x32xf32, #tpu.memory_space<vmem>>, vector<128x32xf32>
    %cst_56 = arith.constant dense<0.000000e+00> : vector<8x32xf32>
    %138 = tpu.matmul %136, %137, %cst_56 {dimension_numbers = #tpu.dot_dimension_numbers<[1], [0], [0], [1], [0, 0, 1, 1], [], []>} : vector<8x128xf32>, vector<128x32xf32>, vector<8x32xf32> -> vector<8x32xf32>
    %c0_57 = arith.constant 0 : index
    %c0_58 = arith.constant 0 : index
    %139 = vector.load %arg11[%c0_57, %c0_58] : memref<1x32xf32, #tpu.memory_space<vmem>>, vector<1x32xf32>
    %140 = vector.broadcast %139 : vector<1x32xf32> to vector<8x32xf32>
    %141 = arith.addf %138, %140 : vector<8x32xf32>
    %cst_59 = arith.constant 0.000000e+00 : f32
    %142 = vector.broadcast %cst_59 : f32 to vector<8x32xf32>
    %143 = arith.maximumf %141, %142 : vector<8x32xf32>
    %144 = arith.addf %129, %143 : vector<8x32xf32>
    %c0_60 = arith.constant 0 : index
    %c0_61 = arith.constant 0 : index
    %145 = vector.load %arg14[%c0_60, %c0_61] : memref<1x32xf32, #tpu.memory_space<vmem>>, vector<1x32xf32>
    %c0_62 = arith.constant 0 : index
    %c0_63 = arith.constant 0 : index
    %146 = vector.load %arg15[%c0_62, %c0_63] : memref<1x32xf32, #tpu.memory_space<vmem>>, vector<1x32xf32>
    %cst_64 = arith.constant dense<0.000000e+00> : vector<8xf32>
    %147 = vector.multi_reduction <add>, %144, %cst_64 [1] : vector<8x32xf32> to vector<8xf32>
    %148 = vector.shape_cast %147 : vector<8xf32> to vector<8x1xf32>
    %cst_65 = arith.constant 3.200000e+01 : f32
    %149 = vector.broadcast %cst_65 : f32 to vector<8x1xf32>
    %150 = arith.divf %148, %149 : vector<8x1xf32>
    %151 = vector.broadcast %150 : vector<8x1xf32> to vector<8x32xf32>
    %152 = arith.subf %144, %151 : vector<8x32xf32>
    %153 = arith.mulf %152, %152 : vector<8x32xf32>
    %cst_66 = arith.constant dense<0.000000e+00> : vector<8xf32>
    %154 = vector.multi_reduction <add>, %153, %cst_66 [1] : vector<8x32xf32> to vector<8xf32>
    %155 = vector.shape_cast %154 : vector<8xf32> to vector<8x1xf32>
    %cst_67 = arith.constant 3.200000e+01 : f32
    %156 = vector.broadcast %cst_67 : f32 to vector<8x1xf32>
    %157 = arith.divf %155, %156 : vector<8x1xf32>
    %158 = vector.broadcast %150 : vector<8x1xf32> to vector<8x32xf32>
    %159 = arith.subf %144, %158 : vector<8x32xf32>
    %cst_68 = arith.constant 9.99999974E-6 : f32
    %160 = vector.broadcast %cst_68 : f32 to vector<8x1xf32>
    %161 = arith.addf %157, %160 : vector<8x1xf32>
    %162 = math.rsqrt %161 : vector<8x1xf32>
    %163 = vector.broadcast %162 : vector<8x1xf32> to vector<8x32xf32>
    %164 = arith.mulf %159, %163 : vector<8x32xf32>
    %165 = vector.broadcast %145 : vector<1x32xf32> to vector<8x32xf32>
    %166 = arith.mulf %164, %165 : vector<8x32xf32>
    %167 = vector.broadcast %146 : vector<1x32xf32> to vector<8x32xf32>
    %168 = arith.addf %166, %167 : vector<8x32xf32>
    %c0_69 = arith.constant 0 : index
    %c0_70 = arith.constant 0 : index
    %169 = vector.load %arg16[%c0_69, %c0_70] : memref<8x32xf32, #tpu.memory_space<vmem>>, vector<8x32xf32>
    tpu.vector_store %arg16[%c0_69, %c0_70], %168 {strides = array<i32>} : memref<8x32xf32, #tpu.memory_space<vmem>>, vector<8x32xf32>,
    return
  }
  func.func @transform_0(%arg0: i32) -> (i32, i32) {
    %c0_i32 = arith.constant 0 : i32
    %c0_i32_0 = arith.constant 0 : i32
    return %arg0, %c0_i32 : i32, i32
  }
  func.func @transform_1(%arg0: i32) -> (i32, i32) {
    %c0_i32 = arith.constant 0 : i32
    %c0_i32_0 = arith.constant 0 : i32
    %c0_i32_1 = arith.constant 0 : i32
    return %c0_i32, %c0_i32_0 : i32, i32
  }
  func.func @transform_2(%arg0: i32) -> (i32, i32) {
    %c0_i32 = arith.constant 0 : i32
    %c0_i32_0 = arith.constant 0 : i32
    %c0_i32_1 = arith.constant 0 : i32
    return %c0_i32, %c0_i32_0 : i32, i32
  }
  func.func @transform_3(%arg0: i32) -> (i32, i32) {
    %c0_i32 = arith.constant 0 : i32
    %c0_i32_0 = arith.constant 0 : i32
    %c0_i32_1 = arith.constant 0 : i32
    return %c0_i32, %c0_i32_0 : i32, i32
  }
  func.func @transform_4(%arg0: i32) -> (i32, i32) {
    %c0_i32 = arith.constant 0 : i32
    %c0_i32_0 = arith.constant 0 : i32
    %c0_i32_1 = arith.constant 0 : i32
    return %c0_i32, %c0_i32_0 : i32, i32
  }
  func.func @transform_5(%arg0: i32) -> (i32, i32) {
    %c0_i32 = arith.constant 0 : i32
    %c0_i32_0 = arith.constant 0 : i32
    %c0_i32_1 = arith.constant 0 : i32
    return %c0_i32, %c0_i32_0 : i32, i32
  }
  func.func @transform_6(%arg0: i32) -> (i32, i32) {
    %c0_i32 = arith.constant 0 : i32
    %c0_i32_0 = arith.constant 0 : i32
    %c0_i32_1 = arith.constant 0 : i32
    return %c0_i32, %c0_i32_0 : i32, i32
  }
  func.func @transform_7(%arg0: i32) -> (i32, i32) {
    %c0_i32 = arith.constant 0 : i32
    %c0_i32_0 = arith.constant 0 : i32
    %c0_i32_1 = arith.constant 0 : i32
    return %c0_i32, %c0_i32_0 : i32, i32
  }
  func.func @transform_8(%arg0: i32) -> (i32, i32) {
    %c0_i32 = arith.constant 0 : i32
    %c0_i32_0 = arith.constant 0 : i32
    %c0_i32_1 = arith.constant 0 : i32
    return %c0_i32, %c0_i32_0 : i32, i32
  }
  func.func @transform_9(%arg0: i32) -> (i32, i32) {
    %c0_i32 = arith.constant 0 : i32
    %c0_i32_0 = arith.constant 0 : i32
    %c0_i32_1 = arith.constant 0 : i32
    return %c0_i32, %c0_i32_0 : i32, i32
  }
  func.func @transform_10(%arg0: i32) -> (i32, i32) {
    %c0_i32 = arith.constant 0 : i32
    %c0_i32_0 = arith.constant 0 : i32
    %c0_i32_1 = arith.constant 0 : i32
    return %c0_i32, %c0_i32_0 : i32, i32
  }
  func.func @transform_11(%arg0: i32) -> (i32, i32) {
    %c0_i32 = arith.constant 0 : i32
    %c0_i32_0 = arith.constant 0 : i32
    %c0_i32_1 = arith.constant 0 : i32
    return %c0_i32, %c0_i32_0 : i32, i32
  }
  func.func @transform_12(%arg0: i32) -> (i32, i32) {
    %c0_i32 = arith.constant 0 : i32
    %c0_i32_0 = arith.constant 0 : i32
    %c0_i32_1 = arith.constant 0 : i32
    return %c0_i32, %c0_i32_0 : i32, i32
  }
  func.func @transform_13(%arg0: i32) -> (i32, i32) {
    %c0_i32 = arith.constant 0 : i32
    %c0_i32_0 = arith.constant 0 : i32
    %c0_i32_1 = arith.constant 0 : i32
    return %c0_i32, %c0_i32_0 : i32, i32
  }
  func.func @transform_14(%arg0: i32) -> (i32, i32) {
    %c0_i32 = arith.constant 0 : i32
    %c0_i32_0 = arith.constant 0 : i32
    %c0_i32_1 = arith.constant 0 : i32
    return %c0_i32, %c0_i32_0 : i32, i32
  }
  func.func @transform_15(%arg0: i32) -> (i32, i32) {
    %c0_i32 = arith.constant 0 : i32
    %c0_i32_0 = arith.constant 0 : i32
    return %arg0, %c0_i32 : i32, i32
  }
}

</mosaic_0001>

<llo_original>
// kernel: tpu_custom_call.1
$region0: #{tpu_custom_call.1}
  #allocation0 [shape = 'u32[]', space=smem, size = 0x4, offset = 0x4, fixed_abs, tag = 'smem constant byte address 0x4 - core index']
  #allocation1 [shape = 'u32[144,128]{1,0:T(1,128)}', space=vmem, size = 0x12000, scoped, tag = 'internal scratch']
  %s0 = inlined_call_operand.vmem [shape: f32[16,32], index: 0, kind: input, shape index: {}]
  %s1 = inlined_call_operand.vmem [shape: f32[32,32], index: 1, kind: input, shape index: {}]
  %s2 = inlined_call_operand.vmem [shape: f32[1,32], index: 2, kind: input, shape index: {}]
  %s3 = inlined_call_operand.vmem [shape: f32[32,32], index: 3, kind: input, shape index: {}]
  %s4 = inlined_call_operand.vmem [shape: f32[1,32], index: 4, kind: input, shape index: {}]
  %s5 = inlined_call_operand.vmem [shape: f32[32,32], index: 5, kind: input, shape index: {}]
  %s6 = inlined_call_operand.vmem [shape: f32[1,32], index: 6, kind: input, shape index: {}]
  %s7 = inlined_call_operand.vmem [shape: f32[32,128], index: 7, kind: input, shape index: {}]
  %s8 = inlined_call_operand.vmem [shape: f32[1,128], index: 8, kind: input, shape index: {}]
  %s9 = inlined_call_operand.vmem [shape: f32[128,32], index: 9, kind: input, shape index: {}]
  %s10 = inlined_call_operand.vmem [shape: f32[1,32], index: 10, kind: input, shape index: {}]
  %s11 = inlined_call_operand.vmem [shape: f32[1,32], index: 11, kind: input, shape index: {}]
  %s12 = inlined_call_operand.vmem [shape: f32[1,32], index: 12, kind: input, shape index: {}]
  %s13 = inlined_call_operand.vmem [shape: f32[1,32], index: 13, kind: input, shape index: {}]
  %s14 = inlined_call_operand.vmem [shape: f32[1,32], index: 14, kind: input, shape index: {}]
  %s15 = inlined_call_operand.hbm [shape: f32[16,32], index: 15, kind: output, shape index: {}]
  %s16 = sld [smem:[#allocation0]]
  $region93: #{tpu_custom_call.1} parent=0
    _
  %s18 = ssub.s32 1, %s16
  %s19 = scalar_select 0, %s18, %s16
  $region1: #{tpu_custom_call.1} parent=0
    #allocation2 [shape = 'u8[8192]{0}', space=vmem, size = 0x2000, scoped, tag = 'output window, operand 0']
    #allocation3 [shape = 's32[2]{0}', space=sflag, size = 0x8, scoped, tag = 'scoped memory for tpu_custom_call.1']
    %20 = vsyncpa [#allocation3], 0
    %s21 = scalar_lea.sflag [#allocation3], 1
    %22 = vsyncpa %s21, 0
    loop: start=0, step=1, limit=4
    $region2: #{tpu_custom_call.1} parent=1 // loop_pre_header
      _
    $region3: #{tpu_custom_call.1} parent=1 // loop_header
      %s24 = sphi 0, %s28
      %p25 = scmp.ge.s32.totalorder %s24, 4
      %s34 = sphi 0, %s36
      %s37 = sphi 0, %s34
      %s38 = sphi 0, %s37
      %s54 = sphi 0, %s38
      %s58 = sphi 0, %s58
      %s60 = sphi 0, %s58
      %s61 = sphi 0, %s60
      %s75 = sphi 0, %s61
      %s79 = sphi 0, %s79
      %s81 = sphi 0, %s79
      %s82 = sphi 0, %s81
      %s96 = sphi 0, %s82
      %s100 = sphi 0, %s100
      %s102 = sphi 0, %s100
      %s103 = sphi 0, %s102
      %s117 = sphi 0, %s103
      %s121 = sphi 0, %s121
      %s123 = sphi 0, %s121
      %s124 = sphi 0, %s123
      %s138 = sphi 0, %s124
      %s142 = sphi 0, %s142
      %s144 = sphi 0, %s142
      %s145 = sphi 0, %s144
      %s159 = sphi 0, %s145
      %s163 = sphi 0, %s163
      %s165 = sphi 0, %s163
      %s166 = sphi 0, %s165
      %s180 = sphi 0, %s166
      %s184 = sphi 0, %s184
      %s186 = sphi 0, %s184
      %s187 = sphi 0, %s186
      %s201 = sphi 0, %s187
      %s205 = sphi 0, %s205
      %s207 = sphi 0, %s205
      %s208 = sphi 0, %s207
      %s222 = sphi 0, %s208
      %s226 = sphi 0, %s226
      %s228 = sphi 0, %s226
      %s229 = sphi 0, %s228
      %s243 = sphi 0, %s229
      %s247 = sphi 0, %s247
      %s249 = sphi 0, %s247
      %s250 = sphi 0, %s249
      %s264 = sphi 0, %s250
      %s268 = sphi 0, %s268
      %s270 = sphi 0, %s268
      %s271 = sphi 0, %s270
      %s285 = sphi 0, %s271
      %s289 = sphi 0, %s289
      %s291 = sphi 0, %s289
      %s292 = sphi 0, %s291
      %s306 = sphi 0, %s292
      %s310 = sphi 0, %s310
      %s312 = sphi 0, %s310
      %s313 = sphi 0, %s312
      %s327 = sphi 0, %s313
      %s331 = sphi 0, %s331
      %s333 = sphi 0, %s331
      %s334 = sphi 0, %s333
      %s348 = sphi 0, %s334
      %s354 = sphi 0, %s356
      %s357 = sphi 0, %s354
      %s358 = sphi 0, %s357
      %s374 = sphi 0, %s358
    $region4: #{tpu_custom_call.1} parent=1 // loop_header_branch
      %27 = sbr.rel (%p25) target = $region8
    $region5: #{tpu_custom_call.1} parent=1 // loop_body
      %s29 = ssub.s32 %s24, 1
      %s30 = ssub.s32 %s24, 2
      %s31 = sadd.s32 %s24, 1
      %s32 = ssub.s32 %s24, %s31
      %p33 = scmp.eq.s32.totalorder %s32, 0
      %s35 = sadd.s32 %s34, 1
      %s36 = scalar_select %p33, %s34, %s35
      %p39 = pneg %p33
      %p40 = scmp.eq.s32.totalorder %s24, 1
      %p41 = por %p39, %p40
      %p42 = scmp.ne.s32.totalorder %s34, %s37
      %p43 = scmp.eq.s32.totalorder %s24, 0
      %p44 = por %p42, %p43
      %p45 = scmp.ne.s32.totalorder %s34, %s37
      %p46 = scmp.eq.s32.totalorder %s29, 1
      %p47 = por %p45, %p46
      %p48 = scmp.ne.s32.totalorder %s37, %s38
      %p49 = scmp.eq.s32.totalorder %s29, 0
      %p50 = por %p48, %p49
      %p51 = scmp.ne.s32.totalorder %s37, %s38
      %p52 = scmp.eq.s32.totalorder %s30, 1
      %p53 = por %p51, %p52
      %p55 = scmp.ne.s32.totalorder %s38, %s54
      %p56 = scmp.eq.s32.totalorder %s30, 0
      %p57 = por %p55, %p56
      %s59 = sadd.s32 %s58, 1
      %p62 = scmp.eq.s32.totalorder %s24, 1
      %p63 = scmp.ne.s32.totalorder %s58, %s60
      %p64 = scmp.eq.s32.totalorder %s24, 0
      %p65 = por %p63, %p64
      %p66 = scmp.ne.s32.totalorder %s58, %s60
      %p67 = scmp.eq.s32.totalorder %s29, 1
      %p68 = por %p66, %p67
      %p69 = scmp.ne.s32.totalorder %s60, %s61
      %p70 = scmp.eq.s32.totalorder %s29, 0
      %p71 = por %p69, %p70
      %p72 = scmp.ne.s32.totalorder %s60, %s61
      %p73 = scmp.eq.s32.totalorder %s30, 1
      %p74 = por %p72, %p73
      %p76 = scmp.ne.s32.totalorder %s61, %s75
      %p77 = scmp.eq.s32.totalorder %s30, 0
      %p78 = por %p76, %p77
      %s80 = sadd.s32 %s79, 1
      %p83 = scmp.eq.s32.totalorder %s24, 1
      %p84 = scmp.ne.s32.totalorder %s79, %s81
      %p85 = scmp.eq.s32.totalorder %s24, 0
      %p86 = por %p84, %p85
      %p87 = scmp.ne.s32.totalorder %s79, %s81
      %p88 = scmp.eq.s32.totalorder %s29, 1
      %p89 = por %p87, %p88
      %p90 = scmp.ne.s32.totalorder %s81, %s82
      %p91 = scmp.eq.s32.totalorder %s29, 0
      %p92 = por %p90, %p91
      %p93 = scmp.ne.s32.totalorder %s81, %s82
      %p94 = scmp.eq.s32.totalorder %s30, 1
      %p95 = por %p93, %p94
      %p97 = scmp.ne.s32.totalorder %s82, %s96
      %p98 = scmp.eq.s32.totalorder %s30, 0
      %p99 = por %p97, %p98
      %s101 = sadd.s32 %s100, 1
      %p104 = scmp.eq.s32.totalorder %s24, 1
      %p105 = scmp.ne.s32.totalorder %s100, %s102
      %p106 = scmp.eq.s32.totalorder %s24, 0
      %p107 = por %p105, %p106
      %p108 = scmp.ne.s32.totalorder %s100, %s102
      %p109 = scmp.eq.s32.totalorder %s29, 1
      %p110 = por %p108, %p109
      %p111 = scmp.ne.s32.totalorder %s102, %s103
      %p112 = scmp.eq.s32.totalorder %s29, 0
      %p113 = por %p111, %p112
      %p114 = scmp.ne.s32.totalorder %s102, %s103
      %p115 = scmp.eq.s32.totalorder %s30, 1
      %p116 = por %p114, %p115
      %p118 = scmp.ne.s32.totalorder %s103, %s117
      %p119 = scmp.eq.s32.totalorder %s30, 0
      %p120 = por %p118, %p119
      %s122 = sadd.s32 %s121, 1
      %p125 = scmp.eq.s32.totalorder %s24, 1
      %p126 = scmp.ne.s32.totalorder %s121, %s123
      %p127 = scmp.eq.s32.totalorder %s24, 0
      %p128 = por %p126, %p127
      %p129 = scmp.ne.s32.totalorder %s121, %s123
      %p130 = scmp.eq.s32.totalorder %s29, 1
      %p131 = por %p129, %p130
      %p132 = scmp.ne.s32.totalorder %s123, %s124
      %p133 = scmp.eq.s32.totalorder %s29, 0
      %p134 = por %p132, %p133
      %p135 = scmp.ne.s32.totalorder %s123, %s124
      %p136 = scmp.eq.s32.totalorder %s30, 1
      %p137 = por %p135, %p136
      %p139 = scmp.ne.s32.totalorder %s124, %s138
      %p140 = scmp.eq.s32.totalorder %s30, 0
      %p141 = por %p139, %p140
      %s143 = sadd.s32 %s142, 1
      %p146 = scmp.eq.s32.totalorder %s24, 1
      %p147 = scmp.ne.s32.totalorder %s142, %s144
      %p148 = scmp.eq.s32.totalorder %s24, 0
      %p149 = por %p147, %p148
      %p150 = scmp.ne.s32.totalorder %s142, %s144
      %p151 = scmp.eq.s32.totalorder %s29, 1
      %p152 = por %p150, %p151
      %p153 = scmp.ne.s32.totalorder %s144, %s145
      %p154 = scmp.eq.s32.totalorder %s29, 0
      %p155 = por %p153, %p154
      %p156 = scmp.ne.s32.totalorder %s144, %s145
      %p157 = scmp.eq.s32.totalorder %s30, 1
      %p158 = por %p156, %p157
      %p160 = scmp.ne.s32.totalorder %s145, %s159
      %p161 = scmp.eq.s32.totalorder %s30, 0
      %p162 = por %p160, %p161
      %s164 = sadd.s32 %s163, 1
      %p167 = scmp.eq.s32.totalorder %s24, 1
      %p168 = scmp.ne.s32.totalorder %s163, %s165
      %p169 = scmp.eq.s32.totalorder %s24, 0
      %p170 = por %p168, %p169
      %p171 = scmp.ne.s32.totalorder %s163, %s165
      %p172 = scmp.eq.s32.totalorder %s29, 1
      %p173 = por %p171, %p172
      %p174 = scmp.ne.s32.totalorder %s165, %s166
      %p175 = scmp.eq.s32.totalorder %s29, 0
      %p176 = por %p174, %p175
      %p177 = scmp.ne.s32.totalorder %s165, %s166
      %p178 = scmp.eq.s32.totalorder %s30, 1
      %p179 = por %p177, %p178
      %p181 = scmp.ne.s32.totalorder %s166, %s180
      %p182 = scmp.eq.s32.totalorder %s30, 0
      %p183 = por %p181, %p182
      %s185 = sadd.s32 %s184, 1
      %p188 = scmp.eq.s32.totalorder %s24, 1
      %p189 = scmp.ne.s32.totalorder %s184, %s186
      %p190 = scmp.eq.s32.totalorder %s24, 0
      %p191 = por %p189, %p190
      %p192 = scmp.ne.s32.totalorder %s184, %s186
      %p193 = scmp.eq.s32.totalorder %s29, 1
      %p194 = por %p192, %p193
      %p195 = scmp.ne.s32.totalorder %s186, %s187
      %p196 = scmp.eq.s32.totalorder %s29, 0
      %p197 = por %p195, %p196
      %p198 = scmp.ne.s32.totalorder %s186, %s187
      %p199 = scmp.eq.s32.totalorder %s30, 1
      %p200 = por %p198, %p199
      %p202 = scmp.ne.s32.totalorder %s187, %s201
      %p203 = scmp.eq.s32.totalorder %s30, 0
      %p204 = por %p202, %p203
      %s206 = sadd.s32 %s205, 1
      %p209 = scmp.eq.s32.totalorder %s24, 1
      %p210 = scmp.ne.s32.totalorder %s205, %s207
      %p211 = scmp.eq.s32.totalorder %s24, 0
      %p212 = por %p210, %p211
      %p213 = scmp.ne.s32.totalorder %s205, %s207
      %p214 = scmp.eq.s32.totalorder %s29, 1
      %p215 = por %p213, %p214
      %p216 = scmp.ne.s32.totalorder %s207, %s208
      %p217 = scmp.eq.s32.totalorder %s29, 0
      %p218 = por %p216, %p217
      %p219 = scmp.ne.s32.totalorder %s207, %s208
      %p220 = scmp.eq.s32.totalorder %s30, 1
      %p221 = por %p219, %p220
      %p223 = scmp.ne.s32.totalorder %s208, %s222
      %p224 = scmp.eq.s32.totalorder %s30, 0
      %p225 = por %p223, %p224
      %s227 = sadd.s32 %s226, 1
      %p230 = scmp.eq.s32.totalorder %s24, 1
      %p231 = scmp.ne.s32.totalorder %s226, %s228
      %p232 = scmp.eq.s32.totalorder %s24, 0
      %p233 = por %p231, %p232
      %p234 = scmp.ne.s32.totalorder %s226, %s228
      %p235 = scmp.eq.s32.totalorder %s29, 1
      %p236 = por %p234, %p235
      %p237 = scmp.ne.s32.totalorder %s228, %s229
      %p238 = scmp.eq.s32.totalorder %s29, 0
      %p239 = por %p237, %p238
      %p240 = scmp.ne.s32.totalorder %s228, %s229
      %p241 = scmp.eq.s32.totalorder %s30, 1
      %p242 = por %p240, %p241
      %p244 = scmp.ne.s32.totalorder %s229, %s243
      %p245 = scmp.eq.s32.totalorder %s30, 0
      %p246 = por %p244, %p245
      %s248 = sadd.s32 %s247, 1
      %p251 = scmp.eq.s32.totalorder %s24, 1
      %p252 = scmp.ne.s32.totalorder %s247, %s249
      %p253 = scmp.eq.s32.totalorder %s24, 0
      %p254 = por %p252, %p253
      %p255 = scmp.ne.s32.totalorder %s247, %s249
      %p256 = scmp.eq.s32.totalorder %s29, 1
      %p257 = por %p255, %p256
      %p258 = scmp.ne.s32.totalorder %s249, %s250
      %p259 = scmp.eq.s32.totalorder %s29, 0
      %p260 = por %p258, %p259
      %p261 = scmp.ne.s32.totalorder %s249, %s250
      %p262 = scmp.eq.s32.totalorder %s30, 1
      %p263 = por %p261, %p262
      %p265 = scmp.ne.s32.totalorder %s250, %s264
      %p266 = scmp.eq.s32.totalorder %s30, 0
      %p267 = por %p265, %p266
      %s269 = sadd.s32 %s268, 1
      %p272 = scmp.eq.s32.totalorder %s24, 1
      %p273 = scmp.ne.s32.totalorder %s268, %s270
      %p274 = scmp.eq.s32.totalorder %s24, 0
      %p275 = por %p273, %p274
      %p276 = scmp.ne.s32.totalorder %s268, %s270
      %p277 = scmp.eq.s32.totalorder %s29, 1
      %p278 = por %p276, %p277
      %p279 = scmp.ne.s32.totalorder %s270, %s271
      %p280 = scmp.eq.s32.totalorder %s29, 0
      %p281 = por %p279, %p280
      %p282 = scmp.ne.s32.totalorder %s270, %s271
      %p283 = scmp.eq.s32.totalorder %s30, 1
      %p284 = por %p282, %p283
      %p286 = scmp.ne.s32.totalorder %s271, %s285
      %p287 = scmp.eq.s32.totalorder %s30, 0
      %p288 = por %p286, %p287
      %s290 = sadd.s32 %s289, 1
      %p293 = scmp.eq.s32.totalorder %s24, 1
      %p294 = scmp.ne.s32.totalorder %s289, %s291
      %p295 = scmp.eq.s32.totalorder %s24, 0
      %p296 = por %p294, %p295
      %p297 = scmp.ne.s32.totalorder %s289, %s291
      %p298 = scmp.eq.s32.totalorder %s29, 1
      %p299 = por %p297, %p298
      %p300 = scmp.ne.s32.totalorder %s291, %s292
      %p301 = scmp.eq.s32.totalorder %s29, 0
      %p302 = por %p300, %p301
      %p303 = scmp.ne.s32.totalorder %s291, %s292
      %p304 = scmp.eq.s32.totalorder %s30, 1
      %p305 = por %p303, %p304
      %p307 = scmp.ne.s32.totalorder %s292, %s306
      %p308 = scmp.eq.s32.totalorder %s30, 0
      %p309 = por %p307, %p308
      %s311 = sadd.s32 %s310, 1
      %p314 = scmp.eq.s32.totalorder %s24, 1
      %p315 = scmp.ne.s32.totalorder %s310, %s312
      %p316 = scmp.eq.s32.totalorder %s24, 0
      %p317 = por %p315, %p316
      %p318 = scmp.ne.s32.totalorder %s310, %s312
      %p319 = scmp.eq.s32.totalorder %s29, 1
      %p320 = por %p318, %p319
      %p321 = scmp.ne.s32.totalorder %s312, %s313
      %p322 = scmp.eq.s32.totalorder %s29, 0
      %p323 = por %p321, %p322
      %p324 = scmp.ne.s32.totalorder %s312, %s313
      %p325 = scmp.eq.s32.totalorder %s30, 1
      %p326 = por %p324, %p325
      %p328 = scmp.ne.s32.totalorder %s313, %s327
      %p329 = scmp.eq.s32.totalorder %s30, 0
      %p330 = por %p328, %p329
      %s332 = sadd.s32 %s331, 1
      %p335 = scmp.eq.s32.totalorder %s24, 1
      %p336 = scmp.ne.s32.totalorder %s331, %s333
      %p337 = scmp.eq.s32.totalorder %s24, 0
      %p338 = por %p336, %p337
      %p339 = scmp.ne.s32.totalorder %s331, %s333
      %p340 = scmp.eq.s32.totalorder %s29, 1
      %p341 = por %p339, %p340
      %p342 = scmp.ne.s32.totalorder %s333, %s334
      %p343 = scmp.eq.s32.totalorder %s29, 0
      %p344 = por %p342, %p343
      %p345 = scmp.ne.s32.totalorder %s333, %s334
      %p346 = scmp.eq.s32.totalorder %s30, 1
      %p347 = por %p345, %p346
      %p349 = scmp.ne.s32.totalorder %s334, %s348
      %p350 = scmp.eq.s32.totalorder %s30, 0
      %p351 = por %p349, %p350
      %s352 = ssub.s32 %s24, %s31
      %p353 = scmp.eq.s32.totalorder %s352, 0
      %s355 = sadd.s32 %s354, 1
      %s356 = scalar_select %p353, %s354, %s355
      %p359 = pneg %p353
      %p360 = scmp.eq.s32.totalorder %s24, 1
      %p361 = por %p359, %p360
      %p362 = scmp.ne.s32.totalorder %s354, %s357
      %p363 = scmp.eq.s32.totalorder %s24, 0
      %p364 = por %p362, %p363
      %p365 = scmp.ne.s32.totalorder %s354, %s357
      %p366 = scmp.eq.s32.totalorder %s29, 1
      %p367 = por %p365, %p366
      %p368 = scmp.ne.s32.totalorder %s357, %s358
      %p369 = scmp.eq.s32.totalorder %s29, 0
      %p370 = por %p368, %p369
      %p371 = scmp.ne.s32.totalorder %s357, %s358
      %p372 = scmp.eq.s32.totalorder %s30, 1
      %p373 = por %p371, %p372
      %p375 = scmp.ne.s32.totalorder %s358, %s374
      %p376 = scmp.eq.s32.totalorder %s30, 0
      %p377 = por %p375, %p376
      %p378 = scmp.le.s32.totalorder 1, %s24
      %p379 = scmp.lt.s32.totalorder %s24, 3
      %p380 = pnand %p378, %p379
      %p381 = pneg %p380
      // Predicated region
      $region9: #{tpu_custom_call.1} parent=5 // pred_check
        _
      $region10: #{tpu_custom_call.1} parent=5 // pred_check_branch
        %383 = sbr.rel (%p380) target = $region12
      $region11: #{tpu_custom_call.1} parent=5 // pred_region
        %s384 = ssub.s32 %s24, 1
        // Predicated region
        $region13: #{tpu_custom_call.1} parent=11 // pred_check
          %p385 = pneg %p71
        $region14: #{tpu_custom_call.1} parent=11 // pred_check_branch
          %387 = sbr.rel (%p385) target = $region16
        $region15: #{tpu_custom_call.1} parent=11 // pred_region
          _
        $region16: #{tpu_custom_call.1} parent=11 // pred_fallthru
          _
        // Predicated region
        $region17: #{tpu_custom_call.1} parent=11 // pred_check
          %p388 = pneg %p92
        $region18: #{tpu_custom_call.1} parent=11 // pred_check_branch
          %390 = sbr.rel (%p388) target = $region20
        $region19: #{tpu_custom_call.1} parent=11 // pred_region
          _
        $region20: #{tpu_custom_call.1} parent=11 // pred_fallthru
          _
        // Predicated region
        $region21: #{tpu_custom_call.1} parent=11 // pred_check
          %p391 = pneg %p113
        $region22: #{tpu_custom_call.1} parent=11 // pred_check_branch
          %393 = sbr.rel (%p391) target = $region24
        $region23: #{tpu_custom_call.1} parent=11 // pred_region
          _
        $region24: #{tpu_custom_call.1} parent=11 // pred_fallthru
          _
        // Predicated region
        $region25: #{tpu_custom_call.1} parent=11 // pred_check
          %p394 = pneg %p134
        $region26: #{tpu_custom_call.1} parent=11 // pred_check_branch
          %396 = sbr.rel (%p394) target = $region28
        $region27: #{tpu_custom_call.1} parent=11 // pred_region
          _
        $region28: #{tpu_custom_call.1} parent=11 // pred_fallthru
          _
        // Predicated region
        $region29: #{tpu_custom_call.1} parent=11 // pred_check
          %p397 = pneg %p155
        $region30: #{tpu_custom_call.1} parent=11 // pred_check_branch
          %399 = sbr.rel (%p397) target = $region32
        $region31: #{tpu_custom_call.1} parent=11 // pred_region
          _
        $region32: #{tpu_custom_call.1} parent=11 // pred_fallthru
          _
        // Predicated region
        $region33: #{tpu_custom_call.1} parent=11 // pred_check
          %p400 = pneg %p176
        $region34: #{tpu_custom_call.1} parent=11 // pred_check_branch
          %402 = sbr.rel (%p400) target = $region36
        $region35: #{tpu_custom_call.1} parent=11 // pred_region
          _
        $region36: #{tpu_custom_call.1} parent=11 // pred_fallthru
          _
        // Predicated region
        $region37: #{tpu_custom_call.1} parent=11 // pred_check
          %p403 = pneg %p197
        $region38: #{tpu_custom_call.1} parent=11 // pred_check_branch
          %405 = sbr.rel (%p403) target = $region40
        $region39: #{tpu_custom_call.1} parent=11 // pred_region
          _
        $region40: #{tpu_custom_call.1} parent=11 // pred_fallthru
          _
        // Predicated region
        $region41: #{tpu_custom_call.1} parent=11 // pred_check
          %p406 = pneg %p218
        $region42: #{tpu_custom_call.1} parent=11 // pred_check_branch
          %408 = sbr.rel (%p406) target = $region44
        $region43: #{tpu_custom_call.1} parent=11 // pred_region
          _
        $region44: #{tpu_custom_call.1} parent=11 // pred_fallthru
          _
        // Predicated region
        $region45: #{tpu_custom_call.1} parent=11 // pred_check
          %p409 = pneg %p239
        $region46: #{tpu_custom_call.1} parent=11 // pred_check_branch
          %411 = sbr.rel (%p409) target = $region48
        $region47: #{tpu_custom_call.1} parent=11 // pred_region
          _
        $region48: #{tpu_custom_call.1} parent=11 // pred_fallthru
          _
        // Predicated region
        $region49: #{tpu_custom_call.1} parent=11 // pred_check
          %p412 = pneg %p260
        $region50: #{tpu_custom_call.1} parent=11 // pred_check_branch
          %414 = sbr.rel (%p412) target = $region52
        $region51: #{tpu_custom_call.1} parent=11 // pred_region
          _
        $region52: #{tpu_custom_call.1} parent=11 // pred_fallthru
          _
        // Predicated region
        $region53: #{tpu_custom_call.1} parent=11 // pred_check
          %p415 = pneg %p281
        $region54: #{tpu_custom_call.1} parent=11 // pred_check_branch
          %417 = sbr.rel (%p415) target = $region56
        $region55: #{tpu_custom_call.1} parent=11 // pred_region
          _
        $region56: #{tpu_custom_call.1} parent=11 // pred_fallthru
          _
        // Predicated region
        $region57: #{tpu_custom_call.1} parent=11 // pred_check
          %p418 = pneg %p302
        $region58: #{tpu_custom_call.1} parent=11 // pred_check_branch
          %420 = sbr.rel (%p418) target = $region60
        $region59: #{tpu_custom_call.1} parent=11 // pred_region
          _
        $region60: #{tpu_custom_call.1} parent=11 // pred_fallthru
          _
        // Predicated region
        $region61: #{tpu_custom_call.1} parent=11 // pred_check
          %p421 = pneg %p323
        $region62: #{tpu_custom_call.1} parent=11 // pred_check_branch
          %423 = sbr.rel (%p421) target = $region64
        $region63: #{tpu_custom_call.1} parent=11 // pred_region
          _
        $region64: #{tpu_custom_call.1} parent=11 // pred_fallthru
          _
        // Predicated region
        $region65: #{tpu_custom_call.1} parent=11 // pred_check
          %p424 = pneg %p344
        $region66: #{tpu_custom_call.1} parent=11 // pred_check_branch
          %426 = sbr.rel (%p424) target = $region68
        $region67: #{tpu_custom_call.1} parent=11 // pred_region
          _
        $region68: #{tpu_custom_call.1} parent=11 // pred_fallthru
          _
      $region12: #{tpu_custom_call.1} parent=5 // pred_fallthru
        _
      %p427 = scmp.lt.s32.totalorder %s24, 2
      // Predicated region
      $region69: #{tpu_custom_call.1} parent=5 // pred_check
        %p428 = pneg %p427
      $region70: #{tpu_custom_call.1} parent=5 // pred_check_branch
        %430 = sbr.rel (%p428) target = $region72
      $region71: #{tpu_custom_call.1} parent=5 // pred_region
        // Predicated region
        $region73: #{tpu_custom_call.1} parent=71 // pred_check
          %p431 = pneg %p44
        $region74: #{tpu_custom_call.1} parent=71 // pred_check_branch
          %433 = sbr.rel (%p431) target = $region76
        $region75: #{tpu_custom_call.1} parent=71 // pred_region
          %p434 = scmp.lt.s32.totalorder %s24, 1
          %s435 = scalar_select %p434, %s24, 1
          %s436 = smul.addr %s435, 8
          %s437 = scalar_lea.vmem %s0, %s436
        $region76: #{tpu_custom_call.1} parent=71 // pred_fallthru
          _
      $region72: #{tpu_custom_call.1} parent=5 // pred_fallthru
        _
      %p438 = scmp.le.s32.totalorder 1, %s24
      %p439 = scmp.lt.s32.totalorder %s24, 3
      %p440 = pnand %p438, %p439
      %p441 = pneg %p440
      // Predicated region
      $region77: #{tpu_custom_call.1} parent=5 // pred_check
        _
      $region78: #{tpu_custom_call.1} parent=5 // pred_check_branch
        %443 = sbr.rel (%p440) target = $region80
      $region79: #{tpu_custom_call.1} parent=5 // pred_region
        %s444 = ssub.s32 %s24, 1
        %p445 = scmp.lt.s32.totalorder %s29, 1
        %s446 = scalar_select %p445, %s29, 1
        %s447 = smul.addr %s446, 8
        %s448 = scalar_lea.vmem %s0, %s447
        %p449 = pneg %p50
        %p450 = pneg %p47
        %p451 = pneg %p71
        %p452 = pneg %p68
        %p453 = pneg %p92
        %p454 = pneg %p89
        %p455 = pneg %p113
        %p456 = pneg %p110
        %p457 = pneg %p134
        %p458 = pneg %p131
        %p459 = pneg %p155
        %p460 = pneg %p152
        %p461 = pneg %p176
        %p462 = pneg %p173
        %p463 = pneg %p197
        %p464 = pneg %p194
        %p465 = pneg %p218
        %p466 = pneg %p215
        %p467 = pneg %p239
        %p468 = pneg %p236
        %p469 = pneg %p260
        %p470 = pneg %p257
        %p471 = pneg %p281
        %p472 = pneg %p278
        %p473 = pneg %p302
        %p474 = pneg %p299
        %p475 = pneg %p323
        %p476 = pneg %p320
        %p477 = pneg %p344
        %p478 = pneg %p341
        %p479 = pneg %p370
        %p480 = pneg %p367
        %s481 = sand.u32 %s357, 1
        %s482 = scalar_lea.sflag [#allocation3], %s481
        %s483 = sand.u32 %s357, 1
        %s484 = smul.addr %s483, 8
        %s485 = scalar_lea.vmem [#allocation2], %s484
        %p486 = scmp.lt.s32.totalorder %s29, 1
        %s487 = scalar_select %p486, %s29, 1
        %s488 = smul.addr %s487, 8
        %s489 = scalar_lea.vmem %s0, %s488
        %v490 = vld [vmem:[%s489] sm:$0xff]
        %v491 = vld [vmem:[%s1] sm:$0xff]
        %v492 = vld [vmem:[%s1 + $0x8] sm:$0xff]
        %v493 = vld [vmem:[%s1 + $0x10] sm:$0xff]
        %v494 = vld [vmem:[%s1 + $0x18] sm:$0xff]
        %v495 = vld [vmem:[%s2] sm:$0x1]
        %v497 = vlaneseq
        %v498 = vshrl.u32 %v497, 7
        %v499 = vsub.s32 0, %v498
        %v500 = vrot.slane %v495, %v499
        %vm502 = vcmask 261120
        %v504 = vsel %vm502, %v490, 0
        %506 = vmatprep.subr.mxu0 0.0
        %507 = vmatpush1.msra.mxu0 %v491
        %508 = vmatprep.subr.mxu0 0.0
        %509 = vmatpush1.msra.mxu0 %v492
        %510 = vmatprep.subr.mxu0 0.0
        %511 = vmatpush1.msra.mxu0 %v493
        %512 = vmatprep.subr.mxu0 0.0
        %513 = vmatpush1.msra.mxu0 %v494
        %514 = vmatprep.subr.mxu0 0.0
        %515 = vmatpush1.msra.mxu0 0.0
        %516 = vmatprep.subr.mxu0 0.0
        %517 = vmatpush1.msra.mxu0 0.0
        %518 = vmatprep.subr.mxu0 0.0
        %519 = vmatpush1.msra.mxu0 0.0
        %520 = vmatprep.subr.mxu0 0.0
        %521 = vmatpush1.msra.mxu0 0.0
        %522 = vmatprep.subr.mxu0 0.0
        %523 = vmatpush1.msra.mxu0 0.0
        %524 = vmatprep.subr.mxu0 0.0
        %525 = vmatpush1.msra.mxu0 0.0
        %526 = vmatprep.subr.mxu0 0.0
        %527 = vmatpush1.msra.mxu0 0.0
        %528 = vmatprep.subr.mxu0 0.0
        %529 = vmatpush1.msra.mxu0 0.0
        %530 = vmatprep.subr.mxu0 0.0
        %531 = vmatpush1.msra.mxu0 0.0
        %532 = vmatprep.subr.mxu0 0.0
        %533 = vmatpush1.msra.mxu0 0.0
        %534 = vmatprep.subr.mxu0 0.0
        %535 = vmatpush1.msra.mxu0 0.0
        %536 = vmatprep.subr.mxu0 0.0
        %537 = vmatpush1.msra.mxu0 0.0
        %538 = vmatprep.subr.mxu0 0.0
        %539 = vmatpush1.msra.mxu0 0.0
        %540 = vmatprep.subr.mxu0 0.0
        %541 = vmatpush1.msra.mxu0 0.0
        %542 = vmatprep.subr.mxu0 0.0
        %543 = vmatpush1.msra.mxu0 0.0
        %544 = vmatprep.subr.mxu0 0.0
        %545 = vmatpush1.msra.mxu0 0.0
        %546 = vmatprep.subr.mxu0 0.0
        %547 = vmatpush1.msra.mxu0 0.0
        %548 = vmatprep.subr.mxu0 0.0
        %549 = vmatpush1.msra.mxu0 0.0
        %550 = vmatprep.subr.mxu0 0.0
        %551 = vmatpush1.msra.mxu0 0.0
        %552 = vmatprep.subr.mxu0 0.0
        %553 = vmatpush1.msra.mxu0 0.0
        %554 = vmatprep.subr.mxu0 0.0
        %555 = vmatpush1.msra.mxu0 0.0
        %556 = vmatprep.subr.mxu0 0.0
        %557 = vmatpush1.msra.mxu0 0.0
        %558 = vmatprep.subr.mxu0 0.0
        %559 = vmatpush1.msra.mxu0 0.0
        %560 = vmatprep.subr.mxu0 0.0
        %561 = vmatpush1.msra.mxu0 0.0
        %562 = vmatprep.subr.mxu0 0.0
        %563 = vmatpush1.msra.mxu0 0.0
        %564 = vmatprep.subr.mxu0 0.0
        %565 = vmatpush1.msra.mxu0 0.0
        %566 = vmatprep.subr.mxu0 0.0
        %567 = vmatpush1.msra.mxu0 0.0
        %568 = vmatprep.subr.mxu0 0.0
        %569 = vmatpush1.msra.mxu0 0.0
        %570 = vmatprep.mubr.f32.mxu0 0.0
        %571 = vmatmul.mubr.f32.gmra.mrb[0].mxu0 %v504
        %v572 = vpop.f32.mrb[0].mxu0
        %v573 = vadd.f32 %v500, %v572
        %v574 = vpop.f32.mrb[0].mxu0
        %575 = vdwg.mxu0
        %v576 = vld [vmem:[%s3] sm:$0xff]
        %v577 = vld [vmem:[%s3 + $0x8] sm:$0xff]
        %v578 = vld [vmem:[%s3 + $0x10] sm:$0xff]
        %v579 = vld [vmem:[%s3 + $0x18] sm:$0xff]
        %v580 = vld [vmem:[%s4] sm:$0x1]
        %v582 = vlaneseq
        %v583 = vshrl.u32 %v582, 7
        %v584 = vsub.s32 0, %v583
        %v585 = vrot.slane %v580, %v584
        %587 = vmatprep.subr.mxu0 0.0
        %588 = vmatpush1.msra.mxu0 %v576
        %589 = vmatprep.subr.mxu0 0.0
        %590 = vmatpush1.msra.mxu0 %v577
        %591 = vmatprep.subr.mxu0 0.0
        %592 = vmatpush1.msra.mxu0 %v578
        %593 = vmatprep.subr.mxu0 0.0
        %594 = vmatpush1.msra.mxu0 %v579
        %595 = vmatprep.subr.mxu0 0.0
        %596 = vmatpush1.msra.mxu0 0.0
        %597 = vmatprep.subr.mxu0 0.0
        %598 = vmatpush1.msra.mxu0 0.0
        %599 = vmatprep.subr.mxu0 0.0
        %600 = vmatpush1.msra.mxu0 0.0
        %601 = vmatprep.subr.mxu0 0.0
        %602 = vmatpush1.msra.mxu0 0.0
        %603 = vmatprep.subr.mxu0 0.0
        %604 = vmatpush1.msra.mxu0 0.0
        %605 = vmatprep.subr.mxu0 0.0
        %606 = vmatpush1.msra.mxu0 0.0
        %607 = vmatprep.subr.mxu0 0.0
        %608 = vmatpush1.msra.mxu0 0.0
        %609 = vmatprep.subr.mxu0 0.0
        %610 = vmatpush1.msra.mxu0 0.0
        %611 = vmatprep.subr.mxu0 0.0
        %612 = vmatpush1.msra.mxu0 0.0
        %613 = vmatprep.subr.mxu0 0.0
        %614 = vmatpush1.msra.mxu0 0.0
        %615 = vmatprep.subr.mxu0 0.0
        %616 = vmatpush1.msra.mxu0 0.0
        %617 = vmatprep.subr.mxu0 0.0
        %618 = vmatpush1.msra.mxu0 0.0
        %619 = vmatprep.subr.mxu0 0.0
        %620 = vmatpush1.msra.mxu0 0.0
        %621 = vmatprep.subr.mxu0 0.0
        %622 = vmatpush1.msra.mxu0 0.0
        %623 = vmatprep.subr.mxu0 0.0
        %624 = vmatpush1.msra.mxu0 0.0
        %625 = vmatprep.subr.mxu0 0.0
        %626 = vmatpush1.msra.mxu0 0.0
        %627 = vmatprep.subr.mxu0 0.0
        %628 = vmatpush1.msra.mxu0 0.0
        %629 = vmatprep.subr.mxu0 0.0
        %630 = vmatpush1.msra.mxu0 0.0
        %631 = vmatprep.subr.mxu0 0.0
        %632 = vmatpush1.msra.mxu0 0.0
        %633 = vmatprep.subr.mxu0 0.0
        %634 = vmatpush1.msra.mxu0 0.0
        %635 = vmatprep.subr.mxu0 0.0
        %636 = vmatpush1.msra.mxu0 0.0
        %637 = vmatprep.subr.mxu0 0.0
        %638 = vmatpush1.msra.mxu0 0.0
        %639 = vmatprep.subr.mxu0 0.0
        %640 = vmatpush1.msra.mxu0 0.0
        %641 = vmatprep.subr.mxu0 0.0
        %642 = vmatpush1.msra.mxu0 0.0
        %643 = vmatprep.subr.mxu0 0.0
        %644 = vmatpush1.msra.mxu0 0.0
        %645 = vmatprep.subr.mxu0 0.0
        %646 = vmatpush1.msra.mxu0 0.0
        %647 = vmatprep.subr.mxu0 0.0
        %648 = vmatpush1.msra.mxu0 0.0
        %649 = vmatprep.subr.mxu0 0.0
        %650 = vmatpush1.msra.mxu0 0.0
        %651 = vmatprep.mubr.f32.mxu0 0.0
        %652 = vmatmul.mubr.f32.gmra.mrb[0].mxu0 %v504
        %v653 = vpop.f32.mrb[0].mxu0
        %v654 = vadd.f32 %v585, %v653
        %v655 = vpop.f32.mrb[0].mxu0
        %656 = vdwg.mxu0
        %v657 = vld [vmem:[%s5] sm:$0xff]
        %v658 = vld [vmem:[%s5 + $0x8] sm:$0xff]
        %v659 = vld [vmem:[%s5 + $0x10] sm:$0xff]
        %v660 = vld [vmem:[%s5 + $0x18] sm:$0xff]
        %v661 = vld [vmem:[%s6] sm:$0x1]
        %v663 = vlaneseq
        %v664 = vshrl.u32 %v663, 7
        %v665 = vsub.s32 0, %v664
        %v666 = vrot.slane %v661, %v665
        %668 = vmatprep.subr.mxu0 0.0
        %669 = vmatpush1.msra.mxu0 %v657
        %670 = vmatprep.subr.mxu0 0.0
        %671 = vmatpush1.msra.mxu0 %v658
        %672 = vmatprep.subr.mxu0 0.0
        %673 = vmatpush1.msra.mxu0 %v659
        %674 = vmatprep.subr.mxu0 0.0
        %675 = vmatpush1.msra.mxu0 %v660
        %676 = vmatprep.subr.mxu0 0.0
        %677 = vmatpush1.msra.mxu0 0.0
        %678 = vmatprep.subr.mxu0 0.0
        %679 = vmatpush1.msra.mxu0 0.0
        %680 = vmatprep.subr.mxu0 0.0
        %681 = vmatpush1.msra.mxu0 0.0
        %682 = vmatprep.subr.mxu0 0.0
        %683 = vmatpush1.msra.mxu0 0.0
        %684 = vmatprep.subr.mxu0 0.0
        %685 = vmatpush1.msra.mxu0 0.0
        %686 = vmatprep.subr.mxu0 0.0
        %687 = vmatpush1.msra.mxu0 0.0
        %688 = vmatprep.subr.mxu0 0.0
        %689 = vmatpush1.msra.mxu0 0.0
        %690 = vmatprep.subr.mxu0 0.0
        %691 = vmatpush1.msra.mxu0 0.0
        %692 = vmatprep.subr.mxu0 0.0
        %693 = vmatpush1.msra.mxu0 0.0
        %694 = vmatprep.subr.mxu0 0.0
        %695 = vmatpush1.msra.mxu0 0.0
        %696 = vmatprep.subr.mxu0 0.0
        %697 = vmatpush1.msra.mxu0 0.0
        %698 = vmatprep.subr.mxu0 0.0
        %699 = vmatpush1.msra.mxu0 0.0
        %700 = vmatprep.subr.mxu0 0.0
        %701 = vmatpush1.msra.mxu0 0.0
        %702 = vmatprep.subr.mxu0 0.0
        %703 = vmatpush1.msra.mxu0 0.0
        %704 = vmatprep.subr.mxu0 0.0
        %705 = vmatpush1.msra.mxu0 0.0
        %706 = vmatprep.subr.mxu0 0.0
        %707 = vmatpush1.msra.mxu0 0.0
        %708 = vmatprep.subr.mxu0 0.0
        %709 = vmatpush1.msra.mxu0 0.0
        %710 = vmatprep.subr.mxu0 0.0
        %711 = vmatpush1.msra.mxu0 0.0
        %712 = vmatprep.subr.mxu0 0.0
        %713 = vmatpush1.msra.mxu0 0.0
        %714 = vmatprep.subr.mxu0 0.0
        %715 = vmatpush1.msra.mxu0 0.0
        %716 = vmatprep.subr.mxu0 0.0
        %717 = vmatpush1.msra.mxu0 0.0
        %718 = vmatprep.subr.mxu0 0.0
        %719 = vmatpush1.msra.mxu0 0.0
        %720 = vmatprep.subr.mxu0 0.0
        %721 = vmatpush1.msra.mxu0 0.0
        %722 = vmatprep.subr.mxu0 0.0
        %723 = vmatpush1.msra.mxu0 0.0
        %724 = vmatprep.subr.mxu0 0.0
        %725 = vmatpush1.msra.mxu0 0.0
        %726 = vmatprep.subr.mxu0 0.0
        %727 = vmatpush1.msra.mxu0 0.0
        %728 = vmatprep.subr.mxu0 0.0
        %729 = vmatpush1.msra.mxu0 0.0
        %730 = vmatprep.subr.mxu0 0.0
        %731 = vmatpush1.msra.mxu0 0.0
        %732 = vmatprep.mubr.f32.mxu0 0.0
        %733 = vmatmul.mubr.f32.gmra.mrb[0].mxu0 %v504
        %v734 = vpop.f32.mrb[0].mxu0
        %v735 = vadd.f32 %v666, %v734
        %v736 = vpop.f32.mrb[0].mxu0
        %737 = vdwg.mxu0
        %vm738 = vcmask 64512
        %v740 = vsel %vm738, %v573, 0
        %v743 = vsel %vm738, %v654, 0
        %745 = vmatprep.subr.mxu0 0.0
        %746 = vmatpush1.xpose.msra.mxu0 %v743
        %747 = vmatprep.subr.mxu0 0.0
        %748 = vmatpush1.xpose.msra.mxu0 0.0
        %749 = vmatprep.subr.mxu0 0.0
        %750 = vmatpush1.xpose.msra.mxu0 0.0
        %751 = vmatprep.subr.mxu0 0.0
        %752 = vmatpush1.xpose.msra.mxu0 0.0
        %753 = vmatprep.subr.mxu0 0.0
        %754 = vmatpush1.xpose.msra.mxu0 0.0
        %755 = vmatprep.subr.mxu0 0.0
        %756 = vmatpush1.xpose.msra.mxu0 0.0
        %757 = vmatprep.subr.mxu0 0.0
        %758 = vmatpush1.xpose.msra.mxu0 0.0
        %759 = vmatprep.subr.mxu0 0.0
        %760 = vmatpush1.xpose.msra.mxu0 0.0
        %761 = vmatprep.subr.mxu0 0.0
        %762 = vmatpush1.xpose.msra.mxu0 0.0
        %763 = vmatprep.subr.mxu0 0.0
        %764 = vmatpush1.xpose.msra.mxu0 0.0
        %765 = vmatprep.subr.mxu0 0.0
        %766 = vmatpush1.xpose.msra.mxu0 0.0
        %767 = vmatprep.subr.mxu0 0.0
        %768 = vmatpush1.xpose.msra.mxu0 0.0
        %769 = vmatprep.subr.mxu0 0.0
        %770 = vmatpush1.xpose.msra.mxu0 0.0
        %771 = vmatprep.subr.mxu0 0.0
        %772 = vmatpush1.xpose.msra.mxu0 0.0
        %773 = vmatprep.subr.mxu0 0.0
        %774 = vmatpush1.xpose.msra.mxu0 0.0
        %775 = vmatprep.subr.mxu0 0.0
        %776 = vmatpush1.xpose.msra.mxu0 0.0
        %777 = vmatprep.subr.mxu0 0.0
        %778 = vmatpush1.xpose.msra.mxu0 0.0
        %779 = vmatprep.subr.mxu0 0.0
        %780 = vmatpush1.xpose.msra.mxu0 0.0
        %781 = vmatprep.subr.mxu0 0.0
        %782 = vmatpush1.xpose.msra.mxu0 0.0
        %783 = vmatprep.subr.mxu0 0.0
        %784 = vmatpush1.xpose.msra.mxu0 0.0
        %785 = vmatprep.subr.mxu0 0.0
        %786 = vmatpush1.xpose.msra.mxu0 0.0
        %787 = vmatprep.subr.mxu0 0.0
        %788 = vmatpush1.xpose.msra.mxu0 0.0
        %789 = vmatprep.subr.mxu0 0.0
        %790 = vmatpush1.xpose.msra.mxu0 0.0
        %791 = vmatprep.subr.mxu0 0.0
        %792 = vmatpush1.xpose.msra.mxu0 0.0
        %793 = vmatprep.subr.mxu0 0.0
        %794 = vmatpush1.xpose.msra.mxu0 0.0
        %795 = vmatprep.subr.mxu0 0.0
        %796 = vmatpush1.xpose.msra.mxu0 0.0
        %797 = vmatprep.subr.mxu0 0.0
        %798 = vmatpush1.xpose.msra.mxu0 0.0
        %799 = vmatprep.subr.mxu0 0.0
        %800 = vmatpush1.xpose.msra.mxu0 0.0
        %801 = vmatprep.subr.mxu0 0.0
        %802 = vmatpush1.xpose.msra.mxu0 0.0
        %803 = vmatprep.subr.mxu0 0.0
        %804 = vmatpush1.xpose.msra.mxu0 0.0
        %805 = vmatprep.subr.mxu0 0.0
        %806 = vmatpush1.xpose.msra.mxu0 0.0
        %807 = vmatprep.subr.mxu0 0.0
        %808 = vmatpush1.xpose.msra.mxu0 0.0
        %809 = vmatprep.mubr.f32.mxu0 0.0
        %810 = vmatmul.mubr.f32.gmra.mrb[0].mxu0 %v740
        %v811 = vpop.f32.mrb[0].mxu0
        %v812 = vadd.f32 0.0, %v811
        %v813 = vpop.f32.mrb[0].mxu0
        %814 = vdwg.mxu0
        %v815 = vrcp.pop 2.828427
        %v816 = vmul.f32 %v812, %v815
        %v817 = vfloor.f32 %v816
        %v818 = vsel %vm738, %v817, -inf
        %819 = vmax.xlane.f32.xlu0 %v818
        %v820 = vpop.xlane.xlu0 %819
        %v821 = vsub.f32 %v817, %v820
        %v822 = vmul.f32 %v821, 1.442695
        %v823 = vpow.pop %v822
        %v824 = vsel %vm738, %v823, 0.0
        %825 = vadd.xlane.f32.xlu0 %v824
        %v826 = vpop.xlane.xlu0 %825
        %v827 = vrcp.pop %v826
        %v828 = vmul.f32 %v826, %v827
        %v829 = vsub.f32 2.0, %v828
        %v830 = vmul.f32 %v827, %v829
        %v831 = vmul.f32 %v823, %v830
        %v833 = vsel %vm738, %v831, 0
        %835 = vmatprep.subr.mxu0 0.0
        %836 = vmatpush1.msra.mxu0 %v735
        %837 = vmatprep.subr.mxu0 0.0
        %838 = vmatpush1.msra.mxu0 0.0
        %839 = vmatprep.subr.mxu0 0.0
        %840 = vmatpush1.msra.mxu0 0.0
        %841 = vmatprep.subr.mxu0 0.0
        %842 = vmatpush1.msra.mxu0 0.0
        %843 = vmatprep.subr.mxu0 0.0
        %844 = vmatpush1.msra.mxu0 0.0
        %845 = vmatprep.subr.mxu0 0.0
        %846 = vmatpush1.msra.mxu0 0.0
        %847 = vmatprep.subr.mxu0 0.0
        %848 = vmatpush1.msra.mxu0 0.0
        %849 = vmatprep.subr.mxu0 0.0
        %850 = vmatpush1.msra.mxu0 0.0
        %851 = vmatprep.subr.mxu0 0.0
        %852 = vmatpush1.msra.mxu0 0.0
        %853 = vmatprep.subr.mxu0 0.0
        %854 = vmatpush1.msra.mxu0 0.0
        %855 = vmatprep.subr.mxu0 0.0
        %856 = vmatpush1.msra.mxu0 0.0
        %857 = vmatprep.subr.mxu0 0.0
        %858 = vmatpush1.msra.mxu0 0.0
        %859 = vmatprep.subr.mxu0 0.0
        %860 = vmatpush1.msra.mxu0 0.0
        %861 = vmatprep.subr.mxu0 0.0
        %862 = vmatpush1.msra.mxu0 0.0
        %863 = vmatprep.subr.mxu0 0.0
        %864 = vmatpush1.msra.mxu0 0.0
        %865 = vmatprep.subr.mxu0 0.0
        %866 = vmatpush1.msra.mxu0 0.0
        %867 = vmatprep.subr.mxu0 0.0
        %868 = vmatpush1.msra.mxu0 0.0
        %869 = vmatprep.subr.mxu0 0.0
        %870 = vmatpush1.msra.mxu0 0.0
        %871 = vmatprep.subr.mxu0 0.0
        %872 = vmatpush1.msra.mxu0 0.0
        %873 = vmatprep.subr.mxu0 0.0
        %874 = vmatpush1.msra.mxu0 0.0
        %875 = vmatprep.subr.mxu0 0.0
        %876 = vmatpush1.msra.mxu0 0.0
        %877 = vmatprep.subr.mxu0 0.0
        %878 = vmatpush1.msra.mxu0 0.0
        %879 = vmatprep.subr.mxu0 0.0
        %880 = vmatpush1.msra.mxu0 0.0
        %881 = vmatprep.subr.mxu0 0.0
        %882 = vmatpush1.msra.mxu0 0.0
        %883 = vmatprep.subr.mxu0 0.0
        %884 = vmatpush1.msra.mxu0 0.0
        %885 = vmatprep.subr.mxu0 0.0
        %886 = vmatpush1.msra.mxu0 0.0
        %887 = vmatprep.subr.mxu0 0.0
        %888 = vmatpush1.msra.mxu0 0.0
        %889 = vmatprep.subr.mxu0 0.0
        %890 = vmatpush1.msra.mxu0 0.0
        %891 = vmatprep.subr.mxu0 0.0
        %892 = vmatpush1.msra.mxu0 0.0
        %893 = vmatprep.subr.mxu0 0.0
        %894 = vmatpush1.msra.mxu0 0.0
        %895 = vmatprep.subr.mxu0 0.0
        %896 = vmatpush1.msra.mxu0 0.0
        %897 = vmatprep.subr.mxu0 0.0
        %898 = vmatpush1.msra.mxu0 0.0
        %899 = vmatprep.mubr.f32.mxu0 0.0
        %900 = vmatmul.mubr.f32.gmra.mrb[0].mxu0 %v833
        %v901 = vpop.f32.mrb[0].mxu0
        %v902 = vadd.f32 0.0, %v901
        %v903 = vpop.f32.mrb[0].mxu0
        %904 = vdwg.mxu0
        %905 = vrot.lane.b32.xlu0 %v573, 120
        %v906 = vpop.permute.xlu0 %905
        %907 = vrot.lane.b32.xlu0 %v654, 120
        %v908 = vpop.permute.xlu0 %907
        %v909 = vsel %vm738, %v906, 0
        %v911 = vsel %vm738, %v908, 0
        %913 = vmatprep.subr.mxu0 0.0
        %914 = vmatpush1.xpose.msra.mxu0 %v911
        %915 = vmatprep.subr.mxu0 0.0
        %916 = vmatpush1.xpose.msra.mxu0 0.0
        %917 = vmatprep.subr.mxu0 0.0
        %918 = vmatpush1.xpose.msra.mxu0 0.0
        %919 = vmatprep.subr.mxu0 0.0
        %920 = vmatpush1.xpose.msra.mxu0 0.0
        %921 = vmatprep.subr.mxu0 0.0
        %922 = vmatpush1.xpose.msra.mxu0 0.0
        %923 = vmatprep.subr.mxu0 0.0
        %924 = vmatpush1.xpose.msra.mxu0 0.0
        %925 = vmatprep.subr.mxu0 0.0
        %926 = vmatpush1.xpose.msra.mxu0 0.0
        %927 = vmatprep.subr.mxu0 0.0
        %928 = vmatpush1.xpose.msra.mxu0 0.0
        %929 = vmatprep.subr.mxu0 0.0
        %930 = vmatpush1.xpose.msra.mxu0 0.0
        %931 = vmatprep.subr.mxu0 0.0
        %932 = vmatpush1.xpose.msra.mxu0 0.0
        %933 = vmatprep.subr.mxu0 0.0
        %934 = vmatpush1.xpose.msra.mxu0 0.0
        %935 = vmatprep.subr.mxu0 0.0
        %936 = vmatpush1.xpose.msra.mxu0 0.0
        %937 = vmatprep.subr.mxu0 0.0
        %938 = vmatpush1.xpose.msra.mxu0 0.0
        %939 = vmatprep.subr.mxu0 0.0
        %940 = vmatpush1.xpose.msra.mxu0 0.0
        %941 = vmatprep.subr.mxu0 0.0
        %942 = vmatpush1.xpose.msra.mxu0 0.0
        %943 = vmatprep.subr.mxu0 0.0
        %944 = vmatpush1.xpose.msra.mxu0 0.0
        %945 = vmatprep.subr.mxu0 0.0
        %946 = vmatpush1.xpose.msra.mxu0 0.0
        %947 = vmatprep.subr.mxu0 0.0
        %948 = vmatpush1.xpose.msra.mxu0 0.0
        %949 = vmatprep.subr.mxu0 0.0
        %950 = vmatpush1.xpose.msra.mxu0 0.0
        %951 = vmatprep.subr.mxu0 0.0
        %952 = vmatpush1.xpose.msra.mxu0 0.0
        %953 = vmatprep.subr.mxu0 0.0
        %954 = vmatpush1.xpose.msra.mxu0 0.0
        %955 = vmatprep.subr.mxu0 0.0
        %956 = vmatpush1.xpose.msra.mxu0 0.0
        %957 = vmatprep.subr.mxu0 0.0
        %958 = vmatpush1.xpose.msra.mxu0 0.0
        %959 = vmatprep.subr.mxu0 0.0
        %960 = vmatpush1.xpose.msra.mxu0 0.0
        %961 = vmatprep.subr.mxu0 0.0
        %962 = vmatpush1.xpose.msra.mxu0 0.0
        %963 = vmatprep.subr.mxu0 0.0
        %964 = vmatpush1.xpose.msra.mxu0 0.0
        %965 = vmatprep.subr.mxu0 0.0
        %966 = vmatpush1.xpose.msra.mxu0 0.0
        %967 = vmatprep.subr.mxu0 0.0
        %968 = vmatpush1.xpose.msra.mxu0 0.0
        %969 = vmatprep.subr.mxu0 0.0
        %970 = vmatpush1.xpose.msra.mxu0 0.0
        %971 = vmatprep.subr.mxu0 0.0
        %972 = vmatpush1.xpose.msra.mxu0 0.0
        %973 = vmatprep.subr.mxu0 0.0
        %974 = vmatpush1.xpose.msra.mxu0 0.0
        %975 = vmatprep.subr.mxu0 0.0
        %976 = vmatpush1.xpose.msra.mxu0 0.0
        %977 = vmatprep.mubr.f32.mxu0 0.0
        %978 = vmatmul.mubr.f32.gmra.mrb[0].mxu0 %v909
        %v979 = vpop.f32.mrb[0].mxu0
        %v980 = vadd.f32 0.0, %v979
        %v981 = vpop.f32.mrb[0].mxu0
        %982 = vdwg.mxu0
        %v983 = vmul.f32 %v980, %v815
        %v984 = vfloor.f32 %v983
        %v985 = vsel %vm738, %v984, -inf
        %986 = vmax.xlane.f32.xlu0 %v985
        %v987 = vpop.xlane.xlu0 %986
        %v988 = vsub.f32 %v984, %v987
        %v989 = vmul.f32 %v988, 1.442695
        %v990 = vpow.pop %v989
        %v991 = vsel %vm738, %v990, 0.0
        %992 = vadd.xlane.f32.xlu0 %v991
        %v993 = vpop.xlane.xlu0 %992
        %v994 = vrcp.pop %v993
        %v995 = vmul.f32 %v993, %v994
        %v996 = vsub.f32 2.0, %v995
        %v997 = vmul.f32 %v994, %v996
        %v998 = vmul.f32 %v990, %v997
        %1000 = vrot.lane.b32.xlu0 %v735, 120
        %v1001 = vpop.permute.xlu0 %1000
        %v1004 = vsel %vm738, %v998, 0
        %1006 = vmatprep.subr.mxu0 0.0
        %1007 = vmatpush1.msra.mxu0 %v1001
        %1008 = vmatprep.subr.mxu0 0.0
        %1009 = vmatpush1.msra.mxu0 0.0
        %1010 = vmatprep.subr.mxu0 0.0
        %1011 = vmatpush1.msra.mxu0 0.0
        %1012 = vmatprep.subr.mxu0 0.0
        %1013 = vmatpush1.msra.mxu0 0.0
        %1014 = vmatprep.subr.mxu0 0.0
        %1015 = vmatpush1.msra.mxu0 0.0
        %1016 = vmatprep.subr.mxu0 0.0
        %1017 = vmatpush1.msra.mxu0 0.0
        %1018 = vmatprep.subr.mxu0 0.0
        %1019 = vmatpush1.msra.mxu0 0.0
        %1020 = vmatprep.subr.mxu0 0.0
        %1021 = vmatpush1.msra.mxu0 0.0
        %1022 = vmatprep.subr.mxu0 0.0
        %1023 = vmatpush1.msra.mxu0 0.0
        %1024 = vmatprep.subr.mxu0 0.0
        %1025 = vmatpush1.msra.mxu0 0.0
        %1026 = vmatprep.subr.mxu0 0.0
        %1027 = vmatpush1.msra.mxu0 0.0
        %1028 = vmatprep.subr.mxu0 0.0
        %1029 = vmatpush1.msra.mxu0 0.0
        %1030 = vmatprep.subr.mxu0 0.0
        %1031 = vmatpush1.msra.mxu0 0.0
        %1032 = vmatprep.subr.mxu0 0.0
        %1033 = vmatpush1.msra.mxu0 0.0
        %1034 = vmatprep.subr.mxu0 0.0
        %1035 = vmatpush1.msra.mxu0 0.0
        %1036 = vmatprep.subr.mxu0 0.0
        %1037 = vmatpush1.msra.mxu0 0.0
        %1038 = vmatprep.subr.mxu0 0.0
        %1039 = vmatpush1.msra.mxu0 0.0
        %1040 = vmatprep.subr.mxu0 0.0
        %1041 = vmatpush1.msra.mxu0 0.0
        %1042 = vmatprep.subr.mxu0 0.0
        %1043 = vmatpush1.msra.mxu0 0.0
        %1044 = vmatprep.subr.mxu0 0.0
        %1045 = vmatpush1.msra.mxu0 0.0
        %1046 = vmatprep.subr.mxu0 0.0
        %1047 = vmatpush1.msra.mxu0 0.0
        %1048 = vmatprep.subr.mxu0 0.0
        %1049 = vmatpush1.msra.mxu0 0.0
        %1050 = vmatprep.subr.mxu0 0.0
        %1051 = vmatpush1.msra.mxu0 0.0
        %1052 = vmatprep.subr.mxu0 0.0
        %1053 = vmatpush1.msra.mxu0 0.0
        %1054 = vmatprep.subr.mxu0 0.0
        %1055 = vmatpush1.msra.mxu0 0.0
        %1056 = vmatprep.subr.mxu0 0.0
        %1057 = vmatpush1.msra.mxu0 0.0
        %1058 = vmatprep.subr.mxu0 0.0
        %1059 = vmatpush1.msra.mxu0 0.0
        %1060 = vmatprep.subr.mxu0 0.0
        %1061 = vmatpush1.msra.mxu0 0.0
        %1062 = vmatprep.subr.mxu0 0.0
        %1063 = vmatpush1.msra.mxu0 0.0
        %1064 = vmatprep.subr.mxu0 0.0
        %1065 = vmatpush1.msra.mxu0 0.0
        %1066 = vmatprep.subr.mxu0 0.0
        %1067 = vmatpush1.msra.mxu0 0.0
        %1068 = vmatprep.subr.mxu0 0.0
        %1069 = vmatpush1.msra.mxu0 0.0
        %1070 = vmatprep.mubr.f32.mxu0 0.0
        %1071 = vmatmul.mubr.f32.gmra.mrb[0].mxu0 %v1004
        %v1072 = vpop.f32.mrb[0].mxu0
        %v1073 = vadd.f32 0.0, %v1072
        %v1074 = vpop.f32.mrb[0].mxu0
        %1075 = vdwg.mxu0
        %1076 = vrot.lane.b32.xlu0 %v573, 112
        %v1077 = vpop.permute.xlu0 %1076
        %1078 = vrot.lane.b32.xlu0 %v654, 112
        %v1079 = vpop.permute.xlu0 %1078
        %v1080 = vsel %vm738, %v1077, 0
        %v1082 = vsel %vm738, %v1079, 0
        %1084 = vmatprep.subr.mxu0 0.0
        %1085 = vmatpush1.xpose.msra.mxu0 %v1082
        %1086 = vmatprep.subr.mxu0 0.0
        %1087 = vmatpush1.xpose.msra.mxu0 0.0
        %1088 = vmatprep.subr.mxu0 0.0
        %1089 = vmatpush1.xpose.msra.mxu0 0.0
        %1090 = vmatprep.subr.mxu0 0.0
        %1091 = vmatpush1.xpose.msra.mxu0 0.0
        %1092 = vmatprep.subr.mxu0 0.0
        %1093 = vmatpush1.xpose.msra.mxu0 0.0
        %1094 = vmatprep.subr.mxu0 0.0
        %1095 = vmatpush1.xpose.msra.mxu0 0.0
        %1096 = vmatprep.subr.mxu0 0.0
        %1097 = vmatpush1.xpose.msra.mxu0 0.0
        %1098 = vmatprep.subr.mxu0 0.0
        %1099 = vmatpush1.xpose.msra.mxu0 0.0
        %1100 = vmatprep.subr.mxu0 0.0
        %1101 = vmatpush1.xpose.msra.mxu0 0.0
        %1102 = vmatprep.subr.mxu0 0.0
        %1103 = vmatpush1.xpose.msra.mxu0 0.0
        %1104 = vmatprep.subr.mxu0 0.0
        %1105 = vmatpush1.xpose.msra.mxu0 0.0
        %1106 = vmatprep.subr.mxu0 0.0
        %1107 = vmatpush1.xpose.msra.mxu0 0.0
        %1108 = vmatprep.subr.mxu0 0.0
        %1109 = vmatpush1.xpose.msra.mxu0 0.0
        %1110 = vmatprep.subr.mxu0 0.0
        %1111 = vmatpush1.xpose.msra.mxu0 0.0
        %1112 = vmatprep.subr.mxu0 0.0
        %1113 = vmatpush1.xpose.msra.mxu0 0.0
        %1114 = vmatprep.subr.mxu0 0.0
        %1115 = vmatpush1.xpose.msra.mxu0 0.0
        %1116 = vmatprep.subr.mxu0 0.0
        %1117 = vmatpush1.xpose.msra.mxu0 0.0
        %1118 = vmatprep.subr.mxu0 0.0
        %1119 = vmatpush1.xpose.msra.mxu0 0.0
        %1120 = vmatprep.subr.mxu0 0.0
        %1121 = vmatpush1.xpose.msra.mxu0 0.0
        %1122 = vmatprep.subr.mxu0 0.0
        %1123 = vmatpush1.xpose.msra.mxu0 0.0
        %1124 = vmatprep.subr.mxu0 0.0
        %1125 = vmatpush1.xpose.msra.mxu0 0.0
        %1126 = vmatprep.subr.mxu0 0.0
        %1127 = vmatpush1.xpose.msra.mxu0 0.0
        %1128 = vmatprep.subr.mxu0 0.0
        %1129 = vmatpush1.xpose.msra.mxu0 0.0
        %1130 = vmatprep.subr.mxu0 0.0
        %1131 = vmatpush1.xpose.msra.mxu0 0.0
        %1132 = vmatprep.subr.mxu0 0.0
        %1133 = vmatpush1.xpose.msra.mxu0 0.0
        %1134 = vmatprep.subr.mxu0 0.0
        %1135 = vmatpush1.xpose.msra.mxu0 0.0
        %1136 = vmatprep.subr.mxu0 0.0
        %1137 = vmatpush1.xpose.msra.mxu0 0.0
        %1138 = vmatprep.subr.mxu0 0.0
        %1139 = vmatpush1.xpose.msra.mxu0 0.0
        %1140 = vmatprep.subr.mxu0 0.0
        %1141 = vmatpush1.xpose.msra.mxu0 0.0
        %1142 = vmatprep.subr.mxu0 0.0
        %1143 = vmatpush1.xpose.msra.mxu0 0.0
        %1144 = vmatprep.subr.mxu0 0.0
        %1145 = vmatpush1.xpose.msra.mxu0 0.0
        %1146 = vmatprep.subr.mxu0 0.0
        %1147 = vmatpush1.xpose.msra.mxu0 0.0
        %1148 = vmatprep.mubr.f32.mxu0 0.0
        %1149 = vmatmul.mubr.f32.gmra.mrb[0].mxu0 %v1080
        %v1150 = vpop.f32.mrb[0].mxu0
        %v1151 = vadd.f32 0.0, %v1150
        %v1152 = vpop.f32.mrb[0].mxu0
        %1153 = vdwg.mxu0
        %v1154 = vmul.f32 %v1151, %v815
        %v1155 = vfloor.f32 %v1154
        %v1156 = vsel %vm738, %v1155, -inf
        %1157 = vmax.xlane.f32.xlu0 %v1156
        %v1158 = vpop.xlane.xlu0 %1157
        %v1159 = vsub.f32 %v1155, %v1158
        %v1160 = vmul.f32 %v1159, 1.442695
        %v1161 = vpow.pop %v1160
        %v1162 = vsel %vm738, %v1161, 0.0
        %1163 = vadd.xlane.f32.xlu0 %v1162
        %v1164 = vpop.xlane.xlu0 %1163
        %v1165 = vrcp.pop %v1164
        %v1166 = vmul.f32 %v1164, %v1165
        %v1167 = vsub.f32 2.0, %v1166
        %v1168 = vmul.f32 %v1165, %v1167
        %v1169 = vmul.f32 %v1161, %v1168
        %1170 = vrot.lane.b32.xlu0 %v735, 112
        %v1171 = vpop.permute.xlu0 %1170
        %v1174 = vsel %vm738, %v1169, 0
        %1176 = vmatprep.subr.mxu0 0.0
        %1177 = vmatpush1.msra.mxu0 %v1171
        %1178 = vmatprep.subr.mxu0 0.0
        %1179 = vmatpush1.msra.mxu0 0.0
        %1180 = vmatprep.subr.mxu0 0.0
        %1181 = vmatpush1.msra.mxu0 0.0
        %1182 = vmatprep.subr.mxu0 0.0
        %1183 = vmatpush1.msra.mxu0 0.0
        %1184 = vmatprep.subr.mxu0 0.0
        %1185 = vmatpush1.msra.mxu0 0.0
        %1186 = vmatprep.subr.mxu0 0.0
        %1187 = vmatpush1.msra.mxu0 0.0
        %1188 = vmatprep.subr.mxu0 0.0
        %1189 = vmatpush1.msra.mxu0 0.0
        %1190 = vmatprep.subr.mxu0 0.0
        %1191 = vmatpush1.msra.mxu0 0.0
        %1192 = vmatprep.subr.mxu0 0.0
        %1193 = vmatpush1.msra.mxu0 0.0
        %1194 = vmatprep.subr.mxu0 0.0
        %1195 = vmatpush1.msra.mxu0 0.0
        %1196 = vmatprep.subr.mxu0 0.0
        %1197 = vmatpush1.msra.mxu0 0.0
        %1198 = vmatprep.subr.mxu0 0.0
        %1199 = vmatpush1.msra.mxu0 0.0
        %1200 = vmatprep.subr.mxu0 0.0
        %1201 = vmatpush1.msra.mxu0 0.0
        %1202 = vmatprep.subr.mxu0 0.0
        %1203 = vmatpush1.msra.mxu0 0.0
        %1204 = vmatprep.subr.mxu0 0.0
        %1205 = vmatpush1.msra.mxu0 0.0
        %1206 = vmatprep.subr.mxu0 0.0
        %1207 = vmatpush1.msra.mxu0 0.0
        %1208 = vmatprep.subr.mxu0 0.0
        %1209 = vmatpush1.msra.mxu0 0.0
        %1210 = vmatprep.subr.mxu0 0.0
        %1211 = vmatpush1.msra.mxu0 0.0
        %1212 = vmatprep.subr.mxu0 0.0
        %1213 = vmatpush1.msra.mxu0 0.0
        %1214 = vmatprep.subr.mxu0 0.0
        %1215 = vmatpush1.msra.mxu0 0.0
        %1216 = vmatprep.subr.mxu0 0.0
        %1217 = vmatpush1.msra.mxu0 0.0
        %1218 = vmatprep.subr.mxu0 0.0
        %1219 = vmatpush1.msra.mxu0 0.0
        %1220 = vmatprep.subr.mxu0 0.0
        %1221 = vmatpush1.msra.mxu0 0.0
        %1222 = vmatprep.subr.mxu0 0.0
        %1223 = vmatpush1.msra.mxu0 0.0
        %1224 = vmatprep.subr.mxu0 0.0
        %1225 = vmatpush1.msra.mxu0 0.0
        %1226 = vmatprep.subr.mxu0 0.0
        %1227 = vmatpush1.msra.mxu0 0.0
        %1228 = vmatprep.subr.mxu0 0.0
        %1229 = vmatpush1.msra.mxu0 0.0
        %1230 = vmatprep.subr.mxu0 0.0
        %1231 = vmatpush1.msra.mxu0 0.0
        %1232 = vmatprep.subr.mxu0 0.0
        %1233 = vmatpush1.msra.mxu0 0.0
        %1234 = vmatprep.subr.mxu0 0.0
        %1235 = vmatpush1.msra.mxu0 0.0
        %1236 = vmatprep.subr.mxu0 0.0
        %1237 = vmatpush1.msra.mxu0 0.0
        %1238 = vmatprep.subr.mxu0 0.0
        %1239 = vmatpush1.msra.mxu0 0.0
        %1240 = vmatprep.mubr.f32.mxu0 0.0
        %1241 = vmatmul.mubr.f32.gmra.mrb[0].mxu0 %v1174
        %v1242 = vpop.f32.mrb[0].mxu0
        %v1243 = vadd.f32 0.0, %v1242
        %v1244 = vpop.f32.mrb[0].mxu0
        %1245 = vdwg.mxu0
        %1246 = vrot.lane.b32.xlu0 %v573, 104
        %v1247 = vpop.permute.xlu0 %1246
        %1248 = vrot.lane.b32.xlu0 %v654, 104
        %v1249 = vpop.permute.xlu0 %1248
        %v1250 = vsel %vm738, %v1247, 0
        %v1252 = vsel %vm738, %v1249, 0
        %1254 = vmatprep.subr.mxu0 0.0
        %1255 = vmatpush1.xpose.msra.mxu0 %v1252
        %1256 = vmatprep.subr.mxu0 0.0
        %1257 = vmatpush1.xpose.msra.mxu0 0.0
        %1258 = vmatprep.subr.mxu0 0.0
        %1259 = vmatpush1.xpose.msra.mxu0 0.0
        %1260 = vmatprep.subr.mxu0 0.0
        %1261 = vmatpush1.xpose.msra.mxu0 0.0
        %1262 = vmatprep.subr.mxu0 0.0
        %1263 = vmatpush1.xpose.msra.mxu0 0.0
        %1264 = vmatprep.subr.mxu0 0.0
        %1265 = vmatpush1.xpose.msra.mxu0 0.0
        %1266 = vmatprep.subr.mxu0 0.0
        %1267 = vmatpush1.xpose.msra.mxu0 0.0
        %1268 = vmatprep.subr.mxu0 0.0
        %1269 = vmatpush1.xpose.msra.mxu0 0.0
        %1270 = vmatprep.subr.mxu0 0.0
        %1271 = vmatpush1.xpose.msra.mxu0 0.0
        %1272 = vmatprep.subr.mxu0 0.0
        %1273 = vmatpush1.xpose.msra.mxu0 0.0
        %1274 = vmatprep.subr.mxu0 0.0
        %1275 = vmatpush1.xpose.msra.mxu0 0.0
        %1276 = vmatprep.subr.mxu0 0.0
        %1277 = vmatpush1.xpose.msra.mxu0 0.0
        %1278 = vmatprep.subr.mxu0 0.0
        %1279 = vmatpush1.xpose.msra.mxu0 0.0
        %1280 = vmatprep.subr.mxu0 0.0
        %1281 = vmatpush1.xpose.msra.mxu0 0.0
        %1282 = vmatprep.subr.mxu0 0.0
        %1283 = vmatpush1.xpose.msra.mxu0 0.0
        %1284 = vmatprep.subr.mxu0 0.0
        %1285 = vmatpush1.xpose.msra.mxu0 0.0
        %1286 = vmatprep.subr.mxu0 0.0
        %1287 = vmatpush1.xpose.msra.mxu0 0.0
        %1288 = vmatprep.subr.mxu0 0.0
        %1289 = vmatpush1.xpose.msra.mxu0 0.0
        %1290 = vmatprep.subr.mxu0 0.0
        %1291 = vmatpush1.xpose.msra.mxu0 0.0
        %1292 = vmatprep.subr.mxu0 0.0
        %1293 = vmatpush1.xpose.msra.mxu0 0.0
        %1294 = vmatprep.subr.mxu0 0.0
        %1295 = vmatpush1.xpose.msra.mxu0 0.0
        %1296 = vmatprep.subr.mxu0 0.0
        %1297 = vmatpush1.xpose.msra.mxu0 0.0
        %1298 = vmatprep.subr.mxu0 0.0
        %1299 = vmatpush1.xpose.msra.mxu0 0.0
        %1300 = vmatprep.subr.mxu0 0.0
        %1301 = vmatpush1.xpose.msra.mxu0 0.0
        %1302 = vmatprep.subr.mxu0 0.0
        %1303 = vmatpush1.xpose.msra.mxu0 0.0
        %1304 = vmatprep.subr.mxu0 0.0
        %1305 = vmatpush1.xpose.msra.mxu0 0.0
        %1306 = vmatprep.subr.mxu0 0.0
        %1307 = vmatpush1.xpose.msra.mxu0 0.0
        %1308 = vmatprep.subr.mxu0 0.0
        %1309 = vmatpush1.xpose.msra.mxu0 0.0
        %1310 = vmatprep.subr.mxu0 0.0
        %1311 = vmatpush1.xpose.msra.mxu0 0.0
        %1312 = vmatprep.subr.mxu0 0.0
        %1313 = vmatpush1.xpose.msra.mxu0 0.0
        %1314 = vmatprep.subr.mxu0 0.0
        %1315 = vmatpush1.xpose.msra.mxu0 0.0
        %1316 = vmatprep.subr.mxu0 0.0
        %1317 = vmatpush1.xpose.msra.mxu0 0.0
        %1318 = vmatprep.mubr.f32.mxu0 0.0
        %1319 = vmatmul.mubr.f32.gmra.mrb[0].mxu0 %v1250
        %v1320 = vpop.f32.mrb[0].mxu0
        %v1321 = vadd.f32 0.0, %v1320
        %v1322 = vpop.f32.mrb[0].mxu0
        %1323 = vdwg.mxu0
        %v1324 = vmul.f32 %v1321, %v815
        %v1325 = vfloor.f32 %v1324
        %v1326 = vsel %vm738, %v1325, -inf
        %1327 = vmax.xlane.f32.xlu0 %v1326
        %v1328 = vpop.xlane.xlu0 %1327
        %v1329 = vsub.f32 %v1325, %v1328
        %v1330 = vmul.f32 %v1329, 1.442695
        %v1331 = vpow.pop %v1330
        %v1332 = vsel %vm738, %v1331, 0.0
        %1333 = vadd.xlane.f32.xlu0 %v1332
        %v1334 = vpop.xlane.xlu0 %1333
        %v1335 = vrcp.pop %v1334
        %v1336 = vmul.f32 %v1334, %v1335
        %v1337 = vsub.f32 2.0, %v1336
        %v1338 = vmul.f32 %v1335, %v1337
        %v1339 = vmul.f32 %v1331, %v1338
        %1340 = vrot.lane.b32.xlu0 %v735, 104
        %v1341 = vpop.permute.xlu0 %1340
        %v1344 = vsel %vm738, %v1339, 0
        %1346 = vmatprep.subr.mxu0 0.0
        %1347 = vmatpush1.msra.mxu0 %v1341
        %1348 = vmatprep.subr.mxu0 0.0
        %1349 = vmatpush1.msra.mxu0 0.0
        %1350 = vmatprep.subr.mxu0 0.0
        %1351 = vmatpush1.msra.mxu0 0.0
        %1352 = vmatprep.subr.mxu0 0.0
        %1353 = vmatpush1.msra.mxu0 0.0
        %1354 = vmatprep.subr.mxu0 0.0
        %1355 = vmatpush1.msra.mxu0 0.0
        %1356 = vmatprep.subr.mxu0 0.0
        %1357 = vmatpush1.msra.mxu0 0.0
        %1358 = vmatprep.subr.mxu0 0.0
        %1359 = vmatpush1.msra.mxu0 0.0
        %1360 = vmatprep.subr.mxu0 0.0
        %1361 = vmatpush1.msra.mxu0 0.0
        %1362 = vmatprep.subr.mxu0 0.0
        %1363 = vmatpush1.msra.mxu0 0.0
        %1364 = vmatprep.subr.mxu0 0.0
        %1365 = vmatpush1.msra.mxu0 0.0
        %1366 = vmatprep.subr.mxu0 0.0
        %1367 = vmatpush1.msra.mxu0 0.0
        %1368 = vmatprep.subr.mxu0 0.0
        %1369 = vmatpush1.msra.mxu0 0.0
        %1370 = vmatprep.subr.mxu0 0.0
        %1371 = vmatpush1.msra.mxu0 0.0
        %1372 = vmatprep.subr.mxu0 0.0
        %1373 = vmatpush1.msra.mxu0 0.0
        %1374 = vmatprep.subr.mxu0 0.0
        %1375 = vmatpush1.msra.mxu0 0.0
        %1376 = vmatprep.subr.mxu0 0.0
        %1377 = vmatpush1.msra.mxu0 0.0
        %1378 = vmatprep.subr.mxu0 0.0
        %1379 = vmatpush1.msra.mxu0 0.0
        %1380 = vmatprep.subr.mxu0 0.0
        %1381 = vmatpush1.msra.mxu0 0.0
        %1382 = vmatprep.subr.mxu0 0.0
        %1383 = vmatpush1.msra.mxu0 0.0
        %1384 = vmatprep.subr.mxu0 0.0
        %1385 = vmatpush1.msra.mxu0 0.0
        %1386 = vmatprep.subr.mxu0 0.0
        %1387 = vmatpush1.msra.mxu0 0.0
        %1388 = vmatprep.subr.mxu0 0.0
        %1389 = vmatpush1.msra.mxu0 0.0
        %1390 = vmatprep.subr.mxu0 0.0
        %1391 = vmatpush1.msra.mxu0 0.0
        %1392 = vmatprep.subr.mxu0 0.0
        %1393 = vmatpush1.msra.mxu0 0.0
        %1394 = vmatprep.subr.mxu0 0.0
        %1395 = vmatpush1.msra.mxu0 0.0
        %1396 = vmatprep.subr.mxu0 0.0
        %1397 = vmatpush1.msra.mxu0 0.0
        %1398 = vmatprep.subr.mxu0 0.0
        %1399 = vmatpush1.msra.mxu0 0.0
        %1400 = vmatprep.subr.mxu0 0.0
        %1401 = vmatpush1.msra.mxu0 0.0
        %1402 = vmatprep.subr.mxu0 0.0
        %1403 = vmatpush1.msra.mxu0 0.0
        %1404 = vmatprep.subr.mxu0 0.0
        %1405 = vmatpush1.msra.mxu0 0.0
        %1406 = vmatprep.subr.mxu0 0.0
        %1407 = vmatpush1.msra.mxu0 0.0
        %1408 = vmatprep.subr.mxu0 0.0
        %1409 = vmatpush1.msra.mxu0 0.0
        %1410 = vmatprep.mubr.f32.mxu0 0.0
        %1411 = vmatmul.mubr.f32.gmra.mrb[0].mxu0 %v1344
        %v1412 = vpop.f32.mrb[0].mxu0
        %v1413 = vadd.f32 0.0, %v1412
        %v1414 = vpop.f32.mrb[0].mxu0
        %1415 = vdwg.mxu0
        %1417 = vrot.lane.b32.xlu0 %v1073, 8
        %v1418 = vpop.permute.xlu0 %1417
        %1421 = vrot.lane.b32.xlu0 %v1243, 16
        %v1422 = vpop.permute.xlu0 %1421
        %1425 = vrot.lane.b32.xlu0 %v1413, 24
        %v1426 = vpop.permute.xlu0 %1425
        %v1428 = vsel %vm738, %v902, %v1418
        %vm1429 = vcmask 130048
        %v1430 = vsel %vm1429, %v1428, %v1422
        %vm1431 = vcmask 195584
        %v1432 = vsel %vm1431, %v1430, %v1426
        %v1433 = vadd.f32 %v490, %v1432
        %v1434 = vld [vmem:[%s11] sm:$0x1]
        %v1435 = vld [vmem:[%s12] sm:$0x1]
        %v1436 = vsel %vm502, %v1433, 0.0
        %1437 = vadd.xlane.f32.xlu0 %v1436
        %v1438 = vpop.xlane.xlu0 %1437
        %v1439 = vrcp.pop 32.0
        %v1440 = vmul.f32 %v1438, %v1439
        %v1441 = vsub.f32 %v1433, %v1440
        %v1442 = vmul.f32 %v1441, %v1441
        %v1443 = vsel %vm502, %v1442, 0.0
        %1444 = vadd.xlane.f32.xlu0 %v1443
        %v1445 = vpop.xlane.xlu0 %1444
        %v1446 = vmul.f32 %v1445, %v1439
        %v1447 = vadd.f32 %v1446, 1e-05
        %v1448 = vrsqrt.pop %v1447
        %v1449 = vmul.f32 %v1441, %v1448
        %v1451 = vlaneseq
        %v1452 = vshrl.u32 %v1451, 7
        %v1453 = vsub.s32 0, %v1452
        %v1454 = vrot.slane %v1434, %v1453
        %v1456 = vmul.f32 %v1449, %v1454
        %v1458 = vlaneseq
        %v1459 = vshrl.u32 %v1458, 7
        %v1460 = vsub.s32 0, %v1459
        %v1461 = vrot.slane %v1435, %v1460
        %v1463 = vadd.f32 %v1456, %v1461
        %v1464 = vld [vmem:[%s7] sm:$0xff]
        %v1465 = vld [vmem:[%s7 + $0x8] sm:$0xff]
        %v1466 = vld [vmem:[%s7 + $0x10] sm:$0xff]
        %v1467 = vld [vmem:[%s7 + $0x18] sm:$0xff]
        %v1468 = vld [vmem:[%s8] sm:$0x1]
        %v1470 = vlaneseq
        %v1471 = vshrl.u32 %v1470, 7
        %v1472 = vsub.s32 0, %v1471
        %v1473 = vrot.slane %v1468, %v1472
        %v1476 = vsel %vm502, %v1463, 0
        %1478 = vmatprep.subr.mxu0 0.0
        %1479 = vmatpush1.msra.mxu0 %v1464
        %1480 = vmatprep.subr.mxu0 0.0
        %1481 = vmatpush1.msra.mxu0 %v1465
        %1482 = vmatprep.subr.mxu0 0.0
        %1483 = vmatpush1.msra.mxu0 %v1466
        %1484 = vmatprep.subr.mxu0 0.0
        %1485 = vmatpush1.msra.mxu0 %v1467
        %1486 = vmatprep.subr.mxu0 0.0
        %1487 = vmatpush1.msra.mxu0 0.0
        %1488 = vmatprep.subr.mxu0 0.0
        %1489 = vmatpush1.msra.mxu0 0.0
        %1490 = vmatprep.subr.mxu0 0.0
        %1491 = vmatpush1.msra.mxu0 0.0
        %1492 = vmatprep.subr.mxu0 0.0
        %1493 = vmatpush1.msra.mxu0 0.0
        %1494 = vmatprep.subr.mxu0 0.0
        %1495 = vmatpush1.msra.mxu0 0.0
        %1496 = vmatprep.subr.mxu0 0.0
        %1497 = vmatpush1.msra.mxu0 0.0
        %1498 = vmatprep.subr.mxu0 0.0
        %1499 = vmatpush1.msra.mxu0 0.0
        %1500 = vmatprep.subr.mxu0 0.0
        %1501 = vmatpush1.msra.mxu0 0.0
        %1502 = vmatprep.subr.mxu0 0.0
        %1503 = vmatpush1.msra.mxu0 0.0
        %1504 = vmatprep.subr.mxu0 0.0
        %1505 = vmatpush1.msra.mxu0 0.0
        %1506 = vmatprep.subr.mxu0 0.0
        %1507 = vmatpush1.msra.mxu0 0.0
        %1508 = vmatprep.subr.mxu0 0.0
        %1509 = vmatpush1.msra.mxu0 0.0
        %1510 = vmatprep.subr.mxu0 0.0
        %1511 = vmatpush1.msra.mxu0 0.0
        %1512 = vmatprep.subr.mxu0 0.0
        %1513 = vmatpush1.msra.mxu0 0.0
        %1514 = vmatprep.subr.mxu0 0.0
        %1515 = vmatpush1.msra.mxu0 0.0
        %1516 = vmatprep.subr.mxu0 0.0
        %1517 = vmatpush1.msra.mxu0 0.0
        %1518 = vmatprep.subr.mxu0 0.0
        %1519 = vmatpush1.msra.mxu0 0.0
        %1520 = vmatprep.subr.mxu0 0.0
        %1521 = vmatpush1.msra.mxu0 0.0
        %1522 = vmatprep.subr.mxu0 0.0
        %1523 = vmatpush1.msra.mxu0 0.0
        %1524 = vmatprep.subr.mxu0 0.0
        %1525 = vmatpush1.msra.mxu0 0.0
        %1526 = vmatprep.subr.mxu0 0.0
        %1527 = vmatpush1.msra.mxu0 0.0
        %1528 = vmatprep.subr.mxu0 0.0
        %1529 = vmatpush1.msra.mxu0 0.0
        %1530 = vmatprep.subr.mxu0 0.0
        %1531 = vmatpush1.msra.mxu0 0.0
        %1532 = vmatprep.subr.mxu0 0.0
        %1533 = vmatpush1.msra.mxu0 0.0
        %1534 = vmatprep.subr.mxu0 0.0
        %1535 = vmatpush1.msra.mxu0 0.0
        %1536 = vmatprep.subr.mxu0 0.0
        %1537 = vmatpush1.msra.mxu0 0.0
        %1538 = vmatprep.subr.mxu0 0.0
        %1539 = vmatpush1.msra.mxu0 0.0
        %1540 = vmatprep.subr.mxu0 0.0
        %1541 = vmatpush1.msra.mxu0 0.0
        %1542 = vmatprep.mubr.f32.mxu0 0.0
        %1543 = vmatmul.mubr.f32.gmra.mrb[0].mxu0 %v1476
        %v1544 = vpop.f32.mrb[0].mxu0
        %v1545 = vadd.f32 %v1473, %v1544
        %v1546 = vpop.f32.mrb[0].mxu0
        %1547 = vdwg.mxu0
        %v1548 = vmax.f32 %v1545, 0.0
        %v1549 = vld [vmem:[%s9] sm:$0xff]
        %v1550 = vld [vmem:[%s9 + $0x8] sm:$0xff]
        %v1551 = vld [vmem:[%s9 + $0x10] sm:$0xff]
        %v1552 = vld [vmem:[%s9 + $0x18] sm:$0xff]
        %v1553 = vld [vmem:[%s9 + $0x20] sm:$0xff]
        %v1554 = vld [vmem:[%s9 + $0x28] sm:$0xff]
        %v1555 = vld [vmem:[%s9 + $0x30] sm:$0xff]
        %v1556 = vld [vmem:[%s9 + $0x38] sm:$0xff]
        %v1557 = vld [vmem:[%s9 + $0x40] sm:$0xff]
        %v1558 = vld [vmem:[%s9 + $0x48] sm:$0xff]
        %v1559 = vld [vmem:[%s9 + $0x50] sm:$0xff]
        %v1560 = vld [vmem:[%s9 + $0x58] sm:$0xff]
        %v1561 = vld [vmem:[%s9 + $0x60] sm:$0xff]
        %v1562 = vld [vmem:[%s9 + $0x68] sm:$0xff]
        %v1563 = vld [vmem:[%s9 + $0x70] sm:$0xff]
        %v1564 = vld [vmem:[%s9 + $0x78] sm:$0xff]
        %v1565 = vld [vmem:[%s10] sm:$0x1]
        %v1567 = vlaneseq
        %v1568 = vshrl.u32 %v1567, 7
        %v1569 = vsub.s32 0, %v1568
        %v1570 = vrot.slane %v1565, %v1569
        %1572 = vmatprep.subr.mxu0 0.0
        %1573 = vmatpush1.msra.mxu0 %v1549
        %1574 = vmatprep.subr.mxu0 0.0
        %1575 = vmatpush1.msra.mxu0 %v1550
        %1576 = vmatprep.subr.mxu0 0.0
        %1577 = vmatpush1.msra.mxu0 %v1551
        %1578 = vmatprep.subr.mxu0 0.0
        %1579 = vmatpush1.msra.mxu0 %v1552
        %1580 = vmatprep.subr.mxu0 0.0
        %1581 = vmatpush1.msra.mxu0 %v1553
        %1582 = vmatprep.subr.mxu0 0.0
        %1583 = vmatpush1.msra.mxu0 %v1554
        %1584 = vmatprep.subr.mxu0 0.0
        %1585 = vmatpush1.msra.mxu0 %v1555
        %1586 = vmatprep.subr.mxu0 0.0
        %1587 = vmatpush1.msra.mxu0 %v1556
        %1588 = vmatprep.subr.mxu0 0.0
        %1589 = vmatpush1.msra.mxu0 %v1557
        %1590 = vmatprep.subr.mxu0 0.0
        %1591 = vmatpush1.msra.mxu0 %v1558
        %1592 = vmatprep.subr.mxu0 0.0
        %1593 = vmatpush1.msra.mxu0 %v1559
        %1594 = vmatprep.subr.mxu0 0.0
        %1595 = vmatpush1.msra.mxu0 %v1560
        %1596 = vmatprep.subr.mxu0 0.0
        %1597 = vmatpush1.msra.mxu0 %v1561
        %1598 = vmatprep.subr.mxu0 0.0
        %1599 = vmatpush1.msra.mxu0 %v1562
        %1600 = vmatprep.subr.mxu0 0.0
        %1601 = vmatpush1.msra.mxu0 %v1563
        %1602 = vmatprep.subr.mxu0 0.0
        %1603 = vmatpush1.msra.mxu0 %v1564
        %1604 = vmatprep.subr.mxu0 0.0
        %1605 = vmatpush1.msra.mxu0 0.0
        %1606 = vmatprep.subr.mxu0 0.0
        %1607 = vmatpush1.msra.mxu0 0.0
        %1608 = vmatprep.subr.mxu0 0.0
        %1609 = vmatpush1.msra.mxu0 0.0
        %1610 = vmatprep.subr.mxu0 0.0
        %1611 = vmatpush1.msra.mxu0 0.0
        %1612 = vmatprep.subr.mxu0 0.0
        %1613 = vmatpush1.msra.mxu0 0.0
        %1614 = vmatprep.subr.mxu0 0.0
        %1615 = vmatpush1.msra.mxu0 0.0
        %1616 = vmatprep.subr.mxu0 0.0
        %1617 = vmatpush1.msra.mxu0 0.0
        %1618 = vmatprep.subr.mxu0 0.0
        %1619 = vmatpush1.msra.mxu0 0.0
        %1620 = vmatprep.subr.mxu0 0.0
        %1621 = vmatpush1.msra.mxu0 0.0
        %1622 = vmatprep.subr.mxu0 0.0
        %1623 = vmatpush1.msra.mxu0 0.0
        %1624 = vmatprep.subr.mxu0 0.0
        %1625 = vmatpush1.msra.mxu0 0.0
        %1626 = vmatprep.subr.mxu0 0.0
        %1627 = vmatpush1.msra.mxu0 0.0
        %1628 = vmatprep.subr.mxu0 0.0
        %1629 = vmatpush1.msra.mxu0 0.0
        %1630 = vmatprep.subr.mxu0 0.0
        %1631 = vmatpush1.msra.mxu0 0.0
        %1632 = vmatprep.subr.mxu0 0.0
        %1633 = vmatpush1.msra.mxu0 0.0
        %1634 = vmatprep.subr.mxu0 0.0
        %1635 = vmatpush1.msra.mxu0 0.0
        %1636 = vmatprep.mubr.f32.mxu0 0.0
        %1637 = vmatmul.mubr.f32.gmra.mrb[0].mxu0 %v1548
        %v1638 = vpop.f32.mrb[0].mxu0
        %v1639 = vadd.f32 %v1570, %v1638
        %v1640 = vpop.f32.mrb[0].mxu0
        %1641 = vdwg.mxu0
        %v1642 = vmax.f32 %v1639, 0.0
        %v1643 = vadd.f32 %v1463, %v1642
        %v1644 = vld [vmem:[%s13] sm:$0x1]
        %v1645 = vld [vmem:[%s14] sm:$0x1]
        %v1646 = vsel %vm502, %v1643, 0.0
        %1647 = vadd.xlane.f32.xlu0 %v1646
        %v1648 = vpop.xlane.xlu0 %1647
        %v1649 = vmul.f32 %v1648, %v1439
        %v1650 = vsub.f32 %v1643, %v1649
        %v1651 = vmul.f32 %v1650, %v1650
        %v1652 = vsel %vm502, %v1651, 0.0
        %1653 = vadd.xlane.f32.xlu0 %v1652
        %v1654 = vpop.xlane.xlu0 %1653
        %v1655 = vmul.f32 %v1654, %v1439
        %v1656 = vadd.f32 %v1655, 1e-05
        %v1657 = vrsqrt.pop %v1656
        %v1658 = vmul.f32 %v1650, %v1657
        %v1660 = vlaneseq
        %v1661 = vshrl.u32 %v1660, 7
        %v1662 = vsub.s32 0, %v1661
        %v1663 = vrot.slane %v1644, %v1662
        %v1665 = vmul.f32 %v1658, %v1663
        %v1667 = vlaneseq
        %v1668 = vshrl.u32 %v1667, 7
        %v1669 = vsub.s32 0, %v1668
        %v1670 = vrot.slane %v1645, %v1669
        %v1672 = vadd.f32 %v1665, %v1670
        %1673 = vst.msk [vmem:[%s485] sm:$0xff] %vm502, %v1672
        %s1674 = sand.u32 %s357, 1
        %s1675 = scalar_lea.sflag [#allocation3], %s1674
        %s1676 = sand.u32 %s357, 1
        %s1677 = smul.addr %s1676, 8
        %s1678 = scalar_lea.vmem [#allocation2], %s1677
        // Predicated region
        $region81: #{tpu_custom_call.1} parent=79 // pred_check
          %p1679 = pneg %p367
        $region82: #{tpu_custom_call.1} parent=79 // pred_check_branch
          %1681 = sbr.rel (%p1679) target = $region84
        $region83: #{tpu_custom_call.1} parent=79 // pred_region
          %s1683 = ssub.s32 128, 128
          %1684 = vsyncadd %s1675, %s1683
          %s1685 = smul.addr %s29, 128
          %s1686 = scalar_lea.hbm %s15, %s1685
          %s1688 = sshll.u32 %s1678, 4
          %s1689 = int_to_ptr.vmem [resolvable:$true] %s1688
          %1691 = dma.vmem_to_hbm [thread:$0]  %s1689, 128, %s1686, %s1675
        $region84: #{tpu_custom_call.1} parent=79 // pred_fallthru
          _
      $region80: #{tpu_custom_call.1} parent=5 // pred_fallthru
        _
      %p1692 = scmp.le.s32.totalorder 2, %s24
      // Predicated region
      $region85: #{tpu_custom_call.1} parent=5 // pred_check
        %p1693 = pneg %p1692
      $region86: #{tpu_custom_call.1} parent=5 // pred_check_branch
        %1695 = sbr.rel (%p1693) target = $region88
      $region87: #{tpu_custom_call.1} parent=5 // pred_region
        %s1696 = ssub.s32 %s24, 2
        // Predicated region
        $region89: #{tpu_custom_call.1} parent=87 // pred_check
          %p1697 = pneg %p373
        $region90: #{tpu_custom_call.1} parent=87 // pred_check_branch
          %1699 = sbr.rel (%p1697) target = $region92
        $region91: #{tpu_custom_call.1} parent=87 // pred_region
          %s1700 = sand.u32 %s358, 1
          %s1701 = scalar_lea.sflag [#allocation3], %s1700
          %s1702 = sand.u32 %s358, 1
          %s1703 = smul.addr %s1702, 8
          %s1704 = scalar_lea.vmem [#allocation2], %s1703
          %1705 = dma.done %s1701, 128
        $region92: #{tpu_custom_call.1} parent=87 // pred_fallthru
          _
      $region88: #{tpu_custom_call.1} parent=5 // pred_fallthru
        _
    $region6: #{tpu_custom_call.1} parent=1 // loop_footer
      %s28 = sadd.s32 1, %s24
    $region7: #{tpu_custom_call.1} parent=1 // loop_footer_branch
      %23 = sbr.rel target = $region3
    $region8: #{tpu_custom_call.1} parent=1 // loop_exit
      _
    %1706 = vsyncpa [#allocation3], 1
    %s1707 = scalar_lea.sflag [#allocation3], 1
    %1708 = vsyncpa %s1707, 1

// kernel: tpu_custom_call.1
$region0: #{tpu_custom_call.1}
  #allocation0 [shape = 'u32[]', space=smem, size = 0x4, offset = 0x4, fixed_abs, tag = 'smem constant byte address 0x4 - core index']
  #allocation1 [shape = 'u32[144,128]{1,0:T(1,128)}', space=vmem, size = 0x12000, scoped, tag = 'internal scratch']
  %s0 = inlined_call_operand.vmem [shape: f32[16,32], index: 0, kind: input, shape index: {}]
  %s1 = inlined_call_operand.vmem [shape: f32[32,32], index: 1, kind: input, shape index: {}]
  %s2 = inlined_call_operand.vmem [shape: f32[1,32], index: 2, kind: input, shape index: {}]
  %s3 = inlined_call_operand.vmem [shape: f32[32,32], index: 3, kind: input, shape index: {}]
  %s4 = inlined_call_operand.vmem [shape: f32[1,32], index: 4, kind: input, shape index: {}]
  %s5 = inlined_call_operand.vmem [shape: f32[32,32], index: 5, kind: input, shape index: {}]
  %s6 = inlined_call_operand.vmem [shape: f32[1,32], index: 6, kind: input, shape index: {}]
  %s7 = inlined_call_operand.vmem [shape: f32[32,128], index: 7, kind: input, shape index: {}]
  %s8 = inlined_call_operand.vmem [shape: f32[1,128], index: 8, kind: input, shape index: {}]
  %s9 = inlined_call_operand.vmem [shape: f32[128,32], index: 9, kind: input, shape index: {}]
  %s10 = inlined_call_operand.vmem [shape: f32[1,32], index: 10, kind: input, shape index: {}]
  %s11 = inlined_call_operand.vmem [shape: f32[1,32], index: 11, kind: input, shape index: {}]
  %s12 = inlined_call_operand.vmem [shape: f32[1,32], index: 12, kind: input, shape index: {}]
  %s13 = inlined_call_operand.vmem [shape: f32[1,32], index: 13, kind: input, shape index: {}]
  %s14 = inlined_call_operand.vmem [shape: f32[1,32], index: 14, kind: input, shape index: {}]
  %s15 = inlined_call_operand.hbm [shape: f32[16,32], index: 15, kind: output, shape index: {}]
  %s16 = sld [smem:[#allocation0]]
  $region93: #{tpu_custom_call.1} parent=0
    _
  %s18 = ssub.s32 1, %s16
  %s19 = scalar_select 0, %s18, %s16
  $region1: #{tpu_custom_call.1} parent=0
    #allocation2 [shape = 'u8[8192]{0}', space=vmem, size = 0x2000, scoped, tag = 'output window, operand 0']
    #allocation3 [shape = 's32[2]{0}', space=sflag, size = 0x8, scoped, tag = 'scoped memory for tpu_custom_call.1']
    %20 = vsyncpa [#allocation3], 0
    %s21 = scalar_lea.sflag [#allocation3], 1
    %22 = vsyncpa %s21, 0
    loop: start=0, step=1, limit=4
    $region2: #{tpu_custom_call.1} parent=1 // loop_pre_header
      _
    $region3: #{tpu_custom_call.1} parent=1 // loop_header
      %s24 = sphi 0, %s28
      %p25 = scmp.ge.s32.totalorder %s24, 4
      %s34 = sphi 0, %s36
      %s37 = sphi 0, %s34
      %s38 = sphi 0, %s37
      %s54 = sphi 0, %s38
      %s58 = sphi 0, %s58
      %s60 = sphi 0, %s58
      %s61 = sphi 0, %s60
      %s75 = sphi 0, %s61
      %s79 = sphi 0, %s79
      %s81 = sphi 0, %s79
      %s82 = sphi 0, %s81
      %s96 = sphi 0, %s82
      %s100 = sphi 0, %s100
      %s102 = sphi 0, %s100
      %s103 = sphi 0, %s102
      %s117 = sphi 0, %s103
      %s121 = sphi 0, %s121
      %s123 = sphi 0, %s121
      %s124 = sphi 0, %s123
      %s138 = sphi 0, %s124
      %s142 = sphi 0, %s142
      %s144 = sphi 0, %s142
      %s145 = sphi 0, %s144
      %s159 = sphi 0, %s145
      %s163 = sphi 0, %s163
      %s165 = sphi 0, %s163
      %s166 = sphi 0, %s165
      %s180 = sphi 0, %s166
      %s184 = sphi 0, %s184
      %s186 = sphi 0, %s184
      %s187 = sphi 0, %s186
      %s201 = sphi 0, %s187
      %s205 = sphi 0, %s205
      %s207 = sphi 0, %s205
      %s208 = sphi 0, %s207
      %s222 = sphi 0, %s208
      %s226 = sphi 0, %s226
      %s228 = sphi 0, %s226
      %s229 = sphi 0, %s228
      %s243 = sphi 0, %s229
      %s247 = sphi 0, %s247
      %s249 = sphi 0, %s247
      %s250 = sphi 0, %s249
      %s264 = sphi 0, %s250
      %s268 = sphi 0, %s268
      %s270 = sphi 0, %s268
      %s271 = sphi 0, %s270
      %s285 = sphi 0, %s271
      %s289 = sphi 0, %s289
      %s291 = sphi 0, %s289
      %s292 = sphi 0, %s291
      %s306 = sphi 0, %s292
      %s310 = sphi 0, %s310
      %s312 = sphi 0, %s310
      %s313 = sphi 0, %s312
      %s327 = sphi 0, %s313
      %s331 = sphi 0, %s331
      %s333 = sphi 0, %s331
      %s334 = sphi 0, %s333
      %s348 = sphi 0, %s334
      %s354 = sphi 0, %s356
      %s357 = sphi 0, %s354
      %s358 = sphi 0, %s357
      %s374 = sphi 0, %s358
    $region4: #{tpu_custom_call.1} parent=1 // loop_header_branch
      %27 = sbr.rel (%p25) target = $region8
    $region5: #{tpu_custom_call.1} parent=1 // loop_body
      %s29 = ssub.s32 %s24, 1
      %s30 = ssub.s32 %s24, 2
      %s31 = sadd.s32 %s24, 1
      %s32 = ssub.s32 %s24, %s31
      %p33 = scmp.eq.s32.totalorder %s32, 0
      %s35 = sadd.s32 %s34, 1
      %s36 = scalar_select %p33, %s34, %s35
      %p39 = pneg %p33
      %p40 = scmp.eq.s32.totalorder %s24, 1
      %p41 = por %p39, %p40
      %p42 = scmp.ne.s32.totalorder %s34, %s37
      %p43 = scmp.eq.s32.totalorder %s24, 0
      %p44 = por %p42, %p43
      %p45 = scmp.ne.s32.totalorder %s34, %s37
      %p46 = scmp.eq.s32.totalorder %s29, 1
      %p47 = por %p45, %p46
      %p48 = scmp.ne.s32.totalorder %s37, %s38
      %p49 = scmp.eq.s32.totalorder %s29, 0
      %p50 = por %p48, %p49
      %p51 = scmp.ne.s32.totalorder %s37, %s38
      %p52 = scmp.eq.s32.totalorder %s30, 1
      %p53 = por %p51, %p52
      %p55 = scmp.ne.s32.totalorder %s38, %s54
      %p56 = scmp.eq.s32.totalorder %s30, 0
      %p57 = por %p55, %p56
      %s59 = sadd.s32 %s58, 1
      %p62 = scmp.eq.s32.totalorder %s24, 1
      %p63 = scmp.ne.s32.totalorder %s58, %s60
      %p64 = scmp.eq.s32.totalorder %s24, 0
      %p65 = por %p63, %p64
      %p66 = scmp.ne.s32.totalorder %s58, %s60
      %p67 = scmp.eq.s32.totalorder %s29, 1
      %p68 = por %p66, %p67
      %p69 = scmp.ne.s32.totalorder %s60, %s61
      %p70 = scmp.eq.s32.totalorder %s29, 0
      %p71 = por %p69, %p70
      %p72 = scmp.ne.s32.totalorder %s60, %s61
      %p73 = scmp.eq.s32.totalorder %s30, 1
      %p74 = por %p72, %p73
      %p76 = scmp.ne.s32.totalorder %s61, %s75
      %p77 = scmp.eq.s32.totalorder %s30, 0
      %p78 = por %p76, %p77
      %s80 = sadd.s32 %s79, 1
      %p83 = scmp.eq.s32.totalorder %s24, 1
      %p84 = scmp.ne.s32.totalorder %s79, %s81
      %p85 = scmp.eq.s32.totalorder %s24, 0
      %p86 = por %p84, %p85
      %p87 = scmp.ne.s32.totalorder %s79, %s81
      %p88 = scmp.eq.s32.totalorder %s29, 1
      %p89 = por %p87, %p88
      %p90 = scmp.ne.s32.totalorder %s81, %s82
      %p91 = scmp.eq.s32.totalorder %s29, 0
      %p92 = por %p90, %p91
      %p93 = scmp.ne.s32.totalorder %s81, %s82
      %p94 = scmp.eq.s32.totalorder %s30, 1
      %p95 = por %p93, %p94
      %p97 = scmp.ne.s32.totalorder %s82, %s96
      %p98 = scmp.eq.s32.totalorder %s30, 0
      %p99 = por %p97, %p98
      %s101 = sadd.s32 %s100, 1
      %p104 = scmp.eq.s32.totalorder %s24, 1
      %p105 = scmp.ne.s32.totalorder %s100, %s102
      %p106 = scmp.eq.s32.totalorder %s24, 0
      %p107 = por %p105, %p106
      %p108 = scmp.ne.s32.totalorder %s100, %s102
      %p109 = scmp.eq.s32.totalorder %s29, 1
      %p110 = por %p108, %p109
      %p111 = scmp.ne.s32.totalorder %s102, %s103
      %p112 = scmp.eq.s32.totalorder %s29, 0
      %p113 = por %p111, %p112
      %p114 = scmp.ne.s32.totalorder %s102, %s103
      %p115 = scmp.eq.s32.totalorder %s30, 1
      %p116 = por %p114, %p115
      %p118 = scmp.ne.s32.totalorder %s103, %s117
      %p119 = scmp.eq.s32.totalorder %s30, 0
      %p120 = por %p118, %p119
      %s122 = sadd.s32 %s121, 1
      %p125 = scmp.eq.s32.totalorder %s24, 1
      %p126 = scmp.ne.s32.totalorder %s121, %s123
      %p127 = scmp.eq.s32.totalorder %s24, 0
      %p128 = por %p126, %p127
      %p129 = scmp.ne.s32.totalorder %s121, %s123
      %p130 = scmp.eq.s32.totalorder %s29, 1
      %p131 = por %p129, %p130
      %p132 = scmp.ne.s32.totalorder %s123, %s124
      %p133 = scmp.eq.s32.totalorder %s29, 0
      %p134 = por %p132, %p133
      %p135 = scmp.ne.s32.totalorder %s123, %s124
      %p136 = scmp.eq.s32.totalorder %s30, 1
      %p137 = por %p135, %p136
      %p139 = scmp.ne.s32.totalorder %s124, %s138
      %p140 = scmp.eq.s32.totalorder %s30, 0
      %p141 = por %p139, %p140
      %s143 = sadd.s32 %s142, 1
      %p146 = scmp.eq.s32.totalorder %s24, 1
      %p147 = scmp.ne.s32.totalorder %s142, %s144
      %p148 = scmp.eq.s32.totalorder %s24, 0
      %p149 = por %p147, %p148
      %p150 = scmp.ne.s32.totalorder %s142, %s144
      %p151 = scmp.eq.s32.totalorder %s29, 1
      %p152 = por %p150, %p151
      %p153 = scmp.ne.s32.totalorder %s144, %s145
      %p154 = scmp.eq.s32.totalorder %s29, 0
      %p155 = por %p153, %p154
      %p156 = scmp.ne.s32.totalorder %s144, %s145
      %p157 = scmp.eq.s32.totalorder %s30, 1
      %p158 = por %p156, %p157
      %p160 = scmp.ne.s32.totalorder %s145, %s159
      %p161 = scmp.eq.s32.totalorder %s30, 0
      %p162 = por %p160, %p161
      %s164 = sadd.s32 %s163, 1
      %p167 = scmp.eq.s32.totalorder %s24, 1
      %p168 = scmp.ne.s32.totalorder %s163, %s165
      %p169 = scmp.eq.s32.totalorder %s24, 0
      %p170 = por %p168, %p169
      %p171 = scmp.ne.s32.totalorder %s163, %s165
      %p172 = scmp.eq.s32.totalorder %s29, 1
      %p173 = por %p171, %p172
      %p174 = scmp.ne.s32.totalorder %s165, %s166
      %p175 = scmp.eq.s32.totalorder %s29, 0
      %p176 = por %p174, %p175
      %p177 = scmp.ne.s32.totalorder %s165, %s166
      %p178 = scmp.eq.s32.totalorder %s30, 1
      %p179 = por %p177, %p178
      %p181 = scmp.ne.s32.totalorder %s166, %s180
      %p182 = scmp.eq.s32.totalorder %s30, 0
      %p183 = por %p181, %p182
      %s185 = sadd.s32 %s184, 1
      %p188 = scmp.eq.s32.totalorder %s24, 1
      %p189 = scmp.ne.s32.totalorder %s184, %s186
      %p190 = scmp.eq.s32.totalorder %s24, 0
      %p191 = por %p189, %p190
      %p192 = scmp.ne.s32.totalorder %s184, %s186
      %p193 = scmp.eq.s32.totalorder %s29, 1
      %p194 = por %p192, %p193
      %p195 = scmp.ne.s32.totalorder %s186, %s187
      %p196 = scmp.eq.s32.totalorder %s29, 0
      %p197 = por %p195, %p196
      %p198 = scmp.ne.s32.totalorder %s186, %s187
      %p199 = scmp.eq.s32.totalorder %s30, 1
      %p200 = por %p198, %p199
      %p202 = scmp.ne.s32.totalorder %s187, %s201
      %p203 = scmp.eq.s32.totalorder %s30, 0
      %p204 = por %p202, %p203
      %s206 = sadd.s32 %s205, 1
      %p209 = scmp.eq.s32.totalorder %s24, 1
      %p210 = scmp.ne.s32.totalorder %s205, %s207
      %p211 = scmp.eq.s32.totalorder %s24, 0
      %p212 = por %p210, %p211
      %p213 = scmp.ne.s32.totalorder %s205, %s207
      %p214 = scmp.eq.s32.totalorder %s29, 1
      %p215 = por %p213, %p214
      %p216 = scmp.ne.s32.totalorder %s207, %s208
      %p217 = scmp.eq.s32.totalorder %s29, 0
      %p218 = por %p216, %p217
      %p219 = scmp.ne.s32.totalorder %s207, %s208
      %p220 = scmp.eq.s32.totalorder %s30, 1
      %p221 = por %p219, %p220
      %p223 = scmp.ne.s32.totalorder %s208, %s222
      %p224 = scmp.eq.s32.totalorder %s30, 0
      %p225 = por %p223, %p224
      %s227 = sadd.s32 %s226, 1
      %p230 = scmp.eq.s32.totalorder %s24, 1
      %p231 = scmp.ne.s32.totalorder %s226, %s228
      %p232 = scmp.eq.s32.totalorder %s24, 0
      %p233 = por %p231, %p232
      %p234 = scmp.ne.s32.totalorder %s226, %s228
      %p235 = scmp.eq.s32.totalorder %s29, 1
      %p236 = por %p234, %p235
      %p237 = scmp.ne.s32.totalorder %s228, %s229
      %p238 = scmp.eq.s32.totalorder %s29, 0
      %p239 = por %p237, %p238
      %p240 = scmp.ne.s32.totalorder %s228, %s229
      %p241 = scmp.eq.s32.totalorder %s30, 1
      %p242 = por %p240, %p241
      %p244 = scmp.ne.s32.totalorder %s229, %s243
      %p245 = scmp.eq.s32.totalorder %s30, 0
      %p246 = por %p244, %p245
      %s248 = sadd.s32 %s247, 1
      %p251 = scmp.eq.s32.totalorder %s24, 1
      %p252 = scmp.ne.s32.totalorder %s247, %s249
      %p253 = scmp.eq.s32.totalorder %s24, 0
      %p254 = por %p252, %p253
      %p255 = scmp.ne.s32.totalorder %s247, %s249
      %p256 = scmp.eq.s32.totalorder %s29, 1
      %p257 = por %p255, %p256
      %p258 = scmp.ne.s32.totalorder %s249, %s250
      %p259 = scmp.eq.s32.totalorder %s29, 0
      %p260 = por %p258, %p259
      %p261 = scmp.ne.s32.totalorder %s249, %s250
      %p262 = scmp.eq.s32.totalorder %s30, 1
      %p263 = por %p261, %p262
      %p265 = scmp.ne.s32.totalorder %s250, %s264
      %p266 = scmp.eq.s32.totalorder %s30, 0
      %p267 = por %p265, %p266
      %s269 = sadd.s32 %s268, 1
      %p272 = scmp.eq.s32.totalorder %s24, 1
      %p273 = scmp.ne.s32.totalorder %s268, %s270
      %p274 = scmp.eq.s32.totalorder %s24, 0
      %p275 = por %p273, %p274
      %p276 = scmp.ne.s32.totalorder %s268, %s270
      %p277 = scmp.eq.s32.totalorder %s29, 1
      %p278 = por %p276, %p277
      %p279 = scmp.ne.s32.totalorder %s270, %s271
      %p280 = scmp.eq.s32.totalorder %s29, 0
      %p281 = por %p279, %p280
      %p282 = scmp.ne.s32.totalorder %s270, %s271
      %p283 = scmp.eq.s32.totalorder %s30, 1
      %p284 = por %p282, %p283
      %p286 = scmp.ne.s32.totalorder %s271, %s285
      %p287 = scmp.eq.s32.totalorder %s30, 0
      %p288 = por %p286, %p287
      %s290 = sadd.s32 %s289, 1
      %p293 = scmp.eq.s32.totalorder %s24, 1
      %p294 = scmp.ne.s32.totalorder %s289, %s291
      %p295 = scmp.eq.s32.totalorder %s24, 0
      %p296 = por %p294, %p295
      %p297 = scmp.ne.s32.totalorder %s289, %s291
      %p298 = scmp.eq.s32.totalorder %s29, 1
      %p299 = por %p297, %p298
      %p300 = scmp.ne.s32.totalorder %s291, %s292
      %p301 = scmp.eq.s32.totalorder %s29, 0
      %p302 = por %p300, %p301
      %p303 = scmp.ne.s32.totalorder %s291, %s292
      %p304 = scmp.eq.s32.totalorder %s30, 1
      %p305 = por %p303, %p304
      %p307 = scmp.ne.s32.totalorder %s292, %s306
      %p308 = scmp.eq.s32.totalorder %s30, 0
      %p309 = por %p307, %p308
      %s311 = sadd.s32 %s310, 1
      %p314 = scmp.eq.s32.totalorder %s24, 1
      %p315 = scmp.ne.s32.totalorder %s310, %s312
      %p316 = scmp.eq.s32.totalorder %s24, 0
      %p317 = por %p315, %p316
      %p318 = scmp.ne.s32.totalorder %s310, %s312
      %p319 = scmp.eq.s32.totalorder %s29, 1
      %p320 = por %p318, %p319
      %p321 = scmp.ne.s32.totalorder %s312, %s313
      %p322 = scmp.eq.s32.totalorder %s29, 0
      %p323 = por %p321, %p322
      %p324 = scmp.ne.s32.totalorder %s312, %s313
      %p325 = scmp.eq.s32.totalorder %s30, 1
      %p326 = por %p324, %p325
      %p328 = scmp.ne.s32.totalorder %s313, %s327
      %p329 = scmp.eq.s32.totalorder %s30, 0
      %p330 = por %p328, %p329
      %s332 = sadd.s32 %s331, 1
      %p335 = scmp.eq.s32.totalorder %s24, 1
      %p336 = scmp.ne.s32.totalorder %s331, %s333
      %p337 = scmp.eq.s32.totalorder %s24, 0
      %p338 = por %p336, %p337
      %p339 = scmp.ne.s32.totalorder %s331, %s333
      %p340 = scmp.eq.s32.totalorder %s29, 1
      %p341 = por %p339, %p340
      %p342 = scmp.ne.s32.totalorder %s333, %s334
      %p343 = scmp.eq.s32.totalorder %s29, 0
      %p344 = por %p342, %p343
      %p345 = scmp.ne.s32.totalorder %s333, %s334
      %p346 = scmp.eq.s32.totalorder %s30, 1
      %p347 = por %p345, %p346
      %p349 = scmp.ne.s32.totalorder %s334, %s348
      %p350 = scmp.eq.s32.totalorder %s30, 0
      %p351 = por %p349, %p350
      %s352 = ssub.s32 %s24, %s31
      %p353 = scmp.eq.s32.totalorder %s352, 0
      %s355 = sadd.s32 %s354, 1
      %s356 = scalar_select %p353, %s354, %s355
      %p359 = pneg %p353
      %p360 = scmp.eq.s32.totalorder %s24, 1
      %p361 = por %p359, %p360
      %p362 = scmp.ne.s32.totalorder %s354, %s357
      %p363 = scmp.eq.s32.totalorder %s24, 0
      %p364 = por %p362, %p363
      %p365 = scmp.ne.s32.totalorder %s354, %s357
      %p366 = scmp.eq.s32.totalorder %s29, 1
      %p367 = por %p365, %p366
      %p368 = scmp.ne.s32.totalorder %s357, %s358
      %p369 = scmp.eq.s32.totalorder %s29, 0
      %p370 = por %p368, %p369
      %p371 = scmp.ne.s32.totalorder %s357, %s358
      %p372 = scmp.eq.s32.totalorder %s30, 1
      %p373 = por %p371, %p372
      %p375 = scmp.ne.s32.totalorder %s358, %s374
      %p376 = scmp.eq.s32.totalorder %s30, 0
      %p377 = por %p375, %p376
      %p378 = scmp.le.s32.totalorder 1, %s24
      %p379 = scmp.lt.s32.totalorder %s24, 3
      %p380 = pnand %p378, %p379
      %p381 = pneg %p380
      // Predicated region
      $region9: #{tpu_custom_call.1} parent=5 // pred_check
        _
      $region10: #{tpu_custom_call.1} parent=5 // pred_check_branch
        %383 = sbr.rel (%p380) target = $region12
      $region11: #{tpu_custom_call.1} parent=5 // pred_region
        %s384 = ssub.s32 %s24, 1
        // Predicated region
        $region13: #{tpu_custom_call.1} parent=11 // pred_check
          %p385 = pneg %p71
        $region14: #{tpu_custom_call.1} parent=11 // pred_check_branch
          %387 = sbr.rel (%p385) target = $region16
        $region15: #{tpu_custom_call.1} parent=11 // pred_region
          _
        $region16: #{tpu_custom_call.1} parent=11 // pred_fallthru
          _
        // Predicated region
        $region17: #{tpu_custom_call.1} parent=11 // pred_check
          %p388 = pneg %p92
        $region18: #{tpu_custom_call.1} parent=11 // pred_check_branch
          %390 = sbr.rel (%p388) target = $region20
        $region19: #{tpu_custom_call.1} parent=11 // pred_region
          _
        $region20: #{tpu_custom_call.1} parent=11 // pred_fallthru
          _
        // Predicated region
        $region21: #{tpu_custom_call.1} parent=11 // pred_check
          %p391 = pneg %p113
        $region22: #{tpu_custom_call.1} parent=11 // pred_check_branch
          %393 = sbr.rel (%p391) target = $region24
        $region23: #{tpu_custom_call.1} parent=11 // pred_region
          _
        $region24: #{tpu_custom_call.1} parent=11 // pred_fallthru
          _
        // Predicated region
        $region25: #{tpu_custom_call.1} parent=11 // pred_check
          %p394 = pneg %p134
        $region26: #{tpu_custom_call.1} parent=11 // pred_check_branch
          %396 = sbr.rel (%p394) target = $region28
        $region27: #{tpu_custom_call.1} parent=11 // pred_region
          _
        $region28: #{tpu_custom_call.1} parent=11 // pred_fallthru
          _
        // Predicated region
        $region29: #{tpu_custom_call.1} parent=11 // pred_check
          %p397 = pneg %p155
        $region30: #{tpu_custom_call.1} parent=11 // pred_check_branch
          %399 = sbr.rel (%p397) target = $region32
        $region31: #{tpu_custom_call.1} parent=11 // pred_region
          _
        $region32: #{tpu_custom_call.1} parent=11 // pred_fallthru
          _
        // Predicated region
        $region33: #{tpu_custom_call.1} parent=11 // pred_check
          %p400 = pneg %p176
        $region34: #{tpu_custom_call.1} parent=11 // pred_check_branch
          %402 = sbr.rel (%p400) target = $region36
        $region35: #{tpu_custom_call.1} parent=11 // pred_region
          _
        $region36: #{tpu_custom_call.1} parent=11 // pred_fallthru
          _
        // Predicated region
        $region37: #{tpu_custom_call.1} parent=11 // pred_check
          %p403 = pneg %p197
        $region38: #{tpu_custom_call.1} parent=11 // pred_check_branch
          %405 = sbr.rel (%p403) target = $region40
        $region39: #{tpu_custom_call.1} parent=11 // pred_region
          _
        $region40: #{tpu_custom_call.1} parent=11 // pred_fallthru
          _
        // Predicated region
        $region41: #{tpu_custom_call.1} parent=11 // pred_check
          %p406 = pneg %p218
        $region42: #{tpu_custom_call.1} parent=11 // pred_check_branch
          %408 = sbr.rel (%p406) target = $region44
        $region43: #{tpu_custom_call.1} parent=11 // pred_region
          _
        $region44: #{tpu_custom_call.1} parent=11 // pred_fallthru
          _
        // Predicated region
        $region45: #{tpu_custom_call.1} parent=11 // pred_check
          %p409 = pneg %p239
        $region46: #{tpu_custom_call.1} parent=11 // pred_check_branch
          %411 = sbr.rel (%p409) target = $region48
        $region47: #{tpu_custom_call.1} parent=11 // pred_region
          _
        $region48: #{tpu_custom_call.1} parent=11 // pred_fallthru
          _
        // Predicated region
        $region49: #{tpu_custom_call.1} parent=11 // pred_check
          %p412 = pneg %p260
        $region50: #{tpu_custom_call.1} parent=11 // pred_check_branch
          %414 = sbr.rel (%p412) target = $region52
        $region51: #{tpu_custom_call.1} parent=11 // pred_region
          _
        $region52: #{tpu_custom_call.1} parent=11 // pred_fallthru
          _
        // Predicated region
        $region53: #{tpu_custom_call.1} parent=11 // pred_check
          %p415 = pneg %p281
        $region54: #{tpu_custom_call.1} parent=11 // pred_check_branch
          %417 = sbr.rel (%p415) target = $region56
        $region55: #{tpu_custom_call.1} parent=11 // pred_region
          _
        $region56: #{tpu_custom_call.1} parent=11 // pred_fallthru
          _
        // Predicated region
        $region57: #{tpu_custom_call.1} parent=11 // pred_check
          %p418 = pneg %p302
        $region58: #{tpu_custom_call.1} parent=11 // pred_check_branch
          %420 = sbr.rel (%p418) target = $region60
        $region59: #{tpu_custom_call.1} parent=11 // pred_region
          _
        $region60: #{tpu_custom_call.1} parent=11 // pred_fallthru
          _
        // Predicated region
        $region61: #{tpu_custom_call.1} parent=11 // pred_check
          %p421 = pneg %p323
        $region62: #{tpu_custom_call.1} parent=11 // pred_check_branch
          %423 = sbr.rel (%p421) target = $region64
        $region63: #{tpu_custom_call.1} parent=11 // pred_region
          _
        $region64: #{tpu_custom_call.1} parent=11 // pred_fallthru
          _
        // Predicated region
        $region65: #{tpu_custom_call.1} parent=11 // pred_check
          %p424 = pneg %p344
        $region66: #{tpu_custom_call.1} parent=11 // pred_check_branch
          %426 = sbr.rel (%p424) target = $region68
        $region67: #{tpu_custom_call.1} parent=11 // pred_region
          _
        $region68: #{tpu_custom_call.1} parent=11 // pred_fallthru
          _
      $region12: #{tpu_custom_call.1} parent=5 // pred_fallthru
        _
      %p427 = scmp.lt.s32.totalorder %s24, 2
      // Predicated region
      $region69: #{tpu_custom_call.1} parent=5 // pred_check
        %p428 = pneg %p427
      $region70: #{tpu_custom_call.1} parent=5 // pred_check_branch
        %430 = sbr.rel (%p428) target = $region72
      $region71: #{tpu_custom_call.1} parent=5 // pred_region
        // Predicated region
        $region73: #{tpu_custom_call.1} parent=71 // pred_check
          %p431 = pneg %p44
        $region74: #{tpu_custom_call.1} parent=71 // pred_check_branch
          %433 = sbr.rel (%p431) target = $region76
        $region75: #{tpu_custom_call.1} parent=71 // pred_region
          %p434 = scmp.lt.s32.totalorder %s24, 1
          %s435 = scalar_select %p434, %s24, 1
          %s436 = smul.addr %s435, 8
          %s437 = scalar_lea.vmem %s0, %s436
        $region76: #{tpu_custom_call.1} parent=71 // pred_fallthru
          _
      $region72: #{tpu_custom_call.1} parent=5 // pred_fallthru
        _
      %p438 = scmp.le.s32.totalorder 1, %s24
      %p439 = scmp.lt.s32.totalorder %s24, 3
      %p440 = pnand %p438, %p439
      %p441 = pneg %p440
      // Predicated region
      $region77: #{tpu_custom_call.1} parent=5 // pred_check
        _
      $region78: #{tpu_custom_call.1} parent=5 // pred_check_branch
        %443 = sbr.rel (%p440) target = $region80
      $region79: #{tpu_custom_call.1} parent=5 // pred_region
        %s444 = ssub.s32 %s24, 1
        %p445 = scmp.lt.s32.totalorder %s29, 1
        %s446 = scalar_select %p445, %s29, 1
        %s447 = smul.addr %s446, 8
        %s448 = scalar_lea.vmem %s0, %s447
        %p449 = pneg %p50
        %p450 = pneg %p47
        %p451 = pneg %p71
        %p452 = pneg %p68
        %p453 = pneg %p92
        %p454 = pneg %p89
        %p455 = pneg %p113
        %p456 = pneg %p110
        %p457 = pneg %p134
        %p458 = pneg %p131
        %p459 = pneg %p155
        %p460 = pneg %p152
        %p461 = pneg %p176
        %p462 = pneg %p173
        %p463 = pneg %p197
        %p464 = pneg %p194
        %p465 = pneg %p218
        %p466 = pneg %p215
        %p467 = pneg %p239
        %p468 = pneg %p236
        %p469 = pneg %p260
        %p470 = pneg %p257
        %p471 = pneg %p281
        %p472 = pneg %p278
        %p473 = pneg %p302
        %p474 = pneg %p299
        %p475 = pneg %p323
        %p476 = pneg %p320
        %p477 = pneg %p344
        %p478 = pneg %p341
        %p479 = pneg %p370
        %p480 = pneg %p367
        %s481 = sand.u32 %s357, 1
        %s482 = scalar_lea.sflag [#allocation3], %s481
        %s483 = sand.u32 %s357, 1
        %s484 = smul.addr %s483, 8
        %s485 = scalar_lea.vmem [#allocation2], %s484
        %p486 = scmp.lt.s32.totalorder %s29, 1
        %s487 = scalar_select %p486, %s29, 1
        %s488 = smul.addr %s487, 8
        %s489 = scalar_lea.vmem %s0, %s488
        %v490 = vld [vmem:[%s489] sm:$0xff]
        %v491 = vld [vmem:[%s1] sm:$0xff]
        %v492 = vld [vmem:[%s1 + $0x8] sm:$0xff]
        %v493 = vld [vmem:[%s1 + $0x10] sm:$0xff]
        %v494 = vld [vmem:[%s1 + $0x18] sm:$0xff]
        %v495 = vld [vmem:[%s2] sm:$0x1]
        %v497 = vlaneseq
        %v498 = vshrl.u32 %v497, 7
        %v499 = vsub.s32 0, %v498
        %v500 = vrot.slane %v495, %v499
        %vm502 = vcmask 261120
        %v504 = vsel %vm502, %v490, 0
        %506 = vmatprep.subr.mxu0 0.0
        %507 = vmatpush1.msra.mxu0 %v491
        %508 = vmatprep.subr.mxu0 0.0
        %509 = vmatpush1.msra.mxu0 %v492
        %510 = vmatprep.subr.mxu0 0.0
        %511 = vmatpush1.msra.mxu0 %v493
        %512 = vmatprep.subr.mxu0 0.0
        %513 = vmatpush1.msra.mxu0 %v494
        %514 = vmatprep.subr.mxu0 0.0
        %515 = vmatpush1.msra.mxu0 0.0
        %516 = vmatprep.subr.mxu0 0.0
        %517 = vmatpush1.msra.mxu0 0.0
        %518 = vmatprep.subr.mxu0 0.0
        %519 = vmatpush1.msra.mxu0 0.0
        %520 = vmatprep.subr.mxu0 0.0
        %521 = vmatpush1.msra.mxu0 0.0
        %522 = vmatprep.subr.mxu0 0.0
        %523 = vmatpush1.msra.mxu0 0.0
        %524 = vmatprep.subr.mxu0 0.0
        %525 = vmatpush1.msra.mxu0 0.0
        %526 = vmatprep.subr.mxu0 0.0
        %527 = vmatpush1.msra.mxu0 0.0
        %528 = vmatprep.subr.mxu0 0.0
        %529 = vmatpush1.msra.mxu0 0.0
        %530 = vmatprep.subr.mxu0 0.0
        %531 = vmatpush1.msra.mxu0 0.0
        %532 = vmatprep.subr.mxu0 0.0
        %533 = vmatpush1.msra.mxu0 0.0
        %534 = vmatprep.subr.mxu0 0.0
        %535 = vmatpush1.msra.mxu0 0.0
        %536 = vmatprep.subr.mxu0 0.0
        %537 = vmatpush1.msra.mxu0 0.0
        %538 = vmatprep.subr.mxu0 0.0
        %539 = vmatpush1.msra.mxu0 0.0
        %540 = vmatprep.subr.mxu0 0.0
        %541 = vmatpush1.msra.mxu0 0.0
        %542 = vmatprep.subr.mxu0 0.0
        %543 = vmatpush1.msra.mxu0 0.0
        %544 = vmatprep.subr.mxu0 0.0
        %545 = vmatpush1.msra.mxu0 0.0
        %546 = vmatprep.subr.mxu0 0.0
        %547 = vmatpush1.msra.mxu0 0.0
        %548 = vmatprep.subr.mxu0 0.0
        %549 = vmatpush1.msra.mxu0 0.0
        %550 = vmatprep.subr.mxu0 0.0
        %551 = vmatpush1.msra.mxu0 0.0
        %552 = vmatprep.subr.mxu0 0.0
        %553 = vmatpush1.msra.mxu0 0.0
        %554 = vmatprep.subr.mxu0 0.0
        %555 = vmatpush1.msra.mxu0 0.0
        %556 = vmatprep.subr.mxu0 0.0
        %557 = vmatpush1.msra.mxu0 0.0
        %558 = vmatprep.subr.mxu0 0.0
        %559 = vmatpush1.msra.mxu0 0.0
        %560 = vmatprep.subr.mxu0 0.0
        %561 = vmatpush1.msra.mxu0 0.0
        %562 = vmatprep.subr.mxu0 0.0
        %563 = vmatpush1.msra.mxu0 0.0
        %564 = vmatprep.subr.mxu0 0.0
        %565 = vmatpush1.msra.mxu0 0.0
        %566 = vmatprep.subr.mxu0 0.0
        %567 = vmatpush1.msra.mxu0 0.0
        %568 = vmatprep.subr.mxu0 0.0
        %569 = vmatpush1.msra.mxu0 0.0
        %570 = vmatprep.mubr.f32.mxu0 0.0
        %571 = vmatmul.mubr.f32.gmra.mrb[0].mxu0 %v504
        %v572 = vpop.f32.mrb[0].mxu0
        %v573 = vadd.f32 %v500, %v572
        %v574 = vpop.f32.mrb[0].mxu0
        %575 = vdwg.mxu0
        %v576 = vld [vmem:[%s3] sm:$0xff]
        %v577 = vld [vmem:[%s3 + $0x8] sm:$0xff]
        %v578 = vld [vmem:[%s3 + $0x10] sm:$0xff]
        %v579 = vld [vmem:[%s3 + $0x18] sm:$0xff]
        %v580 = vld [vmem:[%s4] sm:$0x1]
        %v582 = vlaneseq
        %v583 = vshrl.u32 %v582, 7
        %v584 = vsub.s32 0, %v583
        %v585 = vrot.slane %v580, %v584
        %587 = vmatprep.subr.mxu0 0.0
        %588 = vmatpush1.msra.mxu0 %v576
        %589 = vmatprep.subr.mxu0 0.0
        %590 = vmatpush1.msra.mxu0 %v577
        %591 = vmatprep.subr.mxu0 0.0
        %592 = vmatpush1.msra.mxu0 %v578
        %593 = vmatprep.subr.mxu0 0.0
        %594 = vmatpush1.msra.mxu0 %v579
        %595 = vmatprep.subr.mxu0 0.0
        %596 = vmatpush1.msra.mxu0 0.0
        %597 = vmatprep.subr.mxu0 0.0
        %598 = vmatpush1.msra.mxu0 0.0
        %599 = vmatprep.subr.mxu0 0.0
        %600 = vmatpush1.msra.mxu0 0.0
        %601 = vmatprep.subr.mxu0 0.0
        %602 = vmatpush1.msra.mxu0 0.0
        %603 = vmatprep.subr.mxu0 0.0
        %604 = vmatpush1.msra.mxu0 0.0
        %605 = vmatprep.subr.mxu0 0.0
        %606 = vmatpush1.msra.mxu0 0.0
        %607 = vmatprep.subr.mxu0 0.0
        %608 = vmatpush1.msra.mxu0 0.0
        %609 = vmatprep.subr.mxu0 0.0
        %610 = vmatpush1.msra.mxu0 0.0
        %611 = vmatprep.subr.mxu0 0.0
        %612 = vmatpush1.msra.mxu0 0.0
        %613 = vmatprep.subr.mxu0 0.0
        %614 = vmatpush1.msra.mxu0 0.0
        %615 = vmatprep.subr.mxu0 0.0
        %616 = vmatpush1.msra.mxu0 0.0
        %617 = vmatprep.subr.mxu0 0.0
        %618 = vmatpush1.msra.mxu0 0.0
        %619 = vmatprep.subr.mxu0 0.0
        %620 = vmatpush1.msra.mxu0 0.0
        %621 = vmatprep.subr.mxu0 0.0
        %622 = vmatpush1.msra.mxu0 0.0
        %623 = vmatprep.subr.mxu0 0.0
        %624 = vmatpush1.msra.mxu0 0.0
        %625 = vmatprep.subr.mxu0 0.0
        %626 = vmatpush1.msra.mxu0 0.0
        %627 = vmatprep.subr.mxu0 0.0
        %628 = vmatpush1.msra.mxu0 0.0
        %629 = vmatprep.subr.mxu0 0.0
        %630 = vmatpush1.msra.mxu0 0.0
        %631 = vmatprep.subr.mxu0 0.0
        %632 = vmatpush1.msra.mxu0 0.0
        %633 = vmatprep.subr.mxu0 0.0
        %634 = vmatpush1.msra.mxu0 0.0
        %635 = vmatprep.subr.mxu0 0.0
        %636 = vmatpush1.msra.mxu0 0.0
        %637 = vmatprep.subr.mxu0 0.0
        %638 = vmatpush1.msra.mxu0 0.0
        %639 = vmatprep.subr.mxu0 0.0
        %640 = vmatpush1.msra.mxu0 0.0
        %641 = vmatprep.subr.mxu0 0.0
        %642 = vmatpush1.msra.mxu0 0.0
        %643 = vmatprep.subr.mxu0 0.0
        %644 = vmatpush1.msra.mxu0 0.0
        %645 = vmatprep.subr.mxu0 0.0
        %646 = vmatpush1.msra.mxu0 0.0
        %647 = vmatprep.subr.mxu0 0.0
        %648 = vmatpush1.msra.mxu0 0.0
        %649 = vmatprep.subr.mxu0 0.0
        %650 = vmatpush1.msra.mxu0 0.0
        %651 = vmatprep.mubr.f32.mxu0 0.0
        %652 = vmatmul.mubr.f32.gmra.mrb[0].mxu0 %v504
        %v653 = vpop.f32.mrb[0].mxu0
        %v654 = vadd.f32 %v585, %v653
        %v655 = vpop.f32.mrb[0].mxu0
        %656 = vdwg.mxu0
        %v657 = vld [vmem:[%s5] sm:$0xff]
        %v658 = vld [vmem:[%s5 + $0x8] sm:$0xff]
        %v659 = vld [vmem:[%s5 + $0x10] sm:$0xff]
        %v660 = vld [vmem:[%s5 + $0x18] sm:$0xff]
        %v661 = vld [vmem:[%s6] sm:$0x1]
        %v663 = vlaneseq
        %v664 = vshrl.u32 %v663, 7
        %v665 = vsub.s32 0, %v664
        %v666 = vrot.slane %v661, %v665
        %668 = vmatprep.subr.mxu0 0.0
        %669 = vmatpush1.msra.mxu0 %v657
        %670 = vmatprep.subr.mxu0 0.0
        %671 = vmatpush1.msra.mxu0 %v658
        %672 = vmatprep.subr.mxu0 0.0
        %673 = vmatpush1.msra.mxu0 %v659
        %674 = vmatprep.subr.mxu0 0.0
        %675 = vmatpush1.msra.mxu0 %v660
        %676 = vmatprep.subr.mxu0 0.0
        %677 = vmatpush1.msra.mxu0 0.0
        %678 = vmatprep.subr.mxu0 0.0
        %679 = vmatpush1.msra.mxu0 0.0
        %680 = vmatprep.subr.mxu0 0.0
        %681 = vmatpush1.msra.mxu0 0.0
        %682 = vmatprep.subr.mxu0 0.0
        %683 = vmatpush1.msra.mxu0 0.0
        %684 = vmatprep.subr.mxu0 0.0
        %685 = vmatpush1.msra.mxu0 0.0
        %686 = vmatprep.subr.mxu0 0.0
        %687 = vmatpush1.msra.mxu0 0.0
        %688 = vmatprep.subr.mxu0 0.0
        %689 = vmatpush1.msra.mxu0 0.0
        %690 = vmatprep.subr.mxu0 0.0
        %691 = vmatpush1.msra.mxu0 0.0
        %692 = vmatprep.subr.mxu0 0.0
        %693 = vmatpush1.msra.mxu0 0.0
        %694 = vmatprep.subr.mxu0 0.0
        %695 = vmatpush1.msra.mxu0 0.0
        %696 = vmatprep.subr.mxu0 0.0
        %697 = vmatpush1.msra.mxu0 0.0
        %698 = vmatprep.subr.mxu0 0.0
        %699 = vmatpush1.msra.mxu0 0.0
        %700 = vmatprep.subr.mxu0 0.0
        %701 = vmatpush1.msra.mxu0 0.0
        %702 = vmatprep.subr.mxu0 0.0
        %703 = vmatpush1.msra.mxu0 0.0
        %704 = vmatprep.subr.mxu0 0.0
        %705 = vmatpush1.msra.mxu0 0.0
        %706 = vmatprep.subr.mxu0 0.0
        %707 = vmatpush1.msra.mxu0 0.0
        %708 = vmatprep.subr.mxu0 0.0
        %709 = vmatpush1.msra.mxu0 0.0
        %710 = vmatprep.subr.mxu0 0.0
        %711 = vmatpush1.msra.mxu0 0.0
        %712 = vmatprep.subr.mxu0 0.0
        %713 = vmatpush1.msra.mxu0 0.0
        %714 = vmatprep.subr.mxu0 0.0
        %715 = vmatpush1.msra.mxu0 0.0
        %716 = vmatprep.subr.mxu0 0.0
        %717 = vmatpush1.msra.mxu0 0.0
        %718 = vmatprep.subr.mxu0 0.0
        %719 = vmatpush1.msra.mxu0 0.0
        %720 = vmatprep.subr.mxu0 0.0
        %721 = vmatpush1.msra.mxu0 0.0
        %722 = vmatprep.subr.mxu0 0.0
        %723 = vmatpush1.msra.mxu0 0.0
        %724 = vmatprep.subr.mxu0 0.0
        %725 = vmatpush1.msra.mxu0 0.0
        %726 = vmatprep.subr.mxu0 0.0
        %727 = vmatpush1.msra.mxu0 0.0
        %728 = vmatprep.subr.mxu0 0.0
        %729 = vmatpush1.msra.mxu0 0.0
        %730 = vmatprep.subr.mxu0 0.0
        %731 = vmatpush1.msra.mxu0 0.0
        %732 = vmatprep.mubr.f32.mxu0 0.0
        %733 = vmatmul.mubr.f32.gmra.mrb[0].mxu0 %v504
        %v734 = vpop.f32.mrb[0].mxu0
        %v735 = vadd.f32 %v666, %v734
        %v736 = vpop.f32.mrb[0].mxu0
        %737 = vdwg.mxu0
        %vm738 = vcmask 64512
        %v740 = vsel %vm738, %v573, 0
        %v743 = vsel %vm738, %v654, 0
        %745 = vmatprep.subr.mxu0 0.0
        %746 = vmatpush1.xpose.msra.mxu0 %v743
        %747 = vmatprep.subr.mxu0 0.0
        %748 = vmatpush1.xpose.msra.mxu0 0.0
        %749 = vmatprep.subr.mxu0 0.0
        %750 = vmatpush1.xpose.msra.mxu0 0.0
        %751 = vmatprep.subr.mxu0 0.0
        %752 = vmatpush1.xpose.msra.mxu0 0.0
        %753 = vmatprep.subr.mxu0 0.0
        %754 = vmatpush1.xpose.msra.mxu0 0.0
        %755 = vmatprep.subr.mxu0 0.0
        %756 = vmatpush1.xpose.msra.mxu0 0.0
        %757 = vmatprep.subr.mxu0 0.0
        %758 = vmatpush1.xpose.msra.mxu0 0.0
        %759 = vmatprep.subr.mxu0 0.0
        %760 = vmatpush1.xpose.msra.mxu0 0.0
        %761 = vmatprep.subr.mxu0 0.0
        %762 = vmatpush1.xpose.msra.mxu0 0.0
        %763 = vmatprep.subr.mxu0 0.0
        %764 = vmatpush1.xpose.msra.mxu0 0.0
        %765 = vmatprep.subr.mxu0 0.0
        %766 = vmatpush1.xpose.msra.mxu0 0.0
        %767 = vmatprep.subr.mxu0 0.0
        %768 = vmatpush1.xpose.msra.mxu0 0.0
        %769 = vmatprep.subr.mxu0 0.0
        %770 = vmatpush1.xpose.msra.mxu0 0.0
        %771 = vmatprep.subr.mxu0 0.0
        %772 = vmatpush1.xpose.msra.mxu0 0.0
        %773 = vmatprep.subr.mxu0 0.0
        %774 = vmatpush1.xpose.msra.mxu0 0.0
        %775 = vmatprep.subr.mxu0 0.0
        %776 = vmatpush1.xpose.msra.mxu0 0.0
        %777 = vmatprep.subr.mxu0 0.0
        %778 = vmatpush1.xpose.msra.mxu0 0.0
        %779 = vmatprep.subr.mxu0 0.0
        %780 = vmatpush1.xpose.msra.mxu0 0.0
        %781 = vmatprep.subr.mxu0 0.0
        %782 = vmatpush1.xpose.msra.mxu0 0.0
        %783 = vmatprep.subr.mxu0 0.0
        %784 = vmatpush1.xpose.msra.mxu0 0.0
        %785 = vmatprep.subr.mxu0 0.0
        %786 = vmatpush1.xpose.msra.mxu0 0.0
        %787 = vmatprep.subr.mxu0 0.0
        %788 = vmatpush1.xpose.msra.mxu0 0.0
        %789 = vmatprep.subr.mxu0 0.0
        %790 = vmatpush1.xpose.msra.mxu0 0.0
        %791 = vmatprep.subr.mxu0 0.0
        %792 = vmatpush1.xpose.msra.mxu0 0.0
        %793 = vmatprep.subr.mxu0 0.0
        %794 = vmatpush1.xpose.msra.mxu0 0.0
        %795 = vmatprep.subr.mxu0 0.0
        %796 = vmatpush1.xpose.msra.mxu0 0.0
        %797 = vmatprep.subr.mxu0 0.0
        %798 = vmatpush1.xpose.msra.mxu0 0.0
        %799 = vmatprep.subr.mxu0 0.0
        %800 = vmatpush1.xpose.msra.mxu0 0.0
        %801 = vmatprep.subr.mxu0 0.0
        %802 = vmatpush1.xpose.msra.mxu0 0.0
        %803 = vmatprep.subr.mxu0 0.0
        %804 = vmatpush1.xpose.msra.mxu0 0.0
        %805 = vmatprep.subr.mxu0 0.0
        %806 = vmatpush1.xpose.msra.mxu0 0.0
        %807 = vmatprep.subr.mxu0 0.0
        %808 = vmatpush1.xpose.msra.mxu0 0.0
        %809 = vmatprep.mubr.f32.mxu0 0.0
        %810 = vmatmul.mubr.f32.gmra.mrb[0].mxu0 %v740
        %v811 = vpop.f32.mrb[0].mxu0
        %v812 = vadd.f32 0.0, %v811
        %v813 = vpop.f32.mrb[0].mxu0
        %814 = vdwg.mxu0
        %v815 = vrcp.pop 2.828427
        %v816 = vmul.f32 %v812, %v815
        %v817 = vfloor.f32 %v816
        %v818 = vsel %vm738, %v817, -inf
        %819 = vmax.xlane.f32.xlu0 %v818
        %v820 = vpop.xlane.xlu0 %819
        %v821 = vsub.f32 %v817, %v820
        %v822 = vmul.f32 %v821, 1.442695
        %v823 = vpow.pop %v822
        %v824 = vsel %vm738, %v823, 0.0
        %825 = vadd.xlane.f32.xlu0 %v824
        %v826 = vpop.xlane.xlu0 %825
        %v827 = vrcp.pop %v826
        %v828 = vmul.f32 %v826, %v827
        %v829 = vsub.f32 2.0, %v828
        %v830 = vmul.f32 %v827, %v829
        %v831 = vmul.f32 %v823, %v830
        %v833 = vsel %vm738, %v831, 0
        %835 = vmatprep.subr.mxu0 0.0
        %836 = vmatpush1.msra.mxu0 %v735
        %837 = vmatprep.subr.mxu0 0.0
        %838 = vmatpush1.msra.mxu0 0.0
        %839 = vmatprep.subr.mxu0 0.0
        %840 = vmatpush1.msra.mxu0 0.0
        %841 = vmatprep.subr.mxu0 0.0
        %842 = vmatpush1.msra.mxu0 0.0
        %843 = vmatprep.subr.mxu0 0.0
        %844 = vmatpush1.msra.mxu0 0.0
        %845 = vmatprep.subr.mxu0 0.0
        %846 = vmatpush1.msra.mxu0 0.0
        %847 = vmatprep.subr.mxu0 0.0
        %848 = vmatpush1.msra.mxu0 0.0
        %849 = vmatprep.subr.mxu0 0.0
        %850 = vmatpush1.msra.mxu0 0.0
        %851 = vmatprep.subr.mxu0 0.0
        %852 = vmatpush1.msra.mxu0 0.0
        %853 = vmatprep.subr.mxu0 0.0
        %854 = vmatpush1.msra.mxu0 0.0
        %855 = vmatprep.subr.mxu0 0.0
        %856 = vmatpush1.msra.mxu0 0.0
        %857 = vmatprep.subr.mxu0 0.0
        %858 = vmatpush1.msra.mxu0 0.0
        %859 = vmatprep.subr.mxu0 0.0
        %860 = vmatpush1.msra.mxu0 0.0
        %861 = vmatprep.subr.mxu0 0.0
        %862 = vmatpush1.msra.mxu0 0.0
        %863 = vmatprep.subr.mxu0 0.0
        %864 = vmatpush1.msra.mxu0 0.0
        %865 = vmatprep.subr.mxu0 0.0
        %866 = vmatpush1.msra.mxu0 0.0
        %867 = vmatprep.subr.mxu0 0.0
        %868 = vmatpush1.msra.mxu0 0.0
        %869 = vmatprep.subr.mxu0 0.0
        %870 = vmatpush1.msra.mxu0 0.0
        %871 = vmatprep.subr.mxu0 0.0
        %872 = vmatpush1.msra.mxu0 0.0
        %873 = vmatprep.subr.mxu0 0.0
        %874 = vmatpush1.msra.mxu0 0.0
        %875 = vmatprep.subr.mxu0 0.0
        %876 = vmatpush1.msra.mxu0 0.0
        %877 = vmatprep.subr.mxu0 0.0
        %878 = vmatpush1.msra.mxu0 0.0
        %879 = vmatprep.subr.mxu0 0.0
        %880 = vmatpush1.msra.mxu0 0.0
        %881 = vmatprep.subr.mxu0 0.0
        %882 = vmatpush1.msra.mxu0 0.0
        %883 = vmatprep.subr.mxu0 0.0
        %884 = vmatpush1.msra.mxu0 0.0
        %885 = vmatprep.subr.mxu0 0.0
        %886 = vmatpush1.msra.mxu0 0.0
        %887 = vmatprep.subr.mxu0 0.0
        %888 = vmatpush1.msra.mxu0 0.0
        %889 = vmatprep.subr.mxu0 0.0
        %890 = vmatpush1.msra.mxu0 0.0
        %891 = vmatprep.subr.mxu0 0.0
        %892 = vmatpush1.msra.mxu0 0.0
        %893 = vmatprep.subr.mxu0 0.0
        %894 = vmatpush1.msra.mxu0 0.0
        %895 = vmatprep.subr.mxu0 0.0
        %896 = vmatpush1.msra.mxu0 0.0
        %897 = vmatprep.subr.mxu0 0.0
        %898 = vmatpush1.msra.mxu0 0.0
        %899 = vmatprep.mubr.f32.mxu0 0.0
        %900 = vmatmul.mubr.f32.gmra.mrb[0].mxu0 %v833
        %v901 = vpop.f32.mrb[0].mxu0
        %v902 = vadd.f32 0.0, %v901
        %v903 = vpop.f32.mrb[0].mxu0
        %904 = vdwg.mxu0
        %905 = vrot.lane.b32.xlu0 %v573, 120
        %v906 = vpop.permute.xlu0 %905
        %907 = vrot.lane.b32.xlu0 %v654, 120
        %v908 = vpop.permute.xlu0 %907
        %v909 = vsel %vm738, %v906, 0
        %v911 = vsel %vm738, %v908, 0
        %913 = vmatprep.subr.mxu0 0.0
        %914 = vmatpush1.xpose.msra.mxu0 %v911
        %915 = vmatprep.subr.mxu0 0.0
        %916 = vmatpush1.xpose.msra.mxu0 0.0
        %917 = vmatprep.subr.mxu0 0.0
        %918 = vmatpush1.xpose.msra.mxu0 0.0
        %919 = vmatprep.subr.mxu0 0.0
        %920 = vmatpush1.xpose.msra.mxu0 0.0
        %921 = vmatprep.subr.mxu0 0.0
        %922 = vmatpush1.xpose.msra.mxu0 0.0
        %923 = vmatprep.subr.mxu0 0.0
        %924 = vmatpush1.xpose.msra.mxu0 0.0
        %925 = vmatprep.subr.mxu0 0.0
        %926 = vmatpush1.xpose.msra.mxu0 0.0
        %927 = vmatprep.subr.mxu0 0.0
        %928 = vmatpush1.xpose.msra.mxu0 0.0
        %929 = vmatprep.subr.mxu0 0.0
        %930 = vmatpush1.xpose.msra.mxu0 0.0
        %931 = vmatprep.subr.mxu0 0.0
        %932 = vmatpush1.xpose.msra.mxu0 0.0
        %933 = vmatprep.subr.mxu0 0.0
        %934 = vmatpush1.xpose.msra.mxu0 0.0
        %935 = vmatprep.subr.mxu0 0.0
        %936 = vmatpush1.xpose.msra.mxu0 0.0
        %937 = vmatprep.subr.mxu0 0.0
        %938 = vmatpush1.xpose.msra.mxu0 0.0
        %939 = vmatprep.subr.mxu0 0.0
        %940 = vmatpush1.xpose.msra.mxu0 0.0
        %941 = vmatprep.subr.mxu0 0.0
        %942 = vmatpush1.xpose.msra.mxu0 0.0
        %943 = vmatprep.subr.mxu0 0.0
        %944 = vmatpush1.xpose.msra.mxu0 0.0
        %945 = vmatprep.subr.mxu0 0.0
        %946 = vmatpush1.xpose.msra.mxu0 0.0
        %947 = vmatprep.subr.mxu0 0.0
        %948 = vmatpush1.xpose.msra.mxu0 0.0
        %949 = vmatprep.subr.mxu0 0.0
        %950 = vmatpush1.xpose.msra.mxu0 0.0
        %951 = vmatprep.subr.mxu0 0.0
        %952 = vmatpush1.xpose.msra.mxu0 0.0
        %953 = vmatprep.subr.mxu0 0.0
        %954 = vmatpush1.xpose.msra.mxu0 0.0
        %955 = vmatprep.subr.mxu0 0.0
        %956 = vmatpush1.xpose.msra.mxu0 0.0
        %957 = vmatprep.subr.mxu0 0.0
        %958 = vmatpush1.xpose.msra.mxu0 0.0
        %959 = vmatprep.subr.mxu0 0.0
        %960 = vmatpush1.xpose.msra.mxu0 0.0
        %961 = vmatprep.subr.mxu0 0.0
        %962 = vmatpush1.xpose.msra.mxu0 0.0
        %963 = vmatprep.subr.mxu0 0.0
        %964 = vmatpush1.xpose.msra.mxu0 0.0
        %965 = vmatprep.subr.mxu0 0.0
        %966 = vmatpush1.xpose.msra.mxu0 0.0
        %967 = vmatprep.subr.mxu0 0.0
        %968 = vmatpush1.xpose.msra.mxu0 0.0
        %969 = vmatprep.subr.mxu0 0.0
        %970 = vmatpush1.xpose.msra.mxu0 0.0
        %971 = vmatprep.subr.mxu0 0.0
        %972 = vmatpush1.xpose.msra.mxu0 0.0
        %973 = vmatprep.subr.mxu0 0.0
        %974 = vmatpush1.xpose.msra.mxu0 0.0
        %975 = vmatprep.subr.mxu0 0.0
        %976 = vmatpush1.xpose.msra.mxu0 0.0
        %977 = vmatprep.mubr.f32.mxu0 0.0
        %978 = vmatmul.mubr.f32.gmra.mrb[0].mxu0 %v909
        %v979 = vpop.f32.mrb[0].mxu0
        %v980 = vadd.f32 0.0, %v979
        %v981 = vpop.f32.mrb[0].mxu0
        %982 = vdwg.mxu0
        %v983 = vmul.f32 %v980, %v815
        %v984 = vfloor.f32 %v983
        %v985 = vsel %vm738, %v984, -inf
        %986 = vmax.xlane.f32.xlu0 %v985
        %v987 = vpop.xlane.xlu0 %986
        %v988 = vsub.f32 %v984, %v987
        %v989 = vmul.f32 %v988, 1.442695
        %v990 = vpow.pop %v989
        %v991 = vsel %vm738, %v990, 0.0
        %992 = vadd.xlane.f32.xlu0 %v991
        %v993 = vpop.xlane.xlu0 %992
        %v994 = vrcp.pop %v993
        %v995 = vmul.f32 %v993, %v994
        %v996 = vsub.f32 2.0, %v995
        %v997 = vmul.f32 %v994, %v996
        %v998 = vmul.f32 %v990, %v997
        %1000 = vrot.lane.b32.xlu0 %v735, 120
        %v1001 = vpop.permute.xlu0 %1000
        %v1004 = vsel %vm738, %v998, 0
        %1006 = vmatprep.subr.mxu0 0.0
        %1007 = vmatpush1.msra.mxu0 %v1001
        %1008 = vmatprep.subr.mxu0 0.0
        %1009 = vmatpush1.msra.mxu0 0.0
        %1010 = vmatprep.subr.mxu0 0.0
        %1011 = vmatpush1.msra.mxu0 0.0
        %1012 = vmatprep.subr.mxu0 0.0
        %1013 = vmatpush1.msra.mxu0 0.0
        %1014 = vmatprep.subr.mxu0 0.0
        %1015 = vmatpush1.msra.mxu0 0.0
        %1016 = vmatprep.subr.mxu0 0.0
        %1017 = vmatpush1.msra.mxu0 0.0
        %1018 = vmatprep.subr.mxu0 0.0
        %1019 = vmatpush1.msra.mxu0 0.0
        %1020 = vmatprep.subr.mxu0 0.0
        %1021 = vmatpush1.msra.mxu0 0.0
        %1022 = vmatprep.subr.mxu0 0.0
        %1023 = vmatpush1.msra.mxu0 0.0
        %1024 = vmatprep.subr.mxu0 0.0
        %1025 = vmatpush1.msra.mxu0 0.0
        %1026 = vmatprep.subr.mxu0 0.0
        %1027 = vmatpush1.msra.mxu0 0.0
        %1028 = vmatprep.subr.mxu0 0.0
        %1029 = vmatpush1.msra.mxu0 0.0
        %1030 = vmatprep.subr.mxu0 0.0
        %1031 = vmatpush1.msra.mxu0 0.0
        %1032 = vmatprep.subr.mxu0 0.0
        %1033 = vmatpush1.msra.mxu0 0.0
        %1034 = vmatprep.subr.mxu0 0.0
        %1035 = vmatpush1.msra.mxu0 0.0
        %1036 = vmatprep.subr.mxu0 0.0
        %1037 = vmatpush1.msra.mxu0 0.0
        %1038 = vmatprep.subr.mxu0 0.0
        %1039 = vmatpush1.msra.mxu0 0.0
        %1040 = vmatprep.subr.mxu0 0.0
        %1041 = vmatpush1.msra.mxu0 0.0
        %1042 = vmatprep.subr.mxu0 0.0
        %1043 = vmatpush1.msra.mxu0 0.0
        %1044 = vmatprep.subr.mxu0 0.0
        %1045 = vmatpush1.msra.mxu0 0.0
        %1046 = vmatprep.subr.mxu0 0.0
        %1047 = vmatpush1.msra.mxu0 0.0
        %1048 = vmatprep.subr.mxu0 0.0
        %1049 = vmatpush1.msra.mxu0 0.0
        %1050 = vmatprep.subr.mxu0 0.0
        %1051 = vmatpush1.msra.mxu0 0.0
        %1052 = vmatprep.subr.mxu0 0.0
        %1053 = vmatpush1.msra.mxu0 0.0
        %1054 = vmatprep.subr.mxu0 0.0
        %1055 = vmatpush1.msra.mxu0 0.0
        %1056 = vmatprep.subr.mxu0 0.0
        %1057 = vmatpush1.msra.mxu0 0.0
        %1058 = vmatprep.subr.mxu0 0.0
        %1059 = vmatpush1.msra.mxu0 0.0
        %1060 = vmatprep.subr.mxu0 0.0
        %1061 = vmatpush1.msra.mxu0 0.0
        %1062 = vmatprep.subr.mxu0 0.0
        %1063 = vmatpush1.msra.mxu0 0.0
        %1064 = vmatprep.subr.mxu0 0.0
        %1065 = vmatpush1.msra.mxu0 0.0
        %1066 = vmatprep.subr.mxu0 0.0
        %1067 = vmatpush1.msra.mxu0 0.0
        %1068 = vmatprep.subr.mxu0 0.0
        %1069 = vmatpush1.msra.mxu0 0.0
        %1070 = vmatprep.mubr.f32.mxu0 0.0
        %1071 = vmatmul.mubr.f32.gmra.mrb[0].mxu0 %v1004
        %v1072 = vpop.f32.mrb[0].mxu0
        %v1073 = vadd.f32 0.0, %v1072
        %v1074 = vpop.f32.mrb[0].mxu0
        %1075 = vdwg.mxu0
        %1076 = vrot.lane.b32.xlu0 %v573, 112
        %v1077 = vpop.permute.xlu0 %1076
        %1078 = vrot.lane.b32.xlu0 %v654, 112
        %v1079 = vpop.permute.xlu0 %1078
        %v1080 = vsel %vm738, %v1077, 0
        %v1082 = vsel %vm738, %v1079, 0
        %1084 = vmatprep.subr.mxu0 0.0
        %1085 = vmatpush1.xpose.msra.mxu0 %v1082
        %1086 = vmatprep.subr.mxu0 0.0
        %1087 = vmatpush1.xpose.msra.mxu0 0.0
        %1088 = vmatprep.subr.mxu0 0.0
        %1089 = vmatpush1.xpose.msra.mxu0 0.0
        %1090 = vmatprep.subr.mxu0 0.0
        %1091 = vmatpush1.xpose.msra.mxu0 0.0
        %1092 = vmatprep.subr.mxu0 0.0
        %1093 = vmatpush1.xpose.msra.mxu0 0.0
        %1094 = vmatprep.subr.mxu0 0.0
        %1095 = vmatpush1.xpose.msra.mxu0 0.0
        %1096 = vmatprep.subr.mxu0 0.0
        %1097 = vmatpush1.xpose.msra.mxu0 0.0
        %1098 = vmatprep.subr.mxu0 0.0
        %1099 = vmatpush1.xpose.msra.mxu0 0.0
        %1100 = vmatprep.subr.mxu0 0.0
        %1101 = vmatpush1.xpose.msra.mxu0 0.0
        %1102 = vmatprep.subr.mxu0 0.0
        %1103 = vmatpush1.xpose.msra.mxu0 0.0
        %1104 = vmatprep.subr.mxu0 0.0
        %1105 = vmatpush1.xpose.msra.mxu0 0.0
        %1106 = vmatprep.subr.mxu0 0.0
        %1107 = vmatpush1.xpose.msra.mxu0 0.0
        %1108 = vmatprep.subr.mxu0 0.0
        %1109 = vmatpush1.xpose.msra.mxu0 0.0
        %1110 = vmatprep.subr.mxu0 0.0
        %1111 = vmatpush1.xpose.msra.mxu0 0.0
        %1112 = vmatprep.subr.mxu0 0.0
        %1113 = vmatpush1.xpose.msra.mxu0 0.0
        %1114 = vmatprep.subr.mxu0 0.0
        %1115 = vmatpush1.xpose.msra.mxu0 0.0
        %1116 = vmatprep.subr.mxu0 0.0
        %1117 = vmatpush1.xpose.msra.mxu0 0.0
        %1118 = vmatprep.subr.mxu0 0.0
        %1119 = vmatpush1.xpose.msra.mxu0 0.0
        %1120 = vmatprep.subr.mxu0 0.0
        %1121 = vmatpush1.xpose.msra.mxu0 0.0
        %1122 = vmatprep.subr.mxu0 0.0
        %1123 = vmatpush1.xpose.msra.mxu0 0.0
        %1124 = vmatprep.subr.mxu0 0.0
        %1125 = vmatpush1.xpose.msra.mxu0 0.0
        %1126 = vmatprep.subr.mxu0 0.0
        %1127 = vmatpush1.xpose.msra.mxu0 0.0
        %1128 = vmatprep.subr.mxu0 0.0
        %1129 = vmatpush1.xpose.msra.mxu0 0.0
        %1130 = vmatprep.subr.mxu0 0.0
        %1131 = vmatpush1.xpose.msra.mxu0 0.0
        %1132 = vmatprep.subr.mxu0 0.0
        %1133 = vmatpush1.xpose.msra.mxu0 0.0
        %1134 = vmatprep.subr.mxu0 0.0
        %1135 = vmatpush1.xpose.msra.mxu0 0.0
        %1136 = vmatprep.subr.mxu0 0.0
        %1137 = vmatpush1.xpose.msra.mxu0 0.0
        %1138 = vmatprep.subr.mxu0 0.0
        %1139 = vmatpush1.xpose.msra.mxu0 0.0
        %1140 = vmatprep.subr.mxu0 0.0
        %1141 = vmatpush1.xpose.msra.mxu0 0.0
        %1142 = vmatprep.subr.mxu0 0.0
        %1143 = vmatpush1.xpose.msra.mxu0 0.0
        %1144 = vmatprep.subr.mxu0 0.0
        %1145 = vmatpush1.xpose.msra.mxu0 0.0
        %1146 = vmatprep.subr.mxu0 0.0
        %1147 = vmatpush1.xpose.msra.mxu0 0.0
        %1148 = vmatprep.mubr.f32.mxu0 0.0
        %1149 = vmatmul.mubr.f32.gmra.mrb[0].mxu0 %v1080
        %v1150 = vpop.f32.mrb[0].mxu0
        %v1151 = vadd.f32 0.0, %v1150
        %v1152 = vpop.f32.mrb[0].mxu0
        %1153 = vdwg.mxu0
        %v1154 = vmul.f32 %v1151, %v815
        %v1155 = vfloor.f32 %v1154
        %v1156 = vsel %vm738, %v1155, -inf
        %1157 = vmax.xlane.f32.xlu0 %v1156
        %v1158 = vpop.xlane.xlu0 %1157
        %v1159 = vsub.f32 %v1155, %v1158
        %v1160 = vmul.f32 %v1159, 1.442695
        %v1161 = vpow.pop %v1160
        %v1162 = vsel %vm738, %v1161, 0.0
        %1163 = vadd.xlane.f32.xlu0 %v1162
        %v1164 = vpop.xlane.xlu0 %1163
        %v1165 = vrcp.pop %v1164
        %v1166 = vmul.f32 %v1164, %v1165
        %v1167 = vsub.f32 2.0, %v1166
        %v1168 = vmul.f32 %v1165, %v1167
        %v1169 = vmul.f32 %v1161, %v1168
        %1170 = vrot.lane.b32.xlu0 %v735, 112
        %v1171 = vpop.permute.xlu0 %1170
        %v1174 = vsel %vm738, %v1169, 0
        %1176 = vmatprep.subr.mxu0 0.0
        %1177 = vmatpush1.msra.mxu0 %v1171
        %1178 = vmatprep.subr.mxu0 0.0
        %1179 = vmatpush1.msra.mxu0 0.0
        %1180 = vmatprep.subr.mxu0 0.0
        %1181 = vmatpush1.msra.mxu0 0.0
        %1182 = vmatprep.subr.mxu0 0.0
        %1183 = vmatpush1.msra.mxu0 0.0
        %1184 = vmatprep.subr.mxu0 0.0
        %1185 = vmatpush1.msra.mxu0 0.0
        %1186 = vmatprep.subr.mxu0 0.0
        %1187 = vmatpush1.msra.mxu0 0.0
        %1188 = vmatprep.subr.mxu0 0.0
        %1189 = vmatpush1.msra.mxu0 0.0
        %1190 = vmatprep.subr.mxu0 0.0
        %1191 = vmatpush1.msra.mxu0 0.0
        %1192 = vmatprep.subr.mxu0 0.0
        %1193 = vmatpush1.msra.mxu0 0.0
        %1194 = vmatprep.subr.mxu0 0.0
        %1195 = vmatpush1.msra.mxu0 0.0
        %1196 = vmatprep.subr.mxu0 0.0
        %1197 = vmatpush1.msra.mxu0 0.0
        %1198 = vmatprep.subr.mxu0 0.0
        %1199 = vmatpush1.msra.mxu0 0.0
        %1200 = vmatprep.subr.mxu0 0.0
        %1201 = vmatpush1.msra.mxu0 0.0
        %1202 = vmatprep.subr.mxu0 0.0
        %1203 = vmatpush1.msra.mxu0 0.0
        %1204 = vmatprep.subr.mxu0 0.0
        %1205 = vmatpush1.msra.mxu0 0.0
        %1206 = vmatprep.subr.mxu0 0.0
        %1207 = vmatpush1.msra.mxu0 0.0
        %1208 = vmatprep.subr.mxu0 0.0
        %1209 = vmatpush1.msra.mxu0 0.0
        %1210 = vmatprep.subr.mxu0 0.0
        %1211 = vmatpush1.msra.mxu0 0.0
        %1212 = vmatprep.subr.mxu0 0.0
        %1213 = vmatpush1.msra.mxu0 0.0
        %1214 = vmatprep.subr.mxu0 0.0
        %1215 = vmatpush1.msra.mxu0 0.0
        %1216 = vmatprep.subr.mxu0 0.0
        %1217 = vmatpush1.msra.mxu0 0.0
        %1218 = vmatprep.subr.mxu0 0.0
        %1219 = vmatpush1.msra.mxu0 0.0
        %1220 = vmatprep.subr.mxu0 0.0
        %1221 = vmatpush1.msra.mxu0 0.0
        %1222 = vmatprep.subr.mxu0 0.0
        %1223 = vmatpush1.msra.mxu0 0.0
        %1224 = vmatprep.subr.mxu0 0.0
        %1225 = vmatpush1.msra.mxu0 0.0
        %1226 = vmatprep.subr.mxu0 0.0
        %1227 = vmatpush1.msra.mxu0 0.0
        %1228 = vmatprep.subr.mxu0 0.0
        %1229 = vmatpush1.msra.mxu0 0.0
        %1230 = vmatprep.subr.mxu0 0.0
        %1231 = vmatpush1.msra.mxu0 0.0
        %1232 = vmatprep.subr.mxu0 0.0
        %1233 = vmatpush1.msra.mxu0 0.0
        %1234 = vmatprep.subr.mxu0 0.0
        %1235 = vmatpush1.msra.mxu0 0.0
        %1236 = vmatprep.subr.mxu0 0.0
        %1237 = vmatpush1.msra.mxu0 0.0
        %1238 = vmatprep.subr.mxu0 0.0
        %1239 = vmatpush1.msra.mxu0 0.0
        %1240 = vmatprep.mubr.f32.mxu0 0.0
        %1241 = vmatmul.mubr.f32.gmra.mrb[0].mxu0 %v1174
        %v1242 = vpop.f32.mrb[0].mxu0
        %v1243 = vadd.f32 0.0, %v1242
        %v1244 = vpop.f32.mrb[0].mxu0
        %1245 = vdwg.mxu0
        %1246 = vrot.lane.b32.xlu0 %v573, 104
        %v1247 = vpop.permute.xlu0 %1246
        %1248 = vrot.lane.b32.xlu0 %v654, 104
        %v1249 = vpop.permute.xlu0 %1248
        %v1250 = vsel %vm738, %v1247, 0
        %v1252 = vsel %vm738, %v1249, 0
        %1254 = vmatprep.subr.mxu0 0.0
        %1255 = vmatpush1.xpose.msra.mxu0 %v1252
        %1256 = vmatprep.subr.mxu0 0.0
        %1257 = vmatpush1.xpose.msra.mxu0 0.0
        %1258 = vmatprep.subr.mxu0 0.0
        %1259 = vmatpush1.xpose.msra.mxu0 0.0
        %1260 = vmatprep.subr.mxu0 0.0
        %1261 = vmatpush1.xpose.msra.mxu0 0.0
        %1262 = vmatprep.subr.mxu0 0.0
        %1263 = vmatpush1.xpose.msra.mxu0 0.0
        %1264 = vmatprep.subr.mxu0 0.0
        %1265 = vmatpush1.xpose.msra.mxu0 0.0
        %1266 = vmatprep.subr.mxu0 0.0
        %1267 = vmatpush1.xpose.msra.mxu0 0.0
        %1268 = vmatprep.subr.mxu0 0.0
        %1269 = vmatpush1.xpose.msra.mxu0 0.0
        %1270 = vmatprep.subr.mxu0 0.0
        %1271 = vmatpush1.xpose.msra.mxu0 0.0
        %1272 = vmatprep.subr.mxu0 0.0
        %1273 = vmatpush1.xpose.msra.mxu0 0.0
        %1274 = vmatprep.subr.mxu0 0.0
        %1275 = vmatpush1.xpose.msra.mxu0 0.0
        %1276 = vmatprep.subr.mxu0 0.0
        %1277 = vmatpush1.xpose.msra.mxu0 0.0
        %1278 = vmatprep.subr.mxu0 0.0
        %1279 = vmatpush1.xpose.msra.mxu0 0.0
        %1280 = vmatprep.subr.mxu0 0.0
        %1281 = vmatpush1.xpose.msra.mxu0 0.0
        %1282 = vmatprep.subr.mxu0 0.0
        %1283 = vmatpush1.xpose.msra.mxu0 0.0
        %1284 = vmatprep.subr.mxu0 0.0
        %1285 = vmatpush1.xpose.msra.mxu0 0.0
        %1286 = vmatprep.subr.mxu0 0.0
        %1287 = vmatpush1.xpose.msra.mxu0 0.0
        %1288 = vmatprep.subr.mxu0 0.0
        %1289 = vmatpush1.xpose.msra.mxu0 0.0
        %1290 = vmatprep.subr.mxu0 0.0
        %1291 = vmatpush1.xpose.msra.mxu0 0.0
        %1292 = vmatprep.subr.mxu0 0.0
        %1293 = vmatpush1.xpose.msra.mxu0 0.0
        %1294 = vmatprep.subr.mxu0 0.0
        %1295 = vmatpush1.xpose.msra.mxu0 0.0
        %1296 = vmatprep.subr.mxu0 0.0
        %1297 = vmatpush1.xpose.msra.mxu0 0.0
        %1298 = vmatprep.subr.mxu0 0.0
        %1299 = vmatpush1.xpose.msra.mxu0 0.0
        %1300 = vmatprep.subr.mxu0 0.0
        %1301 = vmatpush1.xpose.msra.mxu0 0.0
        %1302 = vmatprep.subr.mxu0 0.0
        %1303 = vmatpush1.xpose.msra.mxu0 0.0
        %1304 = vmatprep.subr.mxu0 0.0
        %1305 = vmatpush1.xpose.msra.mxu0 0.0
        %1306 = vmatprep.subr.mxu0 0.0
        %1307 = vmatpush1.xpose.msra.mxu0 0.0
        %1308 = vmatprep.subr.mxu0 0.0
        %1309 = vmatpush1.xpose.msra.mxu0 0.0
        %1310 = vmatprep.subr.mxu0 0.0
        %1311 = vmatpush1.xpose.msra.mxu0 0.0
        %1312 = vmatprep.subr.mxu0 0.0
        %1313 = vmatpush1.xpose.msra.mxu0 0.0
        %1314 = vmatprep.subr.mxu0 0.0
        %1315 = vmatpush1.xpose.msra.mxu0 0.0
        %1316 = vmatprep.subr.mxu0 0.0
        %1317 = vmatpush1.xpose.msra.mxu0 0.0
        %1318 = vmatprep.mubr.f32.mxu0 0.0
        %1319 = vmatmul.mubr.f32.gmra.mrb[0].mxu0 %v1250
        %v1320 = vpop.f32.mrb[0].mxu0
        %v1321 = vadd.f32 0.0, %v1320
        %v1322 = vpop.f32.mrb[0].mxu0
        %1323 = vdwg.mxu0
        %v1324 = vmul.f32 %v1321, %v815
        %v1325 = vfloor.f32 %v1324
        %v1326 = vsel %vm738, %v1325, -inf
        %1327 = vmax.xlane.f32.xlu0 %v1326
        %v1328 = vpop.xlane.xlu0 %1327
        %v1329 = vsub.f32 %v1325, %v1328
        %v1330 = vmul.f32 %v1329, 1.442695
        %v1331 = vpow.pop %v1330
        %v1332 = vsel %vm738, %v1331, 0.0
        %1333 = vadd.xlane.f32.xlu0 %v1332
        %v1334 = vpop.xlane.xlu0 %1333
        %v1335 = vrcp.pop %v1334
        %v1336 = vmul.f32 %v1334, %v1335
        %v1337 = vsub.f32 2.0, %v1336
        %v1338 = vmul.f32 %v1335, %v1337
        %v1339 = vmul.f32 %v1331, %v1338
        %1340 = vrot.lane.b32.xlu0 %v735, 104
        %v1341 = vpop.permute.xlu0 %1340
        %v1344 = vsel %vm738, %v1339, 0
        %1346 = vmatprep.subr.mxu0 0.0
        %1347 = vmatpush1.msra.mxu0 %v1341
        %1348 = vmatprep.subr.mxu0 0.0
        %1349 = vmatpush1.msra.mxu0 0.0
        %1350 = vmatprep.subr.mxu0 0.0
        %1351 = vmatpush1.msra.mxu0 0.0
        %1352 = vmatprep.subr.mxu0 0.0
        %1353 = vmatpush1.msra.mxu0 0.0
        %1354 = vmatprep.subr.mxu0 0.0
        %1355 = vmatpush1.msra.mxu0 0.0
        %1356 = vmatprep.subr.mxu0 0.0
        %1357 = vmatpush1.msra.mxu0 0.0
        %1358 = vmatprep.subr.mxu0 0.0
        %1359 = vmatpush1.msra.mxu0 0.0
        %1360 = vmatprep.subr.mxu0 0.0
        %1361 = vmatpush1.msra.mxu0 0.0
        %1362 = vmatprep.subr.mxu0 0.0
        %1363 = vmatpush1.msra.mxu0 0.0
        %1364 = vmatprep.subr.mxu0 0.0
        %1365 = vmatpush1.msra.mxu0 0.0
        %1366 = vmatprep.subr.mxu0 0.0
        %1367 = vmatpush1.msra.mxu0 0.0
        %1368 = vmatprep.subr.mxu0 0.0
        %1369 = vmatpush1.msra.mxu0 0.0
        %1370 = vmatprep.subr.mxu0 0.0
        %1371 = vmatpush1.msra.mxu0 0.0
        %1372 = vmatprep.subr.mxu0 0.0
        %1373 = vmatpush1.msra.mxu0 0.0
        %1374 = vmatprep.subr.mxu0 0.0
        %1375 = vmatpush1.msra.mxu0 0.0
        %1376 = vmatprep.subr.mxu0 0.0
        %1377 = vmatpush1.msra.mxu0 0.0
        %1378 = vmatprep.subr.mxu0 0.0
        %1379 = vmatpush1.msra.mxu0 0.0
        %1380 = vmatprep.subr.mxu0 0.0
        %1381 = vmatpush1.msra.mxu0 0.0
        %1382 = vmatprep.subr.mxu0 0.0
        %1383 = vmatpush1.msra.mxu0 0.0
        %1384 = vmatprep.subr.mxu0 0.0
        %1385 = vmatpush1.msra.mxu0 0.0
        %1386 = vmatprep.subr.mxu0 0.0
        %1387 = vmatpush1.msra.mxu0 0.0
        %1388 = vmatprep.subr.mxu0 0.0
        %1389 = vmatpush1.msra.mxu0 0.0
        %1390 = vmatprep.subr.mxu0 0.0
        %1391 = vmatpush1.msra.mxu0 0.0
        %1392 = vmatprep.subr.mxu0 0.0
        %1393 = vmatpush1.msra.mxu0 0.0
        %1394 = vmatprep.subr.mxu0 0.0
        %1395 = vmatpush1.msra.mxu0 0.0
        %1396 = vmatprep.subr.mxu0 0.0
        %1397 = vmatpush1.msra.mxu0 0.0
        %1398 = vmatprep.subr.mxu0 0.0
        %1399 = vmatpush1.msra.mxu0 0.0
        %1400 = vmatprep.subr.mxu0 0.0
        %1401 = vmatpush1.msra.mxu0 0.0
        %1402 = vmatprep.subr.mxu0 0.0
        %1403 = vmatpush1.msra.mxu0 0.0
        %1404 = vmatprep.subr.mxu0 0.0
        %1405 = vmatpush1.msra.mxu0 0.0
        %1406 = vmatprep.subr.mxu0 0.0
        %1407 = vmatpush1.msra.mxu0 0.0
        %1408 = vmatprep.subr.mxu0 0.0
        %1409 = vmatpush1.msra.mxu0 0.0
        %1410 = vmatprep.mubr.f32.mxu0 0.0
        %1411 = vmatmul.mubr.f32.gmra.mrb[0].mxu0 %v1344
        %v1412 = vpop.f32.mrb[0].mxu0
        %v1413 = vadd.f32 0.0, %v1412
        %v1414 = vpop.f32.mrb[0].mxu0
        %1415 = vdwg.mxu0
        %1417 = vrot.lane.b32.xlu0 %v1073, 8
        %v1418 = vpop.permute.xlu0 %1417
        %1421 = vrot.lane.b32.xlu0 %v1243, 16
        %v1422 = vpop.permute.xlu0 %1421
        %1425 = vrot.lane.b32.xlu0 %v1413, 24
        %v1426 = vpop.permute.xlu0 %1425
        %v1428 = vsel %vm738, %v902, %v1418
        %vm1429 = vcmask 130048
        %v1430 = vsel %vm1429, %v1428, %v1422
        %vm1431 = vcmask 195584
        %v1432 = vsel %vm1431, %v1430, %v1426
        %v1433 = vadd.f32 %v490, %v1432
        %v1434 = vld [vmem:[%s11] sm:$0x1]
        %v1435 = vld [vmem:[%s12] sm:$0x1]
        %v1436 = vsel %vm502, %v1433, 0.0
        %1437 = vadd.xlane.f32.xlu0 %v1436
        %v1438 = vpop.xlane.xlu0 %1437
        %v1439 = vrcp.pop 32.0
        %v1440 = vmul.f32 %v1438, %v1439
        %v1441 = vsub.f32 %v1433, %v1440
        %v1442 = vmul.f32 %v1441, %v1441
        %v1443 = vsel %vm502, %v1442, 0.0
        %1444 = vadd.xlane.f32.xlu0 %v1443
        %v1445 = vpop.xlane.xlu0 %1444
        %v1446 = vmul.f32 %v1445, %v1439
        %v1447 = vadd.f32 %v1446, 1e-05
        %v1448 = vrsqrt.pop %v1447
        %v1449 = vmul.f32 %v1441, %v1448
        %v1451 = vlaneseq
        %v1452 = vshrl.u32 %v1451, 7
        %v1453 = vsub.s32 0, %v1452
        %v1454 = vrot.slane %v1434, %v1453
        %v1456 = vmul.f32 %v1449, %v1454
        %v1458 = vlaneseq
        %v1459 = vshrl.u32 %v1458, 7
        %v1460 = vsub.s32 0, %v1459
        %v1461 = vrot.slane %v1435, %v1460
        %v1463 = vadd.f32 %v1456, %v1461
        %v1464 = vld [vmem:[%s7] sm:$0xff]
        %v1465 = vld [vmem:[%s7 + $0x8] sm:$0xff]
        %v1466 = vld [vmem:[%s7 + $0x10] sm:$0xff]
        %v1467 = vld [vmem:[%s7 + $0x18] sm:$0xff]
        %v1468 = vld [vmem:[%s8] sm:$0x1]
        %v1470 = vlaneseq
        %v1471 = vshrl.u32 %v1470, 7
        %v1472 = vsub.s32 0, %v1471
        %v1473 = vrot.slane %v1468, %v1472
        %v1476 = vsel %vm502, %v1463, 0
        %1478 = vmatprep.subr.mxu0 0.0
        %1479 = vmatpush1.msra.mxu0 %v1464
        %1480 = vmatprep.subr.mxu0 0.0
        %1481 = vmatpush1.msra.mxu0 %v1465
        %1482 = vmatprep.subr.mxu0 0.0
        %1483 = vmatpush1.msra.mxu0 %v1466
        %1484 = vmatprep.subr.mxu0 0.0
        %1485 = vmatpush1.msra.mxu0 %v1467
        %1486 = vmatprep.subr.mxu0 0.0
        %1487 = vmatpush1.msra.mxu0 0.0
        %1488 = vmatprep.subr.mxu0 0.0
        %1489 = vmatpush1.msra.mxu0 0.0
        %1490 = vmatprep.subr.mxu0 0.0
        %1491 = vmatpush1.msra.mxu0 0.0
        %1492 = vmatprep.subr.mxu0 0.0
        %1493 = vmatpush1.msra.mxu0 0.0
        %1494 = vmatprep.subr.mxu0 0.0
        %1495 = vmatpush1.msra.mxu0 0.0
        %1496 = vmatprep.subr.mxu0 0.0
        %1497 = vmatpush1.msra.mxu0 0.0
        %1498 = vmatprep.subr.mxu0 0.0
        %1499 = vmatpush1.msra.mxu0 0.0
        %1500 = vmatprep.subr.mxu0 0.0
        %1501 = vmatpush1.msra.mxu0 0.0
        %1502 = vmatprep.subr.mxu0 0.0
        %1503 = vmatpush1.msra.mxu0 0.0
        %1504 = vmatprep.subr.mxu0 0.0
        %1505 = vmatpush1.msra.mxu0 0.0
        %1506 = vmatprep.subr.mxu0 0.0
        %1507 = vmatpush1.msra.mxu0 0.0
        %1508 = vmatprep.subr.mxu0 0.0
        %1509 = vmatpush1.msra.mxu0 0.0
        %1510 = vmatprep.subr.mxu0 0.0
        %1511 = vmatpush1.msra.mxu0 0.0
        %1512 = vmatprep.subr.mxu0 0.0
        %1513 = vmatpush1.msra.mxu0 0.0
        %1514 = vmatprep.subr.mxu0 0.0
        %1515 = vmatpush1.msra.mxu0 0.0
        %1516 = vmatprep.subr.mxu0 0.0
        %1517 = vmatpush1.msra.mxu0 0.0
        %1518 = vmatprep.subr.mxu0 0.0
        %1519 = vmatpush1.msra.mxu0 0.0
        %1520 = vmatprep.subr.mxu0 0.0
        %1521 = vmatpush1.msra.mxu0 0.0
        %1522 = vmatprep.subr.mxu0 0.0
        %1523 = vmatpush1.msra.mxu0 0.0
        %1524 = vmatprep.subr.mxu0 0.0
        %1525 = vmatpush1.msra.mxu0 0.0
        %1526 = vmatprep.subr.mxu0 0.0
        %1527 = vmatpush1.msra.mxu0 0.0
        %1528 = vmatprep.subr.mxu0 0.0
        %1529 = vmatpush1.msra.mxu0 0.0
        %1530 = vmatprep.subr.mxu0 0.0
        %1531 = vmatpush1.msra.mxu0 0.0
        %1532 = vmatprep.subr.mxu0 0.0
        %1533 = vmatpush1.msra.mxu0 0.0
        %1534 = vmatprep.subr.mxu0 0.0
        %1535 = vmatpush1.msra.mxu0 0.0
        %1536 = vmatprep.subr.mxu0 0.0
        %1537 = vmatpush1.msra.mxu0 0.0
        %1538 = vmatprep.subr.mxu0 0.0
        %1539 = vmatpush1.msra.mxu0 0.0
        %1540 = vmatprep.subr.mxu0 0.0
        %1541 = vmatpush1.msra.mxu0 0.0
        %1542 = vmatprep.mubr.f32.mxu0 0.0
        %1543 = vmatmul.mubr.f32.gmra.mrb[0].mxu0 %v1476
        %v1544 = vpop.f32.mrb[0].mxu0
        %v1545 = vadd.f32 %v1473, %v1544
        %v1546 = vpop.f32.mrb[0].mxu0
        %1547 = vdwg.mxu0
        %v1548 = vmax.f32 %v1545, 0.0
        %v1549 = vld [vmem:[%s9] sm:$0xff]
        %v1550 = vld [vmem:[%s9 + $0x8] sm:$0xff]
        %v1551 = vld [vmem:[%s9 + $0x10] sm:$0xff]
        %v1552 = vld [vmem:[%s9 + $0x18] sm:$0xff]
        %v1553 = vld [vmem:[%s9 + $0x20] sm:$0xff]
        %v1554 = vld [vmem:[%s9 + $0x28] sm:$0xff]
        %v1555 = vld [vmem:[%s9 + $0x30] sm:$0xff]
        %v1556 = vld [vmem:[%s9 + $0x38] sm:$0xff]
        %v1557 = vld [vmem:[%s9 + $0x40] sm:$0xff]
        %v1558 = vld [vmem:[%s9 + $0x48] sm:$0xff]
        %v1559 = vld [vmem:[%s9 + $0x50] sm:$0xff]
        %v1560 = vld [vmem:[%s9 + $0x58] sm:$0xff]
        %v1561 = vld [vmem:[%s9 + $0x60] sm:$0xff]
        %v1562 = vld [vmem:[%s9 + $0x68] sm:$0xff]
        %v1563 = vld [vmem:[%s9 + $0x70] sm:$0xff]
        %v1564 = vld [vmem:[%s9 + $0x78] sm:$0xff]
        %v1565 = vld [vmem:[%s10] sm:$0x1]
        %v1567 = vlaneseq
        %v1568 = vshrl.u32 %v1567, 7
        %v1569 = vsub.s32 0, %v1568
        %v1570 = vrot.slane %v1565, %v1569
        %1572 = vmatprep.subr.mxu0 0.0
        %1573 = vmatpush1.msra.mxu0 %v1549
        %1574 = vmatprep.subr.mxu0 0.0
        %1575 = vmatpush1.msra.mxu0 %v1550
        %1576 = vmatprep.subr.mxu0 0.0
        %1577 = vmatpush1.msra.mxu0 %v1551
        %1578 = vmatprep.subr.mxu0 0.0
        %1579 = vmatpush1.msra.mxu0 %v1552
        %1580 = vmatprep.subr.mxu0 0.0
        %1581 = vmatpush1.msra.mxu0 %v1553
        %1582 = vmatprep.subr.mxu0 0.0
        %1583 = vmatpush1.msra.mxu0 %v1554
        %1584 = vmatprep.subr.mxu0 0.0
        %1585 = vmatpush1.msra.mxu0 %v1555
        %1586 = vmatprep.subr.mxu0 0.0
        %1587 = vmatpush1.msra.mxu0 %v1556
        %1588 = vmatprep.subr.mxu0 0.0
        %1589 = vmatpush1.msra.mxu0 %v1557
        %1590 = vmatprep.subr.mxu0 0.0
        %1591 = vmatpush1.msra.mxu0 %v1558
        %1592 = vmatprep.subr.mxu0 0.0
        %1593 = vmatpush1.msra.mxu0 %v1559
        %1594 = vmatprep.subr.mxu0 0.0
        %1595 = vmatpush1.msra.mxu0 %v1560
        %1596 = vmatprep.subr.mxu0 0.0
        %1597 = vmatpush1.msra.mxu0 %v1561
        %1598 = vmatprep.subr.mxu0 0.0
        %1599 = vmatpush1.msra.mxu0 %v1562
        %1600 = vmatprep.subr.mxu0 0.0
        %1601 = vmatpush1.msra.mxu0 %v1563
        %1602 = vmatprep.subr.mxu0 0.0
        %1603 = vmatpush1.msra.mxu0 %v1564
        %1604 = vmatprep.subr.mxu0 0.0
        %1605 = vmatpush1.msra.mxu0 0.0
        %1606 = vmatprep.subr.mxu0 0.0
        %1607 = vmatpush1.msra.mxu0 0.0
        %1608 = vmatprep.subr.mxu0 0.0
        %1609 = vmatpush1.msra.mxu0 0.0
        %1610 = vmatprep.subr.mxu0 0.0
        %1611 = vmatpush1.msra.mxu0 0.0
        %1612 = vmatprep.subr.mxu0 0.0
        %1613 = vmatpush1.msra.mxu0 0.0
        %1614 = vmatprep.subr.mxu0 0.0
        %1615 = vmatpush1.msra.mxu0 0.0
        %1616 = vmatprep.subr.mxu0 0.0
        %1617 = vmatpush1.msra.mxu0 0.0
        %1618 = vmatprep.subr.mxu0 0.0
        %1619 = vmatpush1.msra.mxu0 0.0
        %1620 = vmatprep.subr.mxu0 0.0
        %1621 = vmatpush1.msra.mxu0 0.0
        %1622 = vmatprep.subr.mxu0 0.0
        %1623 = vmatpush1.msra.mxu0 0.0
        %1624 = vmatprep.subr.mxu0 0.0
        %1625 = vmatpush1.msra.mxu0 0.0
        %1626 = vmatprep.subr.mxu0 0.0
        %1627 = vmatpush1.msra.mxu0 0.0
        %1628 = vmatprep.subr.mxu0 0.0
        %1629 = vmatpush1.msra.mxu0 0.0
        %1630 = vmatprep.subr.mxu0 0.0
        %1631 = vmatpush1.msra.mxu0 0.0
        %1632 = vmatprep.subr.mxu0 0.0
        %1633 = vmatpush1.msra.mxu0 0.0
        %1634 = vmatprep.subr.mxu0 0.0
        %1635 = vmatpush1.msra.mxu0 0.0
        %1636 = vmatprep.mubr.f32.mxu0 0.0
        %1637 = vmatmul.mubr.f32.gmra.mrb[0].mxu0 %v1548
        %v1638 = vpop.f32.mrb[0].mxu0
        %v1639 = vadd.f32 %v1570, %v1638
        %v1640 = vpop.f32.mrb[0].mxu0
        %1641 = vdwg.mxu0
        %v1642 = vmax.f32 %v1639, 0.0
        %v1643 = vadd.f32 %v1463, %v1642
        %v1644 = vld [vmem:[%s13] sm:$0x1]
        %v1645 = vld [vmem:[%s14] sm:$0x1]
        %v1646 = vsel %vm502, %v1643, 0.0
        %1647 = vadd.xlane.f32.xlu0 %v1646
        %v1648 = vpop.xlane.xlu0 %1647
        %v1649 = vmul.f32 %v1648, %v1439
        %v1650 = vsub.f32 %v1643, %v1649
        %v1651 = vmul.f32 %v1650, %v1650
        %v1652 = vsel %vm502, %v1651, 0.0
        %1653 = vadd.xlane.f32.xlu0 %v1652
        %v1654 = vpop.xlane.xlu0 %1653
        %v1655 = vmul.f32 %v1654, %v1439
        %v1656 = vadd.f32 %v1655, 1e-05
        %v1657 = vrsqrt.pop %v1656
        %v1658 = vmul.f32 %v1650, %v1657
        %v1660 = vlaneseq
        %v1661 = vshrl.u32 %v1660, 7
        %v1662 = vsub.s32 0, %v1661
        %v1663 = vrot.slane %v1644, %v1662
        %v1665 = vmul.f32 %v1658, %v1663
        %v1667 = vlaneseq
        %v1668 = vshrl.u32 %v1667, 7
        %v1669 = vsub.s32 0, %v1668
        %v1670 = vrot.slane %v1645, %v1669
        %v1672 = vadd.f32 %v1665, %v1670
        %1673 = vst.msk [vmem:[%s485] sm:$0xff] %vm502, %v1672
        %s1674 = sand.u32 %s357, 1
        %s1675 = scalar_lea.sflag [#allocation3], %s1674
        %s1676 = sand.u32 %s357, 1
        %s1677 = smul.addr %s1676, 8
        %s1678 = scalar_lea.vmem [#allocation2], %s1677
        // Predicated region
        $region81: #{tpu_custom_call.1} parent=79 // pred_check
          %p1679 = pneg %p367
        $region82: #{tpu_custom_call.1} parent=79 // pred_check_branch
          %1681 = sbr.rel (%p1679) target = $region84
        $region83: #{tpu_custom_call.1} parent=79 // pred_region
          %s1683 = ssub.s32 128, 128
          %1684 = vsyncadd %s1675, %s1683
          %s1685 = smul.addr %s29, 128
          %s1686 = scalar_lea.hbm %s15, %s1685
          %s1688 = sshll.u32 %s1678, 4
          %s1689 = int_to_ptr.vmem [resolvable:$true] %s1688
          %1691 = dma.vmem_to_hbm [thread:$0]  %s1689, 128, %s1686, %s1675
        $region84: #{tpu_custom_call.1} parent=79 // pred_fallthru
          _
      $region80: #{tpu_custom_call.1} parent=5 // pred_fallthru
        _
      %p1692 = scmp.le.s32.totalorder 2, %s24
      // Predicated region
      $region85: #{tpu_custom_call.1} parent=5 // pred_check
        %p1693 = pneg %p1692
      $region86: #{tpu_custom_call.1} parent=5 // pred_check_branch
        %1695 = sbr.rel (%p1693) target = $region88
      $region87: #{tpu_custom_call.1} parent=5 // pred_region
        %s1696 = ssub.s32 %s24, 2
        // Predicated region
        $region89: #{tpu_custom_call.1} parent=87 // pred_check
          %p1697 = pneg %p373
        $region90: #{tpu_custom_call.1} parent=87 // pred_check_branch
          %1699 = sbr.rel (%p1697) target = $region92
        $region91: #{tpu_custom_call.1} parent=87 // pred_region
          %s1700 = sand.u32 %s358, 1
          %s1701 = scalar_lea.sflag [#allocation3], %s1700
          %s1702 = sand.u32 %s358, 1
          %s1703 = smul.addr %s1702, 8
          %s1704 = scalar_lea.vmem [#allocation2], %s1703
          %1705 = dma.done %s1701, 128
        $region92: #{tpu_custom_call.1} parent=87 // pred_fallthru
          _
      $region88: #{tpu_custom_call.1} parent=5 // pred_fallthru
        _
    $region6: #{tpu_custom_call.1} parent=1 // loop_footer
      %s28 = sadd.s32 1, %s24
    $region7: #{tpu_custom_call.1} parent=1 // loop_footer_branch
      %23 = sbr.rel target = $region3
    $region8: #{tpu_custom_call.1} parent=1 // loop_exit
      _
    %1706 = vsyncpa [#allocation3], 1
    %s1707 = scalar_lea.sflag [#allocation3], 1
    %1708 = vsyncpa %s1707, 1

</llo_original>
